<compile_context>
chip_gen: v7x
topology: tpu7x:2x2x1
jax: 0.10.0
libtpu: 0.0.40
codegen_flags: <defaults>
</compile_context>

<pallas_src>
import functools

import jax
import jax.numpy as jnp
from jax import lax
from jax.experimental import pallas as pl
from jax.experimental.pallas import tpu as pltpu


# ---------------------------------------------------------------------------
# Fused ResBlock kernel (one grid step == one batch element)
# ---------------------------------------------------------------------------
def _resblock_kernel(sx_ref, w13_ref, b1_ref, w2_ref, b2_ref,
                     w3r_ref, b3_ref, band_ref,
                     o_ref,
                     rpad_ref, slabf_ref,
                     *, H, W, F, Cout):
    """conv1+LReLU -> conv2+LReLU -> ECA -> conv3, one batch element.

    sx_ref    : (1, H*W, 9*Cin)  im2col slab of x (shared by conv1 and conv3-x)
    w13_ref   : (9*Cin, F+Cout)  fused [conv1 | conv3-x] K-packed weight
    b1_ref    : (1, F)
    w2_ref    : (9*F, F)         K-packed conv2 weight
    b2_ref    : (1, F)
    w3r_ref   : (9*F, Cout)      conv3 weight, r_eca-channel half
    b3_ref    : (1, Cout)
    band_ref  : (F, F)           precomputed banded ECA channel-conv matrix
    o_ref     : (1, Cout, H*W)   lane-dense NCHW(flattened) output
    rpad_ref  : (H+2, W+2, F)    VMEM scratch: zero-padded feature map
    slabf_ref : (H*W, 9*F)       VMEM scratch: K-packed feature im2col slab
    """
    f32 = jnp.float32
    HW = H * W

    def lrelu(t):
        return jnp.where(t > 0, t, 0.2 * t)

    # --- zero only the 1-pixel border of the padded map (interior is always
    #     fully overwritten before use; border stays zero for both slab builds).
    rpad_ref[0:1, :, :] = jnp.zeros((1, W + 2, F), f32)
    rpad_ref[H + 1:H + 2, :, :] = jnp.zeros((1, W + 2, F), f32)
    rpad_ref[1:H + 1, 0:1, :] = jnp.zeros((H, 1, F), f32)
    rpad_ref[1:H + 1, W + 1:W + 2, :] = jnp.zeros((H, 1, F), f32)

    def build_feature_slab():
        # im2col over the zero-padded feature map.  Tap t = dh*3 + dw occupies
        # lane columns [t*F, (t+1)*F).  With F=64, taps are written in pairs as
        # (HW, 128) values -> 128-lane aligned, unmasked stores.
        for tp in range(4):
            t0, t1 = 2 * tp, 2 * tp + 1
            dh0, dw0 = t0 // 3, t0 % 3
            dh1, dw1 = t1 // 3, t1 % 3
            p0 = rpad_ref[dh0:dh0 + H, dw0:dw0 + W, :].reshape(HW, F)
            p1 = rpad_ref[dh1:dh1 + H, dw1:dw1 + W, :].reshape(HW, F)
            slabf_ref[:, 2 * tp * F:2 * (tp + 1) * F] = jnp.concatenate(
                [p0, p1], axis=1)
        # last tap (t=8): 64-wide store at the 128-aligned offset 512.
        p8 = rpad_ref[2:2 + H, 2:2 + W, :].reshape(HW, F)
        slabf_ref[:, 8 * F:9 * F] = p8

    # ---- fused conv1 + conv3-x: one K = 9*Cin matmul over the shared x slab --
    rc = jnp.dot(sx_ref[0], w13_ref[...], preferred_element_type=f32)  # (HW, F+Cout)
    r = lrelu(rc[:, :F] + b1_ref[...])                                 # (HW, F)
    # Park the conv3 x-half partial, transposed, in the (lane-dense) output
    # block: only 2 vregs, and nothing big stays live across conv2.
    o_ref[0] = rc[:, F:].T.astype(o_ref.dtype)                         # (Cout, HW)

    # ---- zero-pad r in VMEM (padding never touches HBM) ----------------------
    rpad_ref[1:H + 1, 1:W + 1, :] = r.reshape(H, W, F)
    build_feature_slab()

    # ---- conv2: one K = 9*F (=576) matmul + bias + LeakyReLU -----------------
    r2 = lrelu(jnp.dot(slabf_ref[...], w2_ref[...],
                       preferred_element_type=f32) + b2_ref[...])      # (HW, F)

    # ---- ECA: global avg pool -> banded channel conv -> sigmoid -> rescale ---
    y = jnp.mean(r2, axis=0, keepdims=True)                            # (1, F)
    z = jnp.dot(y, band_ref[...], preferred_element_type=f32)          # (1, F)
    s = 1.0 / (1.0 + jnp.exp(-z))                                      # sigmoid
    r_e = r2 * s                                                       # channel rescale

    # ---- rebuild feature slab from r_eca (border of rpad is still zero) ------
    rpad_ref[1:H + 1, 1:W + 1, :] = r_e.reshape(H, W, F)
    build_feature_slab()

    # ---- conv3 r-half + bias, added to the parked x-half ---------------------
    out_r = (jnp.dot(slabf_ref[...], w3r_ref[...], preferred_element_type=f32)
             + b3_ref[...])                                            # (HW, Cout)
    o_ref[0] = o_ref[0] + out_r.T.astype(o_ref.dtype)                  # (Cout, HW)


# ---------------------------------------------------------------------------
# Wrapper
# ---------------------------------------------------------------------------
def _im2col_3x3(x):
    """NHWC (B,H,W,C) -> (B, H*W, 9*C) zero-padded 3x3 patches.

    Column order is (dh*3 + dw)*C + c, matching the packed weight layout.
    Tiny layout plumbing done once in XLA (negligible at Cin=4, H=W=16).
    """
    B, H, W, C = x.shape
    xp = jnp.pad(x, ((0, 0), (1, 1), (1, 1), (0, 0)))
    cols = [xp[:, dh:dh + H, dw:dw + W, :] for dh in range(3) for dw in range(3)]
    return jnp.concatenate(cols, axis=-1).reshape(B, H * W, 9 * C)


@jax.jit
def resblock_forward(x_nhwc, params):
    """Returns the ResBlock output directly in NCHW layout: (B, Cout, H, W)."""
    B, H, W, Cin = x_nhwc.shape
    F = params["w1p"].shape[-1]
    Cout = params["w3rp"].shape[-1]
    HW = H * W

    slab_x = _im2col_3x3(x_nhwc)                                    # (B, HW, 9*Cin)
    w13 = jnp.concatenate([params["w1p"], params["w3xp"]], axis=1)  # (9*Cin, F+Cout)
    b1 = params["b1"].reshape(1, F)
    b2 = params["b2"].reshape(1, F)
    b3 = params["b3"].reshape(1, Cout)

    # Banded (F, F) matrix for the k=3 zero-padded ECA channel conv:
    #   z[c] = w0*y[c-1] + w1*y[c] + w2*y[c+1]
    wc = params["eca_w"]
    idx = jnp.arange(F)
    band = (wc[0] * (idx[None, :] == idx[:, None] + 1)
            + wc[1] * (idx[None, :] == idx[:, None])
            + wc[2] * (idx[None, :] == idx[:, None] - 1)).astype(jnp.float32)

    kernel = functools.partial(_resblock_kernel, H=H, W=W, F=F, Cout=Cout)
    out_flat = pl.pallas_call(
        kernel,
        out_shape=jax.ShapeDtypeStruct((B, Cout, HW), x_nhwc.dtype),
        grid=(B,),
        in_specs=[
            pl.BlockSpec((1, HW, 9 * Cin), lambda b: (b, 0, 0)),
            pl.BlockSpec((9 * Cin, F + Cout), lambda b: (0, 0)),
            pl.BlockSpec((1, F), lambda b: (0, 0)),
            pl.BlockSpec((9 * F, F), lambda b: (0, 0)),
            pl.BlockSpec((1, F), lambda b: (0, 0)),
            pl.BlockSpec((9 * F, Cout), lambda b: (0, 0)),
            pl.BlockSpec((1, Cout), lambda b: (0, 0)),
            pl.BlockSpec((F, F), lambda b: (0, 0)),
        ],
        out_specs=pl.BlockSpec((1, Cout, HW), lambda b: (b, 0, 0)),
        scratch_shapes=[
            pltpu.VMEM((H + 2, W + 2, F), jnp.float32),   # padded feature map
            pltpu.VMEM((HW, 9 * F), jnp.float32),         # K-packed slab
        ],
        compiler_params=pltpu.CompilerParams(
            dimension_semantics=("parallel",)),
    )(slab_x, w13, b1, params["w2p"], b2, params["w3rp"], b3, band)

    return out_flat.reshape(B, Cout, H, W)                          # NCHW


# ---------------------------------------------------------------------------
# Deterministic parameter init (shapes from ResBlock.__init__)
# ---------------------------------------------------------------------------
def init_params(key, channel_in, channel_out, feature=64, k_size=3):
    ks = jax.random.split(key, 7)

    def conv_w(k, cin, cout):
        w = 0.1 * jax.random.normal(k, (cout, cin, 3, 3), jnp.float32)   # OIHW
        return jnp.transpose(w, (2, 3, 1, 0))                            # HWIO

    w1 = conv_w(ks[0], channel_in, feature)
    b1 = 0.1 * jax.random.normal(ks[1], (feature,), jnp.float32)
    w2 = conv_w(ks[2], feature, feature)
    b2 = 0.1 * jax.random.normal(ks[3], (feature,), jnp.float32)
    w3 = conv_w(ks[4], feature + channel_in, channel_out)   # channels: [x | r_eca]
    b3 = 0.1 * jax.random.normal(ks[5], (channel_out,), jnp.float32)
    wc = 0.5 * jax.random.normal(ks[6], (k_size,), jnp.float32)   # ECA conv1d taps

    return {
        # HWIO weights (used by the pure-JAX reference)
        "w1": w1, "b1": b1, "w2": w2, "b2": b2, "w3": w3, "b3": b3, "eca_w": wc,
        # K-packed weights for the fused Pallas kernel (row = (dh*3+dw)*Cin + cin)
        "w1p": w1.reshape(9 * channel_in, feature),
        "w2p": w2.reshape(9 * feature, feature),
        "w3xp": w3[:, :, :channel_in, :].reshape(9 * channel_in, channel_out),
        "w3rp": w3[:, :, channel_in:, :].reshape(9 * feature, channel_out),
    }


# ---------------------------------------------------------------------------
# Pure-JAX reference (correctness check)
# ---------------------------------------------------------------------------
def _conv_ref(x, w_hwio, b):
    y = lax.conv_general_dilated(
        x, w_hwio, window_strides=(1, 1), padding="SAME",
        dimension_numbers=("NHWC", "HWIO", "NHWC"))
    return y + b.reshape(1, 1, 1, -1)


def resblock_ref(x, params):
    lrelu = lambda t: jnp.where(t > 0, t, 0.2 * t)
    r = lrelu(_conv_ref(x, params["w1"], params["b1"]))
    r = lrelu(_conv_ref(r, params["w2"], params["b2"]))
    y = jnp.mean(r, axis=(1, 2))                        # (B, C)
    yp = jnp.pad(y, ((0, 0), (1, 1)))
    wc = params["eca_w"]
    z = wc[0] * yp[:, :-2] + wc[1] * yp[:, 1:-1] + wc[2] * yp[:, 2:]
    s = jax.nn.sigmoid(z)
    r_eca = r * s[:, None, None, :]
    cat = jnp.concatenate([x, r_eca], axis=-1)          # matches torch.cat((x, r_eca), dim=1)
    return _conv_ref(cat, params["w3"], params["b3"])


# ---------------------------------------------------------------------------
if __name__ == "__main__":
    key = jax.random.PRNGKey(0)
    k_x, k_p = jax.random.split(key)

    B, C_in, H, W = 2, 4, 16, 16
    C_out = 4

    # PyTorch-convention NCHW input, transposed to the kernel's NHWC layout.
    x_nchw = jax.random.normal(k_x, (B, C_in, H, W), jnp.float32)
    x_nhwc = jnp.transpose(x_nchw, (0, 2, 3, 1))

    params = init_params(k_p, C_in, C_out)

    out_nchw = jax.block_until_ready(resblock_forward(x_nhwc, params))  # NCHW directly
    assert out_nchw.shape == (B, C_out, H, W)

    ref_nhwc = resblock_ref(x_nhwc, params)
    ref_nchw = jnp.transpose(ref_nhwc, (0, 3, 1, 2))
    assert jnp.max(jnp.abs(out_nchw - ref_nchw)) < 1e-3, "mismatch vs JAX reference"

    print("KERNEL_OK")
</pallas_src>

<mosaic_0001>
module attributes {stable_mosaic.version = 11 : i64} {
  func.func @_resblock_kernel(%arg0: i32, %arg1: memref<1x256x36xf32, #tpu.memory_space<vmem>>, %arg2: memref<36x68xf32, #tpu.memory_space<vmem>>, %arg3: memref<1x64xf32, #tpu.memory_space<vmem>>, %arg4: memref<576x64xf32, #tpu.memory_space<vmem>>, %arg5: memref<1x64xf32, #tpu.memory_space<vmem>>, %arg6: memref<576x4xf32, #tpu.memory_space<vmem>>, %arg7: memref<1x4xf32, #tpu.memory_space<vmem>>, %arg8: memref<64x64xf32, #tpu.memory_space<vmem>>, %arg9: memref<1x4x256xf32, #tpu.memory_space<vmem>>, %arg10: memref<18x18x64xf32, #tpu.memory_space<vmem>>, %arg11: memref<256x576xf32, #tpu.memory_space<vmem>>) attributes {dimension_semantics = [#tpu.dimension_semantics<parallel>], iteration_bounds = array<i64: 2>, scalar_prefetch = 0 : i64, scratch_operands = 2 : i64, tpu.core_type = #tpu.core_type<tc>, window_params = [{transform_indices = @transform_0, window_bounds = array<i64: 1, 256, 36>}, {pipeline_mode = #tpu.pipeline_mode<synchronous>, transform_indices = @transform_1, window_bounds = array<i64: 36, 68>}, {pipeline_mode = #tpu.pipeline_mode<synchronous>, transform_indices = @transform_2, window_bounds = array<i64: 1, 64>}, {pipeline_mode = #tpu.pipeline_mode<synchronous>, transform_indices = @transform_3, window_bounds = array<i64: 576, 64>}, {pipeline_mode = #tpu.pipeline_mode<synchronous>, transform_indices = @transform_4, window_bounds = array<i64: 1, 64>}, {pipeline_mode = #tpu.pipeline_mode<synchronous>, transform_indices = @transform_5, window_bounds = array<i64: 576, 4>}, {pipeline_mode = #tpu.pipeline_mode<synchronous>, transform_indices = @transform_6, window_bounds = array<i64: 1, 4>}, {pipeline_mode = #tpu.pipeline_mode<synchronous>, transform_indices = @transform_7, window_bounds = array<i64: 64, 64>}, {transform_indices = @transform_8, window_bounds = array<i64: 1, 4, 256>}]} {
    %cst = arith.constant 0.000000e+00 : f32
    %0 = vector.broadcast %cst : f32 to vector<1x18x64xf32>
    %c0 = arith.constant 0 : index
    %c0_0 = arith.constant 0 : index
    %c0_1 = arith.constant 0 : index
    %1 = vector.load %arg10[%c0, %c0_0, %c0_1] : memref<18x18x64xf32, #tpu.memory_space<vmem>>, vector<1x18x64xf32>
    tpu.vector_store %arg10[%c0, %c0_0, %c0_1], %0 {strides = array<i32>} : memref<18x18x64xf32, #tpu.memory_space<vmem>>, vector<1x18x64xf32>,
    %cst_2 = arith.constant 0.000000e+00 : f32
    %2 = vector.broadcast %cst_2 : f32 to vector<1x18x64xf32>
    %c17 = arith.constant 17 : index
    %c0_3 = arith.constant 0 : index
    %c0_4 = arith.constant 0 : index
    %3 = vector.load %arg10[%c17, %c0_3, %c0_4] : memref<18x18x64xf32, #tpu.memory_space<vmem>>, vector<1x18x64xf32>
    tpu.vector_store %arg10[%c17, %c0_3, %c0_4], %2 {strides = array<i32>} : memref<18x18x64xf32, #tpu.memory_space<vmem>>, vector<1x18x64xf32>,
    %cst_5 = arith.constant 0.000000e+00 : f32
    %4 = vector.broadcast %cst_5 : f32 to vector<16x1x64xf32>
    %c1 = arith.constant 1 : index
    %c0_6 = arith.constant 0 : index
    %c0_7 = arith.constant 0 : index
    %5 = vector.load %arg10[%c1, %c0_6, %c0_7] : memref<18x18x64xf32, #tpu.memory_space<vmem>>, vector<16x1x64xf32>
    tpu.vector_store %arg10[%c1, %c0_6, %c0_7], %4 {strides = array<i32>} : memref<18x18x64xf32, #tpu.memory_space<vmem>>, vector<16x1x64xf32>,
    %cst_8 = arith.constant 0.000000e+00 : f32
    %6 = vector.broadcast %cst_8 : f32 to vector<16x1x64xf32>
    %c1_9 = arith.constant 1 : index
    %c17_10 = arith.constant 17 : index
    %c0_11 = arith.constant 0 : index
    %7 = vector.load %arg10[%c1_9, %c17_10, %c0_11] : memref<18x18x64xf32, #tpu.memory_space<vmem>>, vector<16x1x64xf32>
    tpu.vector_store %arg10[%c1_9, %c17_10, %c0_11], %6 {strides = array<i32>} : memref<18x18x64xf32, #tpu.memory_space<vmem>>, vector<16x1x64xf32>,
    %c0_12 = arith.constant 0 : index
    %c0_13 = arith.constant 0 : index
    %c0_14 = arith.constant 0 : index
    %8 = vector.load %arg1[%c0_12, %c0_13, %c0_14] : memref<1x256x36xf32, #tpu.memory_space<vmem>>, vector<1x256x36xf32>
    %9 = vector.shape_cast %8 : vector<1x256x36xf32> to vector<256x36xf32>
    %c0_15 = arith.constant 0 : index
    %c0_16 = arith.constant 0 : index
    %10 = vector.load %arg2[%c0_15, %c0_16] : memref<36x68xf32, #tpu.memory_space<vmem>>, vector<36x68xf32>
    %cst_17 = arith.constant dense<0.000000e+00> : vector<256x68xf32>
    %11 = tpu.matmul %9, %10, %cst_17 {dimension_numbers = #tpu.dot_dimension_numbers<[1], [0], [0], [1], [0, 0, 1, 1], [], []>} : vector<256x36xf32>, vector<36x68xf32>, vector<256x68xf32> -> vector<256x68xf32>
    %12 = vector.extract_strided_slice %11 {offsets = [0, 0], sizes = [256, 64], strides = [1, 1]} : vector<256x68xf32> to vector<256x64xf32>
    %c0_18 = arith.constant 0 : index
    %c0_19 = arith.constant 0 : index
    %13 = vector.load %arg3[%c0_18, %c0_19] : memref<1x64xf32, #tpu.memory_space<vmem>>, vector<1x64xf32>
    %14 = vector.broadcast %13 : vector<1x64xf32> to vector<256x64xf32>
    %15 = arith.addf %12, %14 : vector<256x64xf32>
    %cst_20 = arith.constant 0.000000e+00 : f32
    %16 = vector.broadcast %cst_20 : f32 to vector<256x64xf32>
    %17 = arith.cmpf ogt, %15, %16 : vector<256x64xf32>
    %cst_21 = arith.constant 2.000000e-01 : f32
    %18 = vector.broadcast %cst_21 : f32 to vector<256x64xf32>
    %19 = arith.mulf %18, %15 : vector<256x64xf32>
    %20 = arith.select %17, %15, %19 : vector<256x64xi1>, vector<256x64xf32>
    %21 = vector.extract_strided_slice %11 {offsets = [0, 64], sizes = [256, 4], strides = [1, 1]} : vector<256x68xf32> to vector<256x4xf32>
    %22 = tpu.transpose %21, [1, 0] : vector<256x4xf32> -> vector<4x256xf32>
    %c0_22 = arith.constant 0 : index
    %c0_23 = arith.constant 0 : index
    %c0_24 = arith.constant 0 : index
    %23 = vector.load %arg9[%c0_22, %c0_23, %c0_24] : memref<1x4x256xf32, #tpu.memory_space<vmem>>, vector<1x4x256xf32>
    %24 = vector.shape_cast %23 : vector<1x4x256xf32> to vector<4x256xf32>
    %25 = vector.shape_cast %22 : vector<4x256xf32> to vector<1x4x256xf32>
    tpu.vector_store %arg9[%c0_22, %c0_23, %c0_24], %25 {strides = array<i32>} : memref<1x4x256xf32, #tpu.memory_space<vmem>>, vector<1x4x256xf32>,
    %26 = vector.shape_cast %20 : vector<256x64xf32> to vector<16x16x64xf32>
    %c1_25 = arith.constant 1 : index
    %c1_26 = arith.constant 1 : index
    %c0_27 = arith.constant 0 : index
    %27 = vector.load %arg10[%c1_25, %c1_26, %c0_27] : memref<18x18x64xf32, #tpu.memory_space<vmem>>, vector<16x16x64xf32>
    tpu.vector_store %arg10[%c1_25, %c1_26, %c0_27], %26 {strides = array<i32>} : memref<18x18x64xf32, #tpu.memory_space<vmem>>, vector<16x16x64xf32>,
    %c0_28 = arith.constant 0 : index
    %c0_29 = arith.constant 0 : index
    %c0_30 = arith.constant 0 : index
    %28 = vector.load %arg10[%c0_28, %c0_29, %c0_30] : memref<18x18x64xf32, #tpu.memory_space<vmem>>, vector<16x16x64xf32>
    %29 = vector.shape_cast %28 : vector<16x16x64xf32> to vector<256x64xf32>
    %c0_31 = arith.constant 0 : index
    %c1_32 = arith.constant 1 : index
    %c0_33 = arith.constant 0 : index
    %30 = vector.load %arg10[%c0_31, %c1_32, %c0_33] : memref<18x18x64xf32, #tpu.memory_space<vmem>>, vector<16x16x64xf32>
    %31 = vector.shape_cast %30 : vector<16x16x64xf32> to vector<256x64xf32>
    %32 = tpu.concatenate %29, %31 in 1 : vector<256x64xf32>, vector<256x64xf32> -> vector<256x128xf32>
    %c0_34 = arith.constant 0 : index
    %c0_35 = arith.constant 0 : index
    %33 = vector.load %arg11[%c0_34, %c0_35] : memref<256x576xf32, #tpu.memory_space<vmem>>, vector<256x128xf32>
    tpu.vector_store %arg11[%c0_34, %c0_35], %32 {strides = array<i32>} : memref<256x576xf32, #tpu.memory_space<vmem>>, vector<256x128xf32>,
    %c0_36 = arith.constant 0 : index
    %c2 = arith.constant 2 : index
    %c0_37 = arith.constant 0 : index
    %34 = vector.load %arg10[%c0_36, %c2, %c0_37] : memref<18x18x64xf32, #tpu.memory_space<vmem>>, vector<16x16x64xf32>
    %35 = vector.shape_cast %34 : vector<16x16x64xf32> to vector<256x64xf32>
    %c1_38 = arith.constant 1 : index
    %c0_39 = arith.constant 0 : index
    %c0_40 = arith.constant 0 : index
    %36 = vector.load %arg10[%c1_38, %c0_39, %c0_40] : memref<18x18x64xf32, #tpu.memory_space<vmem>>, vector<16x16x64xf32>
    %37 = vector.shape_cast %36 : vector<16x16x64xf32> to vector<256x64xf32>
    %38 = tpu.concatenate %35, %37 in 1 : vector<256x64xf32>, vector<256x64xf32> -> vector<256x128xf32>
    %c0_41 = arith.constant 0 : index
    %c128 = arith.constant 128 : index
    %39 = vector.load %arg11[%c0_41, %c128] : memref<256x576xf32, #tpu.memory_space<vmem>>, vector<256x128xf32>
    tpu.vector_store %arg11[%c0_41, %c128], %38 {strides = array<i32>} : memref<256x576xf32, #tpu.memory_space<vmem>>, vector<256x128xf32>,
    %c1_42 = arith.constant 1 : index
    %c1_43 = arith.constant 1 : index
    %c0_44 = arith.constant 0 : index
    %40 = vector.load %arg10[%c1_42, %c1_43, %c0_44] : memref<18x18x64xf32, #tpu.memory_space<vmem>>, vector<16x16x64xf32>
    %41 = vector.shape_cast %40 : vector<16x16x64xf32> to vector<256x64xf32>
    %c1_45 = arith.constant 1 : index
    %c2_46 = arith.constant 2 : index
    %c0_47 = arith.constant 0 : index
    %42 = vector.load %arg10[%c1_45, %c2_46, %c0_47] : memref<18x18x64xf32, #tpu.memory_space<vmem>>, vector<16x16x64xf32>
    %43 = vector.shape_cast %42 : vector<16x16x64xf32> to vector<256x64xf32>
    %44 = tpu.concatenate %41, %43 in 1 : vector<256x64xf32>, vector<256x64xf32> -> vector<256x128xf32>
    %c0_48 = arith.constant 0 : index
    %c256 = arith.constant 256 : index
    %45 = vector.load %arg11[%c0_48, %c256] : memref<256x576xf32, #tpu.memory_space<vmem>>, vector<256x128xf32>
    tpu.vector_store %arg11[%c0_48, %c256], %44 {strides = array<i32>} : memref<256x576xf32, #tpu.memory_space<vmem>>, vector<256x128xf32>,
    %c2_49 = arith.constant 2 : index
    %c0_50 = arith.constant 0 : index
    %c0_51 = arith.constant 0 : index
    %46 = vector.load %arg10[%c2_49, %c0_50, %c0_51] : memref<18x18x64xf32, #tpu.memory_space<vmem>>, vector<16x16x64xf32>
    %47 = vector.shape_cast %46 : vector<16x16x64xf32> to vector<256x64xf32>
    %c2_52 = arith.constant 2 : index
    %c1_53 = arith.constant 1 : index
    %c0_54 = arith.constant 0 : index
    %48 = vector.load %arg10[%c2_52, %c1_53, %c0_54] : memref<18x18x64xf32, #tpu.memory_space<vmem>>, vector<16x16x64xf32>
    %49 = vector.shape_cast %48 : vector<16x16x64xf32> to vector<256x64xf32>
    %50 = tpu.concatenate %47, %49 in 1 : vector<256x64xf32>, vector<256x64xf32> -> vector<256x128xf32>
    %c0_55 = arith.constant 0 : index
    %c384 = arith.constant 384 : index
    %51 = vector.load %arg11[%c0_55, %c384] : memref<256x576xf32, #tpu.memory_space<vmem>>, vector<256x128xf32>
    tpu.vector_store %arg11[%c0_55, %c384], %50 {strides = array<i32>} : memref<256x576xf32, #tpu.memory_space<vmem>>, vector<256x128xf32>,
    %c2_56 = arith.constant 2 : index
    %c2_57 = arith.constant 2 : index
    %c0_58 = arith.constant 0 : index
    %52 = vector.load %arg10[%c2_56, %c2_57, %c0_58] : memref<18x18x64xf32, #tpu.memory_space<vmem>>, vector<16x16x64xf32>
    %53 = vector.shape_cast %52 : vector<16x16x64xf32> to vector<256x64xf32>
    %c0_59 = arith.constant 0 : index
    %c512 = arith.constant 512 : index
    %54 = vector.load %arg11[%c0_59, %c512] : memref<256x576xf32, #tpu.memory_space<vmem>>, vector<256x64xf32>
    tpu.vector_store %arg11[%c0_59, %c512], %53 {strides = array<i32>} : memref<256x576xf32, #tpu.memory_space<vmem>>, vector<256x64xf32>,
    %c0_60 = arith.constant 0 : index
    %c0_61 = arith.constant 0 : index
    %55 = vector.load %arg11[%c0_60, %c0_61] : memref<256x576xf32, #tpu.memory_space<vmem>>, vector<256x576xf32>
    %c0_62 = arith.constant 0 : index
    %c0_63 = arith.constant 0 : index
    %56 = vector.load %arg4[%c0_62, %c0_63] : memref<576x64xf32, #tpu.memory_space<vmem>>, vector<576x64xf32>
    %cst_64 = arith.constant dense<0.000000e+00> : vector<256x64xf32>
    %57 = tpu.matmul %55, %56, %cst_64 {dimension_numbers = #tpu.dot_dimension_numbers<[1], [0], [0], [1], [0, 0, 1, 1], [], []>} : vector<256x576xf32>, vector<576x64xf32>, vector<256x64xf32> -> vector<256x64xf32>
    %c0_65 = arith.constant 0 : index
    %c0_66 = arith.constant 0 : index
    %58 = vector.load %arg5[%c0_65, %c0_66] : memref<1x64xf32, #tpu.memory_space<vmem>>, vector<1x64xf32>
    %59 = vector.broadcast %58 : vector<1x64xf32> to vector<256x64xf32>
    %60 = arith.addf %57, %59 : vector<256x64xf32>
    %cst_67 = arith.constant 0.000000e+00 : f32
    %61 = vector.broadcast %cst_67 : f32 to vector<256x64xf32>
    %62 = arith.cmpf ogt, %60, %61 : vector<256x64xf32>
    %cst_68 = arith.constant 2.000000e-01 : f32
    %63 = vector.broadcast %cst_68 : f32 to vector<256x64xf32>
    %64 = arith.mulf %63, %60 : vector<256x64xf32>
    %65 = arith.select %62, %60, %64 : vector<256x64xi1>, vector<256x64xf32>
    %cst_69 = arith.constant dense<0.000000e+00> : vector<64xf32>
    %66 = vector.multi_reduction <add>, %65, %cst_69 [0] : vector<256x64xf32> to vector<64xf32>
    %67 = vector.shape_cast %66 : vector<64xf32> to vector<1x64xf32>
    %cst_70 = arith.constant 2.560000e+02 : f32
    %68 = vector.broadcast %cst_70 : f32 to vector<1x64xf32>
    %69 = arith.divf %67, %68 : vector<1x64xf32>
    %c0_71 = arith.constant 0 : index
    %c0_72 = arith.constant 0 : index
    %70 = vector.load %arg8[%c0_71, %c0_72] : memref<64x64xf32, #tpu.memory_space<vmem>>, vector<64x64xf32>
    %cst_73 = arith.constant dense<0.000000e+00> : vector<1x64xf32>
    %71 = tpu.matmul %69, %70, %cst_73 {dimension_numbers = #tpu.dot_dimension_numbers<[1], [0], [0], [1], [0, 0, 1, 1], [], []>} : vector<1x64xf32>, vector<64x64xf32>, vector<1x64xf32> -> vector<1x64xf32>
    %cst_74 = arith.constant 0.000000e+00 : f32
    %72 = vector.broadcast %cst_74 : f32 to vector<1x64xf32>
    %73 = arith.subf %72, %71 : vector<1x64xf32>
    %74 = math.exp %73 : vector<1x64xf32>
    %cst_75 = arith.constant 1.000000e+00 : f32
    %75 = vector.broadcast %cst_75 : f32 to vector<1x64xf32>
    %76 = arith.addf %75, %74 : vector<1x64xf32>
    %cst_76 = arith.constant 1.000000e+00 : f32
    %77 = vector.broadcast %cst_76 : f32 to vector<1x64xf32>
    %78 = arith.divf %77, %76 : vector<1x64xf32>
    %79 = vector.broadcast %78 : vector<1x64xf32> to vector<256x64xf32>
    %80 = arith.mulf %65, %79 : vector<256x64xf32>
    %81 = vector.shape_cast %80 : vector<256x64xf32> to vector<16x16x64xf32>
    %c1_77 = arith.constant 1 : index
    %c1_78 = arith.constant 1 : index
    %c0_79 = arith.constant 0 : index
    %82 = vector.load %arg10[%c1_77, %c1_78, %c0_79] : memref<18x18x64xf32, #tpu.memory_space<vmem>>, vector<16x16x64xf32>
    tpu.vector_store %arg10[%c1_77, %c1_78, %c0_79], %81 {strides = array<i32>} : memref<18x18x64xf32, #tpu.memory_space<vmem>>, vector<16x16x64xf32>,
    %c0_80 = arith.constant 0 : index
    %c0_81 = arith.constant 0 : index
    %c0_82 = arith.constant 0 : index
    %83 = vector.load %arg10[%c0_80, %c0_81, %c0_82] : memref<18x18x64xf32, #tpu.memory_space<vmem>>, vector<16x16x64xf32>
    %84 = vector.shape_cast %83 : vector<16x16x64xf32> to vector<256x64xf32>
    %c0_83 = arith.constant 0 : index
    %c1_84 = arith.constant 1 : index
    %c0_85 = arith.constant 0 : index
    %85 = vector.load %arg10[%c0_83, %c1_84, %c0_85] : memref<18x18x64xf32, #tpu.memory_space<vmem>>, vector<16x16x64xf32>
    %86 = vector.shape_cast %85 : vector<16x16x64xf32> to vector<256x64xf32>
    %87 = tpu.concatenate %84, %86 in 1 : vector<256x64xf32>, vector<256x64xf32> -> vector<256x128xf32>
    %c0_86 = arith.constant 0 : index
    %c0_87 = arith.constant 0 : index
    %88 = vector.load %arg11[%c0_86, %c0_87] : memref<256x576xf32, #tpu.memory_space<vmem>>, vector<256x128xf32>
    tpu.vector_store %arg11[%c0_86, %c0_87], %87 {strides = array<i32>} : memref<256x576xf32, #tpu.memory_space<vmem>>, vector<256x128xf32>,
    %c0_88 = arith.constant 0 : index
    %c2_89 = arith.constant 2 : index
    %c0_90 = arith.constant 0 : index
    %89 = vector.load %arg10[%c0_88, %c2_89, %c0_90] : memref<18x18x64xf32, #tpu.memory_space<vmem>>, vector<16x16x64xf32>
    %90 = vector.shape_cast %89 : vector<16x16x64xf32> to vector<256x64xf32>
    %c1_91 = arith.constant 1 : index
    %c0_92 = arith.constant 0 : index
    %c0_93 = arith.constant 0 : index
    %91 = vector.load %arg10[%c1_91, %c0_92, %c0_93] : memref<18x18x64xf32, #tpu.memory_space<vmem>>, vector<16x16x64xf32>
    %92 = vector.shape_cast %91 : vector<16x16x64xf32> to vector<256x64xf32>
    %93 = tpu.concatenate %90, %92 in 1 : vector<256x64xf32>, vector<256x64xf32> -> vector<256x128xf32>
    %c0_94 = arith.constant 0 : index
    %c128_95 = arith.constant 128 : index
    %94 = vector.load %arg11[%c0_94, %c128_95] : memref<256x576xf32, #tpu.memory_space<vmem>>, vector<256x128xf32>
    tpu.vector_store %arg11[%c0_94, %c128_95], %93 {strides = array<i32>} : memref<256x576xf32, #tpu.memory_space<vmem>>, vector<256x128xf32>,
    %c1_96 = arith.constant 1 : index
    %c1_97 = arith.constant 1 : index
    %c0_98 = arith.constant 0 : index
    %95 = vector.load %arg10[%c1_96, %c1_97, %c0_98] : memref<18x18x64xf32, #tpu.memory_space<vmem>>, vector<16x16x64xf32>
    %96 = vector.shape_cast %95 : vector<16x16x64xf32> to vector<256x64xf32>
    %c1_99 = arith.constant 1 : index
    %c2_100 = arith.constant 2 : index
    %c0_101 = arith.constant 0 : index
    %97 = vector.load %arg10[%c1_99, %c2_100, %c0_101] : memref<18x18x64xf32, #tpu.memory_space<vmem>>, vector<16x16x64xf32>
    %98 = vector.shape_cast %97 : vector<16x16x64xf32> to vector<256x64xf32>
    %99 = tpu.concatenate %96, %98 in 1 : vector<256x64xf32>, vector<256x64xf32> -> vector<256x128xf32>
    %c0_102 = arith.constant 0 : index
    %c256_103 = arith.constant 256 : index
    %100 = vector.load %arg11[%c0_102, %c256_103] : memref<256x576xf32, #tpu.memory_space<vmem>>, vector<256x128xf32>
    tpu.vector_store %arg11[%c0_102, %c256_103], %99 {strides = array<i32>} : memref<256x576xf32, #tpu.memory_space<vmem>>, vector<256x128xf32>,
    %c2_104 = arith.constant 2 : index
    %c0_105 = arith.constant 0 : index
    %c0_106 = arith.constant 0 : index
    %101 = vector.load %arg10[%c2_104, %c0_105, %c0_106] : memref<18x18x64xf32, #tpu.memory_space<vmem>>, vector<16x16x64xf32>
    %102 = vector.shape_cast %101 : vector<16x16x64xf32> to vector<256x64xf32>
    %c2_107 = arith.constant 2 : index
    %c1_108 = arith.constant 1 : index
    %c0_109 = arith.constant 0 : index
    %103 = vector.load %arg10[%c2_107, %c1_108, %c0_109] : memref<18x18x64xf32, #tpu.memory_space<vmem>>, vector<16x16x64xf32>
    %104 = vector.shape_cast %103 : vector<16x16x64xf32> to vector<256x64xf32>
    %105 = tpu.concatenate %102, %104 in 1 : vector<256x64xf32>, vector<256x64xf32> -> vector<256x128xf32>
    %c0_110 = arith.constant 0 : index
    %c384_111 = arith.constant 384 : index
    %106 = vector.load %arg11[%c0_110, %c384_111] : memref<256x576xf32, #tpu.memory_space<vmem>>, vector<256x128xf32>
    tpu.vector_store %arg11[%c0_110, %c384_111], %105 {strides = array<i32>} : memref<256x576xf32, #tpu.memory_space<vmem>>, vector<256x128xf32>,
    %c2_112 = arith.constant 2 : index
    %c2_113 = arith.constant 2 : index
    %c0_114 = arith.constant 0 : index
    %107 = vector.load %arg10[%c2_112, %c2_113, %c0_114] : memref<18x18x64xf32, #tpu.memory_space<vmem>>, vector<16x16x64xf32>
    %108 = vector.shape_cast %107 : vector<16x16x64xf32> to vector<256x64xf32>
    %c0_115 = arith.constant 0 : index
    %c512_116 = arith.constant 512 : index
    %109 = vector.load %arg11[%c0_115, %c512_116] : memref<256x576xf32, #tpu.memory_space<vmem>>, vector<256x64xf32>
    tpu.vector_store %arg11[%c0_115, %c512_116], %108 {strides = array<i32>} : memref<256x576xf32, #tpu.memory_space<vmem>>, vector<256x64xf32>,
    %c0_117 = arith.constant 0 : index
    %c0_118 = arith.constant 0 : index
    %110 = vector.load %arg11[%c0_117, %c0_118] : memref<256x576xf32, #tpu.memory_space<vmem>>, vector<256x576xf32>
    %c0_119 = arith.constant 0 : index
    %c0_120 = arith.constant 0 : index
    %111 = vector.load %arg6[%c0_119, %c0_120] : memref<576x4xf32, #tpu.memory_space<vmem>>, vector<576x4xf32>
    %cst_121 = arith.constant dense<0.000000e+00> : vector<256x4xf32>
    %112 = tpu.matmul %110, %111, %cst_121 {dimension_numbers = #tpu.dot_dimension_numbers<[1], [0], [0], [1], [0, 0, 1, 1], [], []>} : vector<256x576xf32>, vector<576x4xf32>, vector<256x4xf32> -> vector<256x4xf32>
    %c0_122 = arith.constant 0 : index
    %c0_123 = arith.constant 0 : index
    %113 = vector.load %arg7[%c0_122, %c0_123] : memref<1x4xf32, #tpu.memory_space<vmem>>, vector<1x4xf32>
    %114 = vector.broadcast %113 : vector<1x4xf32> to vector<256x4xf32>
    %115 = arith.addf %112, %114 : vector<256x4xf32>
    %c0_124 = arith.constant 0 : index
    %c0_125 = arith.constant 0 : index
    %c0_126 = arith.constant 0 : index
    %116 = vector.load %arg9[%c0_124, %c0_125, %c0_126] : memref<1x4x256xf32, #tpu.memory_space<vmem>>, vector<1x4x256xf32>
    %117 = vector.shape_cast %116 : vector<1x4x256xf32> to vector<4x256xf32>
    %118 = tpu.transpose %115, [1, 0] : vector<256x4xf32> -> vector<4x256xf32>
    %119 = arith.addf %117, %118 : vector<4x256xf32>
    %c0_127 = arith.constant 0 : index
    %c0_128 = arith.constant 0 : index
    %c0_129 = arith.constant 0 : index
    %120 = vector.load %arg9[%c0_127, %c0_128, %c0_129] : memref<1x4x256xf32, #tpu.memory_space<vmem>>, vector<1x4x256xf32>
    %121 = vector.shape_cast %120 : vector<1x4x256xf32> to vector<4x256xf32>
    %122 = vector.shape_cast %119 : vector<4x256xf32> to vector<1x4x256xf32>
    tpu.vector_store %arg9[%c0_127, %c0_128, %c0_129], %122 {strides = array<i32>} : memref<1x4x256xf32, #tpu.memory_space<vmem>>, vector<1x4x256xf32>,
    return
  }
  func.func @transform_0(%arg0: i32) -> (i32, i32, i32) {
    %c0_i32 = arith.constant 0 : i32
    %c0_i32_0 = arith.constant 0 : i32
    %c0_i32_1 = arith.constant 0 : i32
    return %arg0, %c0_i32, %c0_i32_0 : i32, i32, i32
  }
  func.func @transform_1(%arg0: i32) -> (i32, i32) {
    %c0_i32 = arith.constant 0 : i32
    %c0_i32_0 = arith.constant 0 : i32
    %c0_i32_1 = arith.constant 0 : i32
    return %c0_i32, %c0_i32_0 : i32, i32
  }
  func.func @transform_2(%arg0: i32) -> (i32, i32) {
    %c0_i32 = arith.constant 0 : i32
    %c0_i32_0 = arith.constant 0 : i32
    %c0_i32_1 = arith.constant 0 : i32
    return %c0_i32, %c0_i32_0 : i32, i32
  }
  func.func @transform_3(%arg0: i32) -> (i32, i32) {
    %c0_i32 = arith.constant 0 : i32
    %c0_i32_0 = arith.constant 0 : i32
    %c0_i32_1 = arith.constant 0 : i32
    return %c0_i32, %c0_i32_0 : i32, i32
  }
  func.func @transform_4(%arg0: i32) -> (i32, i32) {
    %c0_i32 = arith.constant 0 : i32
    %c0_i32_0 = arith.constant 0 : i32
    %c0_i32_1 = arith.constant 0 : i32
    return %c0_i32, %c0_i32_0 : i32, i32
  }
  func.func @transform_5(%arg0: i32) -> (i32, i32) {
    %c0_i32 = arith.constant 0 : i32
    %c0_i32_0 = arith.constant 0 : i32
    %c0_i32_1 = arith.constant 0 : i32
    return %c0_i32, %c0_i32_0 : i32, i32
  }
  func.func @transform_6(%arg0: i32) -> (i32, i32) {
    %c0_i32 = arith.constant 0 : i32
    %c0_i32_0 = arith.constant 0 : i32
    %c0_i32_1 = arith.constant 0 : i32
    return %c0_i32, %c0_i32_0 : i32, i32
  }
  func.func @transform_7(%arg0: i32) -> (i32, i32) {
    %c0_i32 = arith.constant 0 : i32
    %c0_i32_0 = arith.constant 0 : i32
    %c0_i32_1 = arith.constant 0 : i32
    return %c0_i32, %c0_i32_0 : i32, i32
  }
  func.func @transform_8(%arg0: i32) -> (i32, i32, i32) {
    %c0_i32 = arith.constant 0 : i32
    %c0_i32_0 = arith.constant 0 : i32
    %c0_i32_1 = arith.constant 0 : i32
    return %arg0, %c0_i32, %c0_i32_0 : i32, i32, i32
  }
}

</mosaic_0001>

<llo_original>
// kernel: resblock_forward.1
$region0: #{resblock_forward.1}
  #allocation0 [shape = 'u32[]', space=smem, size = 0x4, offset = 0x4, fixed_abs, tag = 'smem constant byte address 0x4 - core index']
  #allocation1 [shape = 'u32[144,128]{1,0:T(1,128)}', space=vmem, size = 0x12000, scoped, tag = 'internal scratch']
  #allocation2 [shape = 'f32[18,18,64]{2,1,0:T(8,128)}', space=vmem, size = 0x36000, scoped, tag = 'scratch operand']
  #allocation3 [shape = 'f32[256,576]{1,0:T(8,128)}', space=vmem, size = 0xa0000, scoped, tag = 'scratch operand']
  %s0 = inlined_call_operand.vmem [shape: f32[2,256,36], index: 0, kind: input, shape index: {}]
  %s1 = inlined_call_operand.vmem [shape: f32[36,68], index: 1, kind: input, shape index: {}]
  %s2 = inlined_call_operand.vmem [shape: f32[1,64], index: 2, kind: input, shape index: {}]
  %s3 = inlined_call_operand.vmem [shape: f32[576,64], index: 3, kind: input, shape index: {}]
  %s4 = inlined_call_operand.vmem [shape: f32[1,64], index: 4, kind: input, shape index: {}]
  %s5 = inlined_call_operand.vmem [shape: f32[576,4], index: 5, kind: input, shape index: {}]
  %s6 = inlined_call_operand.vmem [shape: f32[1,4], index: 6, kind: input, shape index: {}]
  %s7 = inlined_call_operand.vmem [shape: f32[64,64], index: 7, kind: input, shape index: {}]
  %s8 = inlined_call_operand.vmem [shape: f32[2,4,256], index: 8, kind: output, shape index: {}]
  %s9 = sld [smem:[#allocation0]]
  $region65: #{resblock_forward.1} parent=0
    _
  %s11 = ssub.s32 1, %s9
  %s12 = scalar_select 0, %s11, %s9
  loop: start=0, step=1, limit=4
  $region2: #{resblock_forward.1} parent=0 // loop_pre_header
    _
  $region3: #{resblock_forward.1} parent=0 // loop_header
    %s14 = sphi 0, %s18
    %p15 = scmp.ge.s32.totalorder %s14, 4
    %s24 = sphi 0, %s26
    %s27 = sphi 0, %s24
    %s28 = sphi 0, %s27
    %s44 = sphi 0, %s28
    %s48 = sphi 0, %s48
    %s50 = sphi 0, %s48
    %s51 = sphi 0, %s50
    %s65 = sphi 0, %s51
    %s69 = sphi 0, %s69
    %s71 = sphi 0, %s69
    %s72 = sphi 0, %s71
    %s86 = sphi 0, %s72
    %s90 = sphi 0, %s90
    %s92 = sphi 0, %s90
    %s93 = sphi 0, %s92
    %s107 = sphi 0, %s93
    %s111 = sphi 0, %s111
    %s113 = sphi 0, %s111
    %s114 = sphi 0, %s113
    %s128 = sphi 0, %s114
    %s132 = sphi 0, %s132
    %s134 = sphi 0, %s132
    %s135 = sphi 0, %s134
    %s149 = sphi 0, %s135
    %s153 = sphi 0, %s153
    %s155 = sphi 0, %s153
    %s156 = sphi 0, %s155
    %s170 = sphi 0, %s156
    %s174 = sphi 0, %s174
    %s176 = sphi 0, %s174
    %s177 = sphi 0, %s176
    %s191 = sphi 0, %s177
    %s197 = sphi 0, %s199
    %s200 = sphi 0, %s197
    %s201 = sphi 0, %s200
    %s217 = sphi 0, %s201
  $region4: #{resblock_forward.1} parent=0 // loop_header_branch
    %17 = sbr.rel (%p15) target = $region8
  $region5: #{resblock_forward.1} parent=0 // loop_body
    %s19 = ssub.s32 %s14, 1
    %s20 = ssub.s32 %s14, 2
    %s21 = sadd.s32 %s14, 1
    %s22 = ssub.s32 %s14, %s21
    %p23 = scmp.eq.s32.totalorder %s22, 0
    %s25 = sadd.s32 %s24, 1
    %s26 = scalar_select %p23, %s24, %s25
    %p29 = pneg %p23
    %p30 = scmp.eq.s32.totalorder %s14, 1
    %p31 = por %p29, %p30
    %p32 = scmp.ne.s32.totalorder %s24, %s27
    %p33 = scmp.eq.s32.totalorder %s14, 0
    %p34 = por %p32, %p33
    %p35 = scmp.ne.s32.totalorder %s24, %s27
    %p36 = scmp.eq.s32.totalorder %s19, 1
    %p37 = por %p35, %p36
    %p38 = scmp.ne.s32.totalorder %s27, %s28
    %p39 = scmp.eq.s32.totalorder %s19, 0
    %p40 = por %p38, %p39
    %p41 = scmp.ne.s32.totalorder %s27, %s28
    %p42 = scmp.eq.s32.totalorder %s20, 1
    %p43 = por %p41, %p42
    %p45 = scmp.ne.s32.totalorder %s28, %s44
    %p46 = scmp.eq.s32.totalorder %s20, 0
    %p47 = por %p45, %p46
    %s49 = sadd.s32 %s48, 1
    %p52 = scmp.eq.s32.totalorder %s14, 1
    %p53 = scmp.ne.s32.totalorder %s48, %s50
    %p54 = scmp.eq.s32.totalorder %s14, 0
    %p55 = por %p53, %p54
    %p56 = scmp.ne.s32.totalorder %s48, %s50
    %p57 = scmp.eq.s32.totalorder %s19, 1
    %p58 = por %p56, %p57
    %p59 = scmp.ne.s32.totalorder %s50, %s51
    %p60 = scmp.eq.s32.totalorder %s19, 0
    %p61 = por %p59, %p60
    %p62 = scmp.ne.s32.totalorder %s50, %s51
    %p63 = scmp.eq.s32.totalorder %s20, 1
    %p64 = por %p62, %p63
    %p66 = scmp.ne.s32.totalorder %s51, %s65
    %p67 = scmp.eq.s32.totalorder %s20, 0
    %p68 = por %p66, %p67
    %s70 = sadd.s32 %s69, 1
    %p73 = scmp.eq.s32.totalorder %s14, 1
    %p74 = scmp.ne.s32.totalorder %s69, %s71
    %p75 = scmp.eq.s32.totalorder %s14, 0
    %p76 = por %p74, %p75
    %p77 = scmp.ne.s32.totalorder %s69, %s71
    %p78 = scmp.eq.s32.totalorder %s19, 1
    %p79 = por %p77, %p78
    %p80 = scmp.ne.s32.totalorder %s71, %s72
    %p81 = scmp.eq.s32.totalorder %s19, 0
    %p82 = por %p80, %p81
    %p83 = scmp.ne.s32.totalorder %s71, %s72
    %p84 = scmp.eq.s32.totalorder %s20, 1
    %p85 = por %p83, %p84
    %p87 = scmp.ne.s32.totalorder %s72, %s86
    %p88 = scmp.eq.s32.totalorder %s20, 0
    %p89 = por %p87, %p88
    %s91 = sadd.s32 %s90, 1
    %p94 = scmp.eq.s32.totalorder %s14, 1
    %p95 = scmp.ne.s32.totalorder %s90, %s92
    %p96 = scmp.eq.s32.totalorder %s14, 0
    %p97 = por %p95, %p96
    %p98 = scmp.ne.s32.totalorder %s90, %s92
    %p99 = scmp.eq.s32.totalorder %s19, 1
    %p100 = por %p98, %p99
    %p101 = scmp.ne.s32.totalorder %s92, %s93
    %p102 = scmp.eq.s32.totalorder %s19, 0
    %p103 = por %p101, %p102
    %p104 = scmp.ne.s32.totalorder %s92, %s93
    %p105 = scmp.eq.s32.totalorder %s20, 1
    %p106 = por %p104, %p105
    %p108 = scmp.ne.s32.totalorder %s93, %s107
    %p109 = scmp.eq.s32.totalorder %s20, 0
    %p110 = por %p108, %p109
    %s112 = sadd.s32 %s111, 1
    %p115 = scmp.eq.s32.totalorder %s14, 1
    %p116 = scmp.ne.s32.totalorder %s111, %s113
    %p117 = scmp.eq.s32.totalorder %s14, 0
    %p118 = por %p116, %p117
    %p119 = scmp.ne.s32.totalorder %s111, %s113
    %p120 = scmp.eq.s32.totalorder %s19, 1
    %p121 = por %p119, %p120
    %p122 = scmp.ne.s32.totalorder %s113, %s114
    %p123 = scmp.eq.s32.totalorder %s19, 0
    %p124 = por %p122, %p123
    %p125 = scmp.ne.s32.totalorder %s113, %s114
    %p126 = scmp.eq.s32.totalorder %s20, 1
    %p127 = por %p125, %p126
    %p129 = scmp.ne.s32.totalorder %s114, %s128
    %p130 = scmp.eq.s32.totalorder %s20, 0
    %p131 = por %p129, %p130
    %s133 = sadd.s32 %s132, 1
    %p136 = scmp.eq.s32.totalorder %s14, 1
    %p137 = scmp.ne.s32.totalorder %s132, %s134
    %p138 = scmp.eq.s32.totalorder %s14, 0
    %p139 = por %p137, %p138
    %p140 = scmp.ne.s32.totalorder %s132, %s134
    %p141 = scmp.eq.s32.totalorder %s19, 1
    %p142 = por %p140, %p141
    %p143 = scmp.ne.s32.totalorder %s134, %s135
    %p144 = scmp.eq.s32.totalorder %s19, 0
    %p145 = por %p143, %p144
    %p146 = scmp.ne.s32.totalorder %s134, %s135
    %p147 = scmp.eq.s32.totalorder %s20, 1
    %p148 = por %p146, %p147
    %p150 = scmp.ne.s32.totalorder %s135, %s149
    %p151 = scmp.eq.s32.totalorder %s20, 0
    %p152 = por %p150, %p151
    %s154 = sadd.s32 %s153, 1
    %p157 = scmp.eq.s32.totalorder %s14, 1
    %p158 = scmp.ne.s32.totalorder %s153, %s155
    %p159 = scmp.eq.s32.totalorder %s14, 0
    %p160 = por %p158, %p159
    %p161 = scmp.ne.s32.totalorder %s153, %s155
    %p162 = scmp.eq.s32.totalorder %s19, 1
    %p163 = por %p161, %p162
    %p164 = scmp.ne.s32.totalorder %s155, %s156
    %p165 = scmp.eq.s32.totalorder %s19, 0
    %p166 = por %p164, %p165
    %p167 = scmp.ne.s32.totalorder %s155, %s156
    %p168 = scmp.eq.s32.totalorder %s20, 1
    %p169 = por %p167, %p168
    %p171 = scmp.ne.s32.totalorder %s156, %s170
    %p172 = scmp.eq.s32.totalorder %s20, 0
    %p173 = por %p171, %p172
    %s175 = sadd.s32 %s174, 1
    %p178 = scmp.eq.s32.totalorder %s14, 1
    %p179 = scmp.ne.s32.totalorder %s174, %s176
    %p180 = scmp.eq.s32.totalorder %s14, 0
    %p181 = por %p179, %p180
    %p182 = scmp.ne.s32.totalorder %s174, %s176
    %p183 = scmp.eq.s32.totalorder %s19, 1
    %p184 = por %p182, %p183
    %p185 = scmp.ne.s32.totalorder %s176, %s177
    %p186 = scmp.eq.s32.totalorder %s19, 0
    %p187 = por %p185, %p186
    %p188 = scmp.ne.s32.totalorder %s176, %s177
    %p189 = scmp.eq.s32.totalorder %s20, 1
    %p190 = por %p188, %p189
    %p192 = scmp.ne.s32.totalorder %s177, %s191
    %p193 = scmp.eq.s32.totalorder %s20, 0
    %p194 = por %p192, %p193
    %s195 = ssub.s32 %s14, %s21
    %p196 = scmp.eq.s32.totalorder %s195, 0
    %s198 = sadd.s32 %s197, 1
    %s199 = scalar_select %p196, %s197, %s198
    %p202 = pneg %p196
    %p203 = scmp.eq.s32.totalorder %s14, 1
    %p204 = por %p202, %p203
    %p205 = scmp.ne.s32.totalorder %s197, %s200
    %p206 = scmp.eq.s32.totalorder %s14, 0
    %p207 = por %p205, %p206
    %p208 = scmp.ne.s32.totalorder %s197, %s200
    %p209 = scmp.eq.s32.totalorder %s19, 1
    %p210 = por %p208, %p209
    %p211 = scmp.ne.s32.totalorder %s200, %s201
    %p212 = scmp.eq.s32.totalorder %s19, 0
    %p213 = por %p211, %p212
    %p214 = scmp.ne.s32.totalorder %s200, %s201
    %p215 = scmp.eq.s32.totalorder %s20, 1
    %p216 = por %p214, %p215
    %p218 = scmp.ne.s32.totalorder %s201, %s217
    %p219 = scmp.eq.s32.totalorder %s20, 0
    %p220 = por %p218, %p219
    %p221 = scmp.le.s32.totalorder 1, %s14
    %p222 = scmp.lt.s32.totalorder %s14, 3
    %p223 = pnand %p221, %p222
    %p224 = pneg %p223
    // Predicated region
    $region9: #{resblock_forward.1} parent=5 // pred_check
      _
    $region10: #{resblock_forward.1} parent=5 // pred_check_branch
      %226 = sbr.rel (%p223) target = $region12
    $region11: #{resblock_forward.1} parent=5 // pred_region
      %s227 = ssub.s32 %s14, 1
      // Predicated region
      $region13: #{resblock_forward.1} parent=11 // pred_check
        %p228 = pneg %p61
      $region14: #{resblock_forward.1} parent=11 // pred_check_branch
        %230 = sbr.rel (%p228) target = $region16
      $region15: #{resblock_forward.1} parent=11 // pred_region
        _
      $region16: #{resblock_forward.1} parent=11 // pred_fallthru
        _
      // Predicated region
      $region17: #{resblock_forward.1} parent=11 // pred_check
        %p231 = pneg %p82
      $region18: #{resblock_forward.1} parent=11 // pred_check_branch
        %233 = sbr.rel (%p231) target = $region20
      $region19: #{resblock_forward.1} parent=11 // pred_region
        _
      $region20: #{resblock_forward.1} parent=11 // pred_fallthru
        _
      // Predicated region
      $region21: #{resblock_forward.1} parent=11 // pred_check
        %p234 = pneg %p103
      $region22: #{resblock_forward.1} parent=11 // pred_check_branch
        %236 = sbr.rel (%p234) target = $region24
      $region23: #{resblock_forward.1} parent=11 // pred_region
        _
      $region24: #{resblock_forward.1} parent=11 // pred_fallthru
        _
      // Predicated region
      $region25: #{resblock_forward.1} parent=11 // pred_check
        %p237 = pneg %p124
      $region26: #{resblock_forward.1} parent=11 // pred_check_branch
        %239 = sbr.rel (%p237) target = $region28
      $region27: #{resblock_forward.1} parent=11 // pred_region
        _
      $region28: #{resblock_forward.1} parent=11 // pred_fallthru
        _
      // Predicated region
      $region29: #{resblock_forward.1} parent=11 // pred_check
        %p240 = pneg %p145
      $region30: #{resblock_forward.1} parent=11 // pred_check_branch
        %242 = sbr.rel (%p240) target = $region32
      $region31: #{resblock_forward.1} parent=11 // pred_region
        _
      $region32: #{resblock_forward.1} parent=11 // pred_fallthru
        _
      // Predicated region
      $region33: #{resblock_forward.1} parent=11 // pred_check
        %p243 = pneg %p166
      $region34: #{resblock_forward.1} parent=11 // pred_check_branch
        %245 = sbr.rel (%p243) target = $region36
      $region35: #{resblock_forward.1} parent=11 // pred_region
        _
      $region36: #{resblock_forward.1} parent=11 // pred_fallthru
        _
      // Predicated region
      $region37: #{resblock_forward.1} parent=11 // pred_check
        %p246 = pneg %p187
      $region38: #{resblock_forward.1} parent=11 // pred_check_branch
        %248 = sbr.rel (%p246) target = $region40
      $region39: #{resblock_forward.1} parent=11 // pred_region
        _
      $region40: #{resblock_forward.1} parent=11 // pred_fallthru
        _
    $region12: #{resblock_forward.1} parent=5 // pred_fallthru
      _
    %p249 = scmp.lt.s32.totalorder %s14, 2
    // Predicated region
    $region41: #{resblock_forward.1} parent=5 // pred_check
      %p250 = pneg %p249
    $region42: #{resblock_forward.1} parent=5 // pred_check_branch
      %252 = sbr.rel (%p250) target = $region44
    $region43: #{resblock_forward.1} parent=5 // pred_region
      // Predicated region
      $region45: #{resblock_forward.1} parent=43 // pred_check
        %p253 = pneg %p34
      $region46: #{resblock_forward.1} parent=43 // pred_check_branch
        %255 = sbr.rel (%p253) target = $region48
      $region47: #{resblock_forward.1} parent=43 // pred_region
        %p256 = scmp.lt.s32.totalorder %s14, 1
        %s257 = scalar_select %p256, %s14, 1
        %s258 = smul.addr %s257, 32
        %s259 = smul.addr %s258, 8
        %s260 = scalar_lea.vmem %s0, %s259
      $region48: #{resblock_forward.1} parent=43 // pred_fallthru
        _
    $region44: #{resblock_forward.1} parent=5 // pred_fallthru
      _
    %p261 = scmp.le.s32.totalorder 1, %s14
    %p262 = scmp.lt.s32.totalorder %s14, 3
    %p263 = pnand %p261, %p262
    %p264 = pneg %p263
    // Predicated region
    $region49: #{resblock_forward.1} parent=5 // pred_check
      _
    $region50: #{resblock_forward.1} parent=5 // pred_check_branch
      %266 = sbr.rel (%p263) target = $region52
    $region51: #{resblock_forward.1} parent=5 // pred_region
      %s267 = ssub.s32 %s14, 1
      %p268 = scmp.lt.s32.totalorder %s19, 1
      %s269 = scalar_select %p268, %s19, 1
      %s270 = smul.addr %s269, 32
      %s271 = smul.addr %s270, 8
      %s272 = scalar_lea.vmem %s0, %s271
      %p273 = pneg %p40
      %p274 = pneg %p37
      %p275 = pneg %p61
      %p276 = pneg %p58
      %p277 = pneg %p82
      %p278 = pneg %p79
      %p279 = pneg %p103
      %p280 = pneg %p100
      %p281 = pneg %p124
      %p282 = pneg %p121
      %p283 = pneg %p145
      %p284 = pneg %p142
      %p285 = pneg %p166
      %p286 = pneg %p163
      %p287 = pneg %p187
      %p288 = pneg %p184
      %p289 = pneg %p213
      %p290 = pneg %p210
      %p291 = scmp.lt.s32.totalorder %s19, 1
      %s292 = scalar_select %p291, %s19, 1
      %s293 = smul.addr %s292, 2
      %s294 = smul.addr %s293, 4
      %s295 = scalar_lea.vmem %s8, %s294
      %p296 = scmp.lt.s32.totalorder %s19, 1
      %s297 = scalar_select %p296, %s19, 1
      %s298 = smul.addr %s297, 32
      %s299 = smul.addr %s298, 8
      %s300 = scalar_lea.vmem %s0, %s299
      %p301 = scmp.lt.s32.totalorder %s19, 1
      %s302 = scalar_select %p301, %s19, 1
      %s303 = smul.addr %s302, 2
      %s304 = smul.addr %s303, 4
      %s305 = scalar_lea.vmem %s8, %s304
      %vm306 = vcmask 523264
      %307 = vst.msk [vmem:[#allocation2] sm:$0xff] %vm306, 0.0
      %308 = vst.msk [vmem:[#allocation2 + $0x8] sm:$0xff] %vm306, 0.0
      %vm309 = vcmask 517120
      %310 = vst.msk [vmem:[#allocation2 + $0x10] sm:$0x3] %vm309, 0.0
      %s311 = scalar_lea.vmem [#allocation2], 408
      %312 = vst.msk [vmem:[%s311] sm:$0xff] %vm306, 0.0
      %313 = vst.msk [vmem:[%s311 + $0x8] sm:$0xff] %vm306, 0.0
      %314 = vst.msk [vmem:[%s311 + $0x10] sm:$0x3] %vm309, 0.0
      %s315 = scalar_lea.vmem [#allocation2], 24
      %vm316 = vcmask 516096
      %317 = vst.msk [vmem:[%s315] sm:$0x1] %vm316, 0.0
      %318 = vst.msk [vmem:[%s315 + $0x18] sm:$0x1] %vm316, 0.0
      %319 = vst.msk [vmem:[%s315 + $0x30] sm:$0x1] %vm316, 0.0
      %320 = vst.msk [vmem:[%s315 + $0x48] sm:$0x1] %vm316, 0.0
      %321 = vst.msk [vmem:[%s315 + $0x60] sm:$0x1] %vm316, 0.0
      %322 = vst.msk [vmem:[%s315 + $0x78] sm:$0x1] %vm316, 0.0
      %323 = vst.msk [vmem:[%s315 + $0x90] sm:$0x1] %vm316, 0.0
      %324 = vst.msk [vmem:[%s315 + $0xa8] sm:$0x1] %vm316, 0.0
      %325 = vst.msk [vmem:[%s315 + $0xc0] sm:$0x1] %vm316, 0.0
      %326 = vst.msk [vmem:[%s315 + $0xd8] sm:$0x1] %vm316, 0.0
      %327 = vst.msk [vmem:[%s315 + $0xf0] sm:$0x1] %vm316, 0.0
      %328 = vst.msk [vmem:[%s315 + $0x108] sm:$0x1] %vm316, 0.0
      %329 = vst.msk [vmem:[%s315 + $0x120] sm:$0x1] %vm316, 0.0
      %330 = vst.msk [vmem:[%s315 + $0x138] sm:$0x1] %vm316, 0.0
      %331 = vst.msk [vmem:[%s315 + $0x150] sm:$0x1] %vm316, 0.0
      %332 = vst.msk [vmem:[%s315 + $0x168] sm:$0x1] %vm316, 0.0
      %333 = vst.msk [vmem:[%s315 + $0x11] sm:$0x1] %vm316, 0.0
      %334 = vst.msk [vmem:[%s315 + $0x29] sm:$0x1] %vm316, 0.0
      %335 = vst.msk [vmem:[%s315 + $0x41] sm:$0x1] %vm316, 0.0
      %336 = vst.msk [vmem:[%s315 + $0x59] sm:$0x1] %vm316, 0.0
      %337 = vst.msk [vmem:[%s315 + $0x71] sm:$0x1] %vm316, 0.0
      %338 = vst.msk [vmem:[%s315 + $0x89] sm:$0x1] %vm316, 0.0
      %339 = vst.msk [vmem:[%s315 + $0xa1] sm:$0x1] %vm316, 0.0
      %340 = vst.msk [vmem:[%s315 + $0xb9] sm:$0x1] %vm316, 0.0
      %341 = vst.msk [vmem:[%s315 + $0xd1] sm:$0x1] %vm316, 0.0
      %342 = vst.msk [vmem:[%s315 + $0xe9] sm:$0x1] %vm316, 0.0
      %343 = vst.msk [vmem:[%s315 + $0x101] sm:$0x1] %vm316, 0.0
      %344 = vst.msk [vmem:[%s315 + $0x119] sm:$0x1] %vm316, 0.0
      %345 = vst.msk [vmem:[%s315 + $0x131] sm:$0x1] %vm316, 0.0
      %346 = vst.msk [vmem:[%s315 + $0x149] sm:$0x1] %vm316, 0.0
      %347 = vst.msk [vmem:[%s315 + $0x161] sm:$0x1] %vm316, 0.0
      %348 = vst.msk [vmem:[%s315 + $0x179] sm:$0x1] %vm316, 0.0
      %v349 = vld [vmem:[%s300] sm:$0xff]
      %v350 = vld [vmem:[%s300 + $0x8] sm:$0xff]
      %v351 = vld [vmem:[%s300 + $0x10] sm:$0xff]
      %v352 = vld [vmem:[%s300 + $0x18] sm:$0xff]
      %v353 = vld [vmem:[%s300 + $0x20] sm:$0xff]
      %v354 = vld [vmem:[%s300 + $0x28] sm:$0xff]
      %v355 = vld [vmem:[%s300 + $0x30] sm:$0xff]
      %v356 = vld [vmem:[%s300 + $0x38] sm:$0xff]
      %v357 = vld [vmem:[%s300 + $0x40] sm:$0xff]
      %v358 = vld [vmem:[%s300 + $0x48] sm:$0xff]
      %v359 = vld [vmem:[%s300 + $0x50] sm:$0xff]
      %v360 = vld [vmem:[%s300 + $0x58] sm:$0xff]
      %v361 = vld [vmem:[%s300 + $0x60] sm:$0xff]
      %v362 = vld [vmem:[%s300 + $0x68] sm:$0xff]
      %v363 = vld [vmem:[%s300 + $0x70] sm:$0xff]
      %v364 = vld [vmem:[%s300 + $0x78] sm:$0xff]
      %v365 = vld [vmem:[%s300 + $0x80] sm:$0xff]
      %v366 = vld [vmem:[%s300 + $0x88] sm:$0xff]
      %v367 = vld [vmem:[%s300 + $0x90] sm:$0xff]
      %v368 = vld [vmem:[%s300 + $0x98] sm:$0xff]
      %v369 = vld [vmem:[%s300 + $0xa0] sm:$0xff]
      %v370 = vld [vmem:[%s300 + $0xa8] sm:$0xff]
      %v371 = vld [vmem:[%s300 + $0xb0] sm:$0xff]
      %v372 = vld [vmem:[%s300 + $0xb8] sm:$0xff]
      %v373 = vld [vmem:[%s300 + $0xc0] sm:$0xff]
      %v374 = vld [vmem:[%s300 + $0xc8] sm:$0xff]
      %v375 = vld [vmem:[%s300 + $0xd0] sm:$0xff]
      %v376 = vld [vmem:[%s300 + $0xd8] sm:$0xff]
      %v377 = vld [vmem:[%s300 + $0xe0] sm:$0xff]
      %v378 = vld [vmem:[%s300 + $0xe8] sm:$0xff]
      %v379 = vld [vmem:[%s300 + $0xf0] sm:$0xff]
      %v380 = vld [vmem:[%s300 + $0xf8] sm:$0xff]
      %v381 = vld [vmem:[%s1] sm:$0xff]
      %v382 = vld [vmem:[%s1 + $0x8] sm:$0xff]
      %v383 = vld [vmem:[%s1 + $0x10] sm:$0xff]
      %v384 = vld [vmem:[%s1 + $0x18] sm:$0xff]
      %v385 = vld [vmem:[%s1 + $0x20] sm:$0xf]
      %vm386 = vcmask 293888
      %v388 = vsel %vm386, %v349, 0
      %v391 = vsel %vm386, %v350, 0
      %v394 = vsel %vm386, %v351, 0
      %v397 = vsel %vm386, %v352, 0
      %v400 = vsel %vm386, %v353, 0
      %v403 = vsel %vm386, %v354, 0
      %v406 = vsel %vm386, %v355, 0
      %v409 = vsel %vm386, %v356, 0
      %v412 = vsel %vm386, %v357, 0
      %v415 = vsel %vm386, %v358, 0
      %v418 = vsel %vm386, %v359, 0
      %v421 = vsel %vm386, %v360, 0
      %v424 = vsel %vm386, %v361, 0
      %v427 = vsel %vm386, %v362, 0
      %v430 = vsel %vm386, %v363, 0
      %v433 = vsel %vm386, %v364, 0
      %v436 = vsel %vm386, %v365, 0
      %v439 = vsel %vm386, %v366, 0
      %v442 = vsel %vm386, %v367, 0
      %v445 = vsel %vm386, %v368, 0
      %v448 = vsel %vm386, %v369, 0
      %v451 = vsel %vm386, %v370, 0
      %v454 = vsel %vm386, %v371, 0
      %v457 = vsel %vm386, %v372, 0
      %v460 = vsel %vm386, %v373, 0
      %v463 = vsel %vm386, %v374, 0
      %v466 = vsel %vm386, %v375, 0
      %v469 = vsel %vm386, %v376, 0
      %v472 = vsel %vm386, %v377, 0
      %v475 = vsel %vm386, %v378, 0
      %v478 = vsel %vm386, %v379, 0
      %v481 = vsel %vm386, %v380, 0
      %vm483 = vcmask 1043456
      %v485 = vsel %vm483, %v385, 0
      %487 = vmatprep.subr.mxu0 0.0
      %488 = vmatpush1.msra.mxu0 %v381
      %489 = vmatprep.subr.mxu0 0.0
      %490 = vmatpush1.msra.mxu0 %v382
      %491 = vmatprep.subr.mxu0 0.0
      %492 = vmatpush1.msra.mxu0 %v383
      %493 = vmatprep.subr.mxu0 0.0
      %494 = vmatpush1.msra.mxu0 %v384
      %495 = vmatprep.subr.mxu0 0.0
      %496 = vmatpush1.msra.mxu0 %v485
      %497 = vmatprep.subr.mxu0 0.0
      %498 = vmatpush1.msra.mxu0 0.0
      %499 = vmatprep.subr.mxu0 0.0
      %500 = vmatpush1.msra.mxu0 0.0
      %501 = vmatprep.subr.mxu0 0.0
      %502 = vmatpush1.msra.mxu0 0.0
      %503 = vmatprep.subr.mxu0 0.0
      %504 = vmatpush1.msra.mxu0 0.0
      %505 = vmatprep.subr.mxu0 0.0
      %506 = vmatpush1.msra.mxu0 0.0
      %507 = vmatprep.subr.mxu0 0.0
      %508 = vmatpush1.msra.mxu0 0.0
      %509 = vmatprep.subr.mxu0 0.0
      %510 = vmatpush1.msra.mxu0 0.0
      %511 = vmatprep.subr.mxu0 0.0
      %512 = vmatpush1.msra.mxu0 0.0
      %513 = vmatprep.subr.mxu0 0.0
      %514 = vmatpush1.msra.mxu0 0.0
      %515 = vmatprep.subr.mxu0 0.0
      %516 = vmatpush1.msra.mxu0 0.0
      %517 = vmatprep.subr.mxu0 0.0
      %518 = vmatpush1.msra.mxu0 0.0
      %519 = vmatprep.subr.mxu0 0.0
      %520 = vmatpush1.msra.mxu0 0.0
      %521 = vmatprep.subr.mxu0 0.0
      %522 = vmatpush1.msra.mxu0 0.0
      %523 = vmatprep.subr.mxu0 0.0
      %524 = vmatpush1.msra.mxu0 0.0
      %525 = vmatprep.subr.mxu0 0.0
      %526 = vmatpush1.msra.mxu0 0.0
      %527 = vmatprep.subr.mxu0 0.0
      %528 = vmatpush1.msra.mxu0 0.0
      %529 = vmatprep.subr.mxu0 0.0
      %530 = vmatpush1.msra.mxu0 0.0
      %531 = vmatprep.subr.mxu0 0.0
      %532 = vmatpush1.msra.mxu0 0.0
      %533 = vmatprep.subr.mxu0 0.0
      %534 = vmatpush1.msra.mxu0 0.0
      %535 = vmatprep.subr.mxu0 0.0
      %536 = vmatpush1.msra.mxu0 0.0
      %537 = vmatprep.subr.mxu0 0.0
      %538 = vmatpush1.msra.mxu0 0.0
      %539 = vmatprep.subr.mxu0 0.0
      %540 = vmatpush1.msra.mxu0 0.0
      %541 = vmatprep.subr.mxu0 0.0
      %542 = vmatpush1.msra.mxu0 0.0
      %543 = vmatprep.subr.mxu0 0.0
      %544 = vmatpush1.msra.mxu0 0.0
      %545 = vmatprep.subr.mxu0 0.0
      %546 = vmatpush1.msra.mxu0 0.0
      %547 = vmatprep.subr.mxu0 0.0
      %548 = vmatpush1.msra.mxu0 0.0
      %549 = vmatprep.subr.mxu0 0.0
      %550 = vmatpush1.msra.mxu0 0.0
      %551 = vmatprep.mubr.f32.mxu0 0.0
      %552 = vmatmul.mubr.f32.gmra.mrb[0].mxu0 %v388
      %v553 = vpop.f32.mrb[0].mxu0
      %v554 = vadd.f32 0.0, %v553
      %v555 = vpop.f32.mrb[0].mxu0
      %556 = vmatprep.mubr.f32.mxu0 0.0
      %557 = vmatmul.mubr.f32.gmra.mrb[0].mxu0 %v391
      %v558 = vpop.f32.mrb[0].mxu0
      %v559 = vadd.f32 0.0, %v558
      %v560 = vpop.f32.mrb[0].mxu0
      %561 = vmatprep.mubr.f32.mxu0 0.0
      %562 = vmatmul.mubr.f32.gmra.mrb[0].mxu0 %v394
      %v563 = vpop.f32.mrb[0].mxu0
      %v564 = vadd.f32 0.0, %v563
      %v565 = vpop.f32.mrb[0].mxu0
      %566 = vmatprep.mubr.f32.mxu0 0.0
      %567 = vmatmul.mubr.f32.gmra.mrb[0].mxu0 %v397
      %v568 = vpop.f32.mrb[0].mxu0
      %v569 = vadd.f32 0.0, %v568
      %v570 = vpop.f32.mrb[0].mxu0
      %571 = vmatprep.mubr.f32.mxu0 0.0
      %572 = vmatmul.mubr.f32.gmra.mrb[0].mxu0 %v400
      %v573 = vpop.f32.mrb[0].mxu0
      %v574 = vadd.f32 0.0, %v573
      %v575 = vpop.f32.mrb[0].mxu0
      %576 = vmatprep.mubr.f32.mxu0 0.0
      %577 = vmatmul.mubr.f32.gmra.mrb[0].mxu0 %v403
      %v578 = vpop.f32.mrb[0].mxu0
      %v579 = vadd.f32 0.0, %v578
      %v580 = vpop.f32.mrb[0].mxu0
      %581 = vmatprep.mubr.f32.mxu0 0.0
      %582 = vmatmul.mubr.f32.gmra.mrb[0].mxu0 %v406
      %v583 = vpop.f32.mrb[0].mxu0
      %v584 = vadd.f32 0.0, %v583
      %v585 = vpop.f32.mrb[0].mxu0
      %586 = vmatprep.mubr.f32.mxu0 0.0
      %587 = vmatmul.mubr.f32.gmra.mrb[0].mxu0 %v409
      %v588 = vpop.f32.mrb[0].mxu0
      %v589 = vadd.f32 0.0, %v588
      %v590 = vpop.f32.mrb[0].mxu0
      %591 = vmatprep.mubr.f32.mxu0 0.0
      %592 = vmatmul.mubr.f32.gmra.mrb[0].mxu0 %v412
      %v593 = vpop.f32.mrb[0].mxu0
      %v594 = vadd.f32 0.0, %v593
      %v595 = vpop.f32.mrb[0].mxu0
      %596 = vmatprep.mubr.f32.mxu0 0.0
      %597 = vmatmul.mubr.f32.gmra.mrb[0].mxu0 %v415
      %v598 = vpop.f32.mrb[0].mxu0
      %v599 = vadd.f32 0.0, %v598
      %v600 = vpop.f32.mrb[0].mxu0
      %601 = vmatprep.mubr.f32.mxu0 0.0
      %602 = vmatmul.mubr.f32.gmra.mrb[0].mxu0 %v418
      %v603 = vpop.f32.mrb[0].mxu0
      %v604 = vadd.f32 0.0, %v603
      %v605 = vpop.f32.mrb[0].mxu0
      %606 = vmatprep.mubr.f32.mxu0 0.0
      %607 = vmatmul.mubr.f32.gmra.mrb[0].mxu0 %v421
      %v608 = vpop.f32.mrb[0].mxu0
      %v609 = vadd.f32 0.0, %v608
      %v610 = vpop.f32.mrb[0].mxu0
      %611 = vmatprep.mubr.f32.mxu0 0.0
      %612 = vmatmul.mubr.f32.gmra.mrb[0].mxu0 %v424
      %v613 = vpop.f32.mrb[0].mxu0
      %v614 = vadd.f32 0.0, %v613
      %v615 = vpop.f32.mrb[0].mxu0
      %616 = vmatprep.mubr.f32.mxu0 0.0
      %617 = vmatmul.mubr.f32.gmra.mrb[0].mxu0 %v427
      %v618 = vpop.f32.mrb[0].mxu0
      %v619 = vadd.f32 0.0, %v618
      %v620 = vpop.f32.mrb[0].mxu0
      %621 = vmatprep.mubr.f32.mxu0 0.0
      %622 = vmatmul.mubr.f32.gmra.mrb[0].mxu0 %v430
      %v623 = vpop.f32.mrb[0].mxu0
      %v624 = vadd.f32 0.0, %v623
      %v625 = vpop.f32.mrb[0].mxu0
      %626 = vmatprep.mubr.f32.mxu0 0.0
      %627 = vmatmul.mubr.f32.gmra.mrb[0].mxu0 %v433
      %v628 = vpop.f32.mrb[0].mxu0
      %v629 = vadd.f32 0.0, %v628
      %v630 = vpop.f32.mrb[0].mxu0
      %631 = vmatprep.mubr.f32.mxu0 0.0
      %632 = vmatmul.mubr.f32.gmra.mrb[0].mxu0 %v436
      %v633 = vpop.f32.mrb[0].mxu0
      %v634 = vadd.f32 0.0, %v633
      %v635 = vpop.f32.mrb[0].mxu0
      %636 = vmatprep.mubr.f32.mxu0 0.0
      %637 = vmatmul.mubr.f32.gmra.mrb[0].mxu0 %v439
      %v638 = vpop.f32.mrb[0].mxu0
      %v639 = vadd.f32 0.0, %v638
      %v640 = vpop.f32.mrb[0].mxu0
      %641 = vmatprep.mubr.f32.mxu0 0.0
      %642 = vmatmul.mubr.f32.gmra.mrb[0].mxu0 %v442
      %v643 = vpop.f32.mrb[0].mxu0
      %v644 = vadd.f32 0.0, %v643
      %v645 = vpop.f32.mrb[0].mxu0
      %646 = vmatprep.mubr.f32.mxu0 0.0
      %647 = vmatmul.mubr.f32.gmra.mrb[0].mxu0 %v445
      %v648 = vpop.f32.mrb[0].mxu0
      %v649 = vadd.f32 0.0, %v648
      %v650 = vpop.f32.mrb[0].mxu0
      %651 = vmatprep.mubr.f32.mxu0 0.0
      %652 = vmatmul.mubr.f32.gmra.mrb[0].mxu0 %v448
      %v653 = vpop.f32.mrb[0].mxu0
      %v654 = vadd.f32 0.0, %v653
      %v655 = vpop.f32.mrb[0].mxu0
      %656 = vmatprep.mubr.f32.mxu0 0.0
      %657 = vmatmul.mubr.f32.gmra.mrb[0].mxu0 %v451
      %v658 = vpop.f32.mrb[0].mxu0
      %v659 = vadd.f32 0.0, %v658
      %v660 = vpop.f32.mrb[0].mxu0
      %661 = vmatprep.mubr.f32.mxu0 0.0
      %662 = vmatmul.mubr.f32.gmra.mrb[0].mxu0 %v454
      %v663 = vpop.f32.mrb[0].mxu0
      %v664 = vadd.f32 0.0, %v663
      %v665 = vpop.f32.mrb[0].mxu0
      %666 = vmatprep.mubr.f32.mxu0 0.0
      %667 = vmatmul.mubr.f32.gmra.mrb[0].mxu0 %v457
      %v668 = vpop.f32.mrb[0].mxu0
      %v669 = vadd.f32 0.0, %v668
      %v670 = vpop.f32.mrb[0].mxu0
      %671 = vmatprep.mubr.f32.mxu0 0.0
      %672 = vmatmul.mubr.f32.gmra.mrb[0].mxu0 %v460
      %v673 = vpop.f32.mrb[0].mxu0
      %v674 = vadd.f32 0.0, %v673
      %v675 = vpop.f32.mrb[0].mxu0
      %676 = vmatprep.mubr.f32.mxu0 0.0
      %677 = vmatmul.mubr.f32.gmra.mrb[0].mxu0 %v463
      %v678 = vpop.f32.mrb[0].mxu0
      %v679 = vadd.f32 0.0, %v678
      %v680 = vpop.f32.mrb[0].mxu0
      %681 = vmatprep.mubr.f32.mxu0 0.0
      %682 = vmatmul.mubr.f32.gmra.mrb[0].mxu0 %v466
      %v683 = vpop.f32.mrb[0].mxu0
      %v684 = vadd.f32 0.0, %v683
      %v685 = vpop.f32.mrb[0].mxu0
      %686 = vmatprep.mubr.f32.mxu0 0.0
      %687 = vmatmul.mubr.f32.gmra.mrb[0].mxu0 %v469
      %v688 = vpop.f32.mrb[0].mxu0
      %v689 = vadd.f32 0.0, %v688
      %v690 = vpop.f32.mrb[0].mxu0
      %691 = vmatprep.mubr.f32.mxu0 0.0
      %692 = vmatmul.mubr.f32.gmra.mrb[0].mxu0 %v472
      %v693 = vpop.f32.mrb[0].mxu0
      %v694 = vadd.f32 0.0, %v693
      %v695 = vpop.f32.mrb[0].mxu0
      %696 = vmatprep.mubr.f32.mxu0 0.0
      %697 = vmatmul.mubr.f32.gmra.mrb[0].mxu0 %v475
      %v698 = vpop.f32.mrb[0].mxu0
      %v699 = vadd.f32 0.0, %v698
      %v700 = vpop.f32.mrb[0].mxu0
      %701 = vmatprep.mubr.f32.mxu0 0.0
      %702 = vmatmul.mubr.f32.gmra.mrb[0].mxu0 %v478
      %v703 = vpop.f32.mrb[0].mxu0
      %v704 = vadd.f32 0.0, %v703
      %v705 = vpop.f32.mrb[0].mxu0
      %706 = vmatprep.mubr.f32.mxu0 0.0
      %707 = vmatmul.mubr.f32.gmra.mrb[0].mxu0 %v481
      %v708 = vpop.f32.mrb[0].mxu0
      %v709 = vadd.f32 0.0, %v708
      %v710 = vpop.f32.mrb[0].mxu0
      %711 = vdwg.mxu0
      %v712 = vld [vmem:[%s2] sm:$0x1]
      %v714 = vlaneseq
      %v715 = vshrl.u32 %v714, 7
      %v716 = vsub.s32 0, %v715
      %v717 = vrot.slane %v712, %v716
      %v719 = vadd.f32 %v554, %v717
      %v720 = vadd.f32 %v559, %v717
      %v721 = vadd.f32 %v564, %v717
      %v722 = vadd.f32 %v569, %v717
      %v723 = vadd.f32 %v574, %v717
      %v724 = vadd.f32 %v579, %v717
      %v725 = vadd.f32 %v584, %v717
      %v726 = vadd.f32 %v589, %v717
      %v727 = vadd.f32 %v594, %v717
      %v728 = vadd.f32 %v599, %v717
      %v729 = vadd.f32 %v604, %v717
      %v730 = vadd.f32 %v609, %v717
      %v731 = vadd.f32 %v614, %v717
      %v732 = vadd.f32 %v619, %v717
      %v733 = vadd.f32 %v624, %v717
      %v734 = vadd.f32 %v629, %v717
      %v735 = vadd.f32 %v634, %v717
      %v736 = vadd.f32 %v639, %v717
      %v737 = vadd.f32 %v644, %v717
      %v738 = vadd.f32 %v649, %v717
      %v739 = vadd.f32 %v654, %v717
      %v740 = vadd.f32 %v659, %v717
      %v741 = vadd.f32 %v664, %v717
      %v742 = vadd.f32 %v669, %v717
      %v743 = vadd.f32 %v674, %v717
      %v744 = vadd.f32 %v679, %v717
      %v745 = vadd.f32 %v684, %v717
      %v746 = vadd.f32 %v689, %v717
      %v747 = vadd.f32 %v694, %v717
      %v748 = vadd.f32 %v699, %v717
      %v749 = vadd.f32 %v704, %v717
      %v750 = vadd.f32 %v709, %v717
      %vm751 = vcmp.gt.f32.partialorder %v719, 0.0
      %vm752 = vcmp.gt.f32.partialorder %v720, 0.0
      %vm753 = vcmp.gt.f32.partialorder %v721, 0.0
      %vm754 = vcmp.gt.f32.partialorder %v722, 0.0
      %vm755 = vcmp.gt.f32.partialorder %v723, 0.0
      %vm756 = vcmp.gt.f32.partialorder %v724, 0.0
      %vm757 = vcmp.gt.f32.partialorder %v725, 0.0
      %vm758 = vcmp.gt.f32.partialorder %v726, 0.0
      %vm759 = vcmp.gt.f32.partialorder %v727, 0.0
      %vm760 = vcmp.gt.f32.partialorder %v728, 0.0
      %vm761 = vcmp.gt.f32.partialorder %v729, 0.0
      %vm762 = vcmp.gt.f32.partialorder %v730, 0.0
      %vm763 = vcmp.gt.f32.partialorder %v731, 0.0
      %vm764 = vcmp.gt.f32.partialorder %v732, 0.0
      %vm765 = vcmp.gt.f32.partialorder %v733, 0.0
      %vm766 = vcmp.gt.f32.partialorder %v734, 0.0
      %vm767 = vcmp.gt.f32.partialorder %v735, 0.0
      %vm768 = vcmp.gt.f32.partialorder %v736, 0.0
      %vm769 = vcmp.gt.f32.partialorder %v737, 0.0
      %vm770 = vcmp.gt.f32.partialorder %v738, 0.0
      %vm771 = vcmp.gt.f32.partialorder %v739, 0.0
      %vm772 = vcmp.gt.f32.partialorder %v740, 0.0
      %vm773 = vcmp.gt.f32.partialorder %v741, 0.0
      %vm774 = vcmp.gt.f32.partialorder %v742, 0.0
      %vm775 = vcmp.gt.f32.partialorder %v743, 0.0
      %vm776 = vcmp.gt.f32.partialorder %v744, 0.0
      %vm777 = vcmp.gt.f32.partialorder %v745, 0.0
      %vm778 = vcmp.gt.f32.partialorder %v746, 0.0
      %vm779 = vcmp.gt.f32.partialorder %v747, 0.0
      %vm780 = vcmp.gt.f32.partialorder %v748, 0.0
      %vm781 = vcmp.gt.f32.partialorder %v749, 0.0
      %vm782 = vcmp.gt.f32.partialorder %v750, 0.0
      %v783 = vmul.f32 %v719, 0.2
      %v784 = vmul.f32 %v720, 0.2
      %v785 = vmul.f32 %v721, 0.2
      %v786 = vmul.f32 %v722, 0.2
      %v787 = vmul.f32 %v723, 0.2
      %v788 = vmul.f32 %v724, 0.2
      %v789 = vmul.f32 %v725, 0.2
      %v790 = vmul.f32 %v726, 0.2
      %v791 = vmul.f32 %v727, 0.2
      %v792 = vmul.f32 %v728, 0.2
      %v793 = vmul.f32 %v729, 0.2
      %v794 = vmul.f32 %v730, 0.2
      %v795 = vmul.f32 %v731, 0.2
      %v796 = vmul.f32 %v732, 0.2
      %v797 = vmul.f32 %v733, 0.2
      %v798 = vmul.f32 %v734, 0.2
      %v799 = vmul.f32 %v735, 0.2
      %v800 = vmul.f32 %v736, 0.2
      %v801 = vmul.f32 %v737, 0.2
      %v802 = vmul.f32 %v738, 0.2
      %v803 = vmul.f32 %v739, 0.2
      %v804 = vmul.f32 %v740, 0.2
      %v805 = vmul.f32 %v741, 0.2
      %v806 = vmul.f32 %v742, 0.2
      %v807 = vmul.f32 %v743, 0.2
      %v808 = vmul.f32 %v744, 0.2
      %v809 = vmul.f32 %v745, 0.2
      %v810 = vmul.f32 %v746, 0.2
      %v811 = vmul.f32 %v747, 0.2
      %v812 = vmul.f32 %v748, 0.2
      %v813 = vmul.f32 %v749, 0.2
      %v814 = vmul.f32 %v750, 0.2
      %v815 = vsel %vm751, %v719, %v783
      %v816 = vsel %vm752, %v720, %v784
      %v817 = vsel %vm753, %v721, %v785
      %v818 = vsel %vm754, %v722, %v786
      %v819 = vsel %vm755, %v723, %v787
      %v820 = vsel %vm756, %v724, %v788
      %v821 = vsel %vm757, %v725, %v789
      %v822 = vsel %vm758, %v726, %v790
      %v823 = vsel %vm759, %v727, %v791
      %v824 = vsel %vm760, %v728, %v792
      %v825 = vsel %vm761, %v729, %v793
      %v826 = vsel %vm762, %v730, %v794
      %v827 = vsel %vm763, %v731, %v795
      %v828 = vsel %vm764, %v732, %v796
      %v829 = vsel %vm765, %v733, %v797
      %v830 = vsel %vm766, %v734, %v798
      %v831 = vsel %vm767, %v735, %v799
      %v832 = vsel %vm768, %v736, %v800
      %v833 = vsel %vm769, %v737, %v801
      %v834 = vsel %vm770, %v738, %v802
      %v835 = vsel %vm771, %v739, %v803
      %v836 = vsel %vm772, %v740, %v804
      %v837 = vsel %vm773, %v741, %v805
      %v838 = vsel %vm774, %v742, %v806
      %v839 = vsel %vm775, %v743, %v807
      %v840 = vsel %vm776, %v744, %v808
      %v841 = vsel %vm777, %v745, %v809
      %v842 = vsel %vm778, %v746, %v810
      %v843 = vsel %vm779, %v747, %v811
      %v844 = vsel %vm780, %v748, %v812
      %v845 = vsel %vm781, %v749, %v813
      %v846 = vsel %vm782, %v750, %v814
      %879 = vrot.lane.b32.xlu0 %v554, 64
      %v880 = vpop.permute.xlu0 %879
      %881 = vrot.lane.b32.xlu0 %v559, 64
      %v882 = vpop.permute.xlu0 %881
      %883 = vrot.lane.b32.xlu0 %v564, 64
      %v884 = vpop.permute.xlu0 %883
      %885 = vrot.lane.b32.xlu0 %v569, 64
      %v886 = vpop.permute.xlu0 %885
      %887 = vrot.lane.b32.xlu0 %v574, 64
      %v888 = vpop.permute.xlu0 %887
      %889 = vrot.lane.b32.xlu0 %v579, 64
      %v890 = vpop.permute.xlu0 %889
      %891 = vrot.lane.b32.xlu0 %v584, 64
      %v892 = vpop.permute.xlu0 %891
      %893 = vrot.lane.b32.xlu0 %v589, 64
      %v894 = vpop.permute.xlu0 %893
      %895 = vrot.lane.b32.xlu0 %v594, 64
      %v896 = vpop.permute.xlu0 %895
      %897 = vrot.lane.b32.xlu0 %v599, 64
      %v898 = vpop.permute.xlu0 %897
      %899 = vrot.lane.b32.xlu0 %v604, 64
      %v900 = vpop.permute.xlu0 %899
      %901 = vrot.lane.b32.xlu0 %v609, 64
      %v902 = vpop.permute.xlu0 %901
      %903 = vrot.lane.b32.xlu0 %v614, 64
      %v904 = vpop.permute.xlu0 %903
      %905 = vrot.lane.b32.xlu0 %v619, 64
      %v906 = vpop.permute.xlu0 %905
      %907 = vrot.lane.b32.xlu0 %v624, 64
      %v908 = vpop.permute.xlu0 %907
      %909 = vrot.lane.b32.xlu0 %v629, 64
      %v910 = vpop.permute.xlu0 %909
      %911 = vrot.lane.b32.xlu0 %v634, 64
      %v912 = vpop.permute.xlu0 %911
      %913 = vrot.lane.b32.xlu0 %v639, 64
      %v914 = vpop.permute.xlu0 %913
      %915 = vrot.lane.b32.xlu0 %v644, 64
      %v916 = vpop.permute.xlu0 %915
      %917 = vrot.lane.b32.xlu0 %v649, 64
      %v918 = vpop.permute.xlu0 %917
      %919 = vrot.lane.b32.xlu0 %v654, 64
      %v920 = vpop.permute.xlu0 %919
      %921 = vrot.lane.b32.xlu0 %v659, 64
      %v922 = vpop.permute.xlu0 %921
      %923 = vrot.lane.b32.xlu0 %v664, 64
      %v924 = vpop.permute.xlu0 %923
      %925 = vrot.lane.b32.xlu0 %v669, 64
      %v926 = vpop.permute.xlu0 %925
      %927 = vrot.lane.b32.xlu0 %v674, 64
      %v928 = vpop.permute.xlu0 %927
      %929 = vrot.lane.b32.xlu0 %v679, 64
      %v930 = vpop.permute.xlu0 %929
      %931 = vrot.lane.b32.xlu0 %v684, 64
      %v932 = vpop.permute.xlu0 %931
      %933 = vrot.lane.b32.xlu0 %v689, 64
      %v934 = vpop.permute.xlu0 %933
      %935 = vrot.lane.b32.xlu0 %v694, 64
      %v936 = vpop.permute.xlu0 %935
      %937 = vrot.lane.b32.xlu0 %v699, 64
      %v938 = vpop.permute.xlu0 %937
      %939 = vrot.lane.b32.xlu0 %v704, 64
      %v940 = vpop.permute.xlu0 %939
      %941 = vrot.lane.b32.xlu0 %v709, 64
      %v942 = vpop.permute.xlu0 %941
      %975 = vxpose.xlu0.b32.start [1/16] %v880, 128
      %976 = vxpose.xlu0.b32.cont [2/16] %v882, 128
      %977 = vxpose.xlu0.b32.cont [3/16] %v884, 128
      %978 = vxpose.xlu0.b32.cont [4/16] %v886, 128
      %979 = vxpose.xlu0.b32.cont [5/16] %v888, 128
      %980 = vxpose.xlu0.b32.cont [6/16] %v890, 128
      %981 = vxpose.xlu0.b32.cont [7/16] %v892, 128
      %982 = vxpose.xlu0.b32.cont [8/16] %v894, 128
      %983 = vxpose.xlu0.b32.cont [9/16] %v896, 128
      %984 = vxpose.xlu0.b32.cont [10/16] %v898, 128
      %985 = vxpose.xlu0.b32.cont [11/16] %v900, 128
      %986 = vxpose.xlu0.b32.cont [12/16] %v902, 128
      %987 = vxpose.xlu0.b32.cont [13/16] %v904, 128
      %988 = vxpose.xlu0.b32.cont [14/16] %v906, 128
      %989 = vxpose.xlu0.b32.cont [15/16] %v908, 128
      %990 = vxpose.xlu0.b32.end [16/16] %v910, 128
      %v991 = vpop.trf.xlu0
      %v992 = vpop.trf.xlu0
      %v993 = vpop.trf.xlu0
      %v994 = vpop.trf.xlu0
      %v995 = vpop.trf.xlu0
      %v996 = vpop.trf.xlu0
      %v997 = vpop.trf.xlu0
      %v998 = vpop.trf.xlu0
      %v999 = vpop.trf.xlu0
      %v1000 = vpop.trf.xlu0
      %v1001 = vpop.trf.xlu0
      %v1002 = vpop.trf.xlu0
      %v1003 = vpop.trf.xlu0
      %v1004 = vpop.trf.xlu0
      %v1005 = vpop.trf.xlu0
      %v1006 = vpop.trf.xlu0
      %1007 = vxpose.xlu0.b32.start [1/16] %v912, 128
      %1008 = vxpose.xlu0.b32.cont [2/16] %v914, 128
      %1009 = vxpose.xlu0.b32.cont [3/16] %v916, 128
      %1010 = vxpose.xlu0.b32.cont [4/16] %v918, 128
      %1011 = vxpose.xlu0.b32.cont [5/16] %v920, 128
      %1012 = vxpose.xlu0.b32.cont [6/16] %v922, 128
      %1013 = vxpose.xlu0.b32.cont [7/16] %v924, 128
      %1014 = vxpose.xlu0.b32.cont [8/16] %v926, 128
      %1015 = vxpose.xlu0.b32.cont [9/16] %v928, 128
      %1016 = vxpose.xlu0.b32.cont [10/16] %v930, 128
      %1017 = vxpose.xlu0.b32.cont [11/16] %v932, 128
      %1018 = vxpose.xlu0.b32.cont [12/16] %v934, 128
      %1019 = vxpose.xlu0.b32.cont [13/16] %v936, 128
      %1020 = vxpose.xlu0.b32.cont [14/16] %v938, 128
      %1021 = vxpose.xlu0.b32.cont [15/16] %v940, 128
      %1022 = vxpose.xlu0.b32.end [16/16] %v942, 128
      %v1023 = vpop.trf.xlu0
      %v1024 = vpop.trf.xlu0
      %v1025 = vpop.trf.xlu0
      %v1026 = vpop.trf.xlu0
      %v1027 = vpop.trf.xlu0
      %v1028 = vpop.trf.xlu0
      %v1029 = vpop.trf.xlu0
      %v1030 = vpop.trf.xlu0
      %v1031 = vpop.trf.xlu0
      %v1032 = vpop.trf.xlu0
      %v1033 = vpop.trf.xlu0
      %v1034 = vpop.trf.xlu0
      %v1035 = vpop.trf.xlu0
      %v1036 = vpop.trf.xlu0
      %v1037 = vpop.trf.xlu0
      %v1038 = vpop.trf.xlu0
      %v1041 = vcombine.low %v991, %v1023
      %1043 = vst [vmem:[%s305] sm:$0xff] %v1041
      %1044 = vst.msk [vmem:[%s315 + $0x1] sm:$0xff] %vm306, %v815
      %1045 = vst.msk [vmem:[%s315 + $0x9] sm:$0xff] %vm306, %v816
      %1046 = vst.msk [vmem:[%s315 + $0x19] sm:$0xff] %vm306, %v817
      %1047 = vst.msk [vmem:[%s315 + $0x21] sm:$0xff] %vm306, %v818
      %1048 = vst.msk [vmem:[%s315 + $0x31] sm:$0xff] %vm306, %v819
      %1049 = vst.msk [vmem:[%s315 + $0x39] sm:$0xff] %vm306, %v820
      %1050 = vst.msk [vmem:[%s315 + $0x49] sm:$0xff] %vm306, %v821
      %1051 = vst.msk [vmem:[%s315 + $0x51] sm:$0xff] %vm306, %v822
      %1052 = vst.msk [vmem:[%s315 + $0x61] sm:$0xff] %vm306, %v823
      %1053 = vst.msk [vmem:[%s315 + $0x69] sm:$0xff] %vm306, %v824
      %1054 = vst.msk [vmem:[%s315 + $0x79] sm:$0xff] %vm306, %v825
      %1055 = vst.msk [vmem:[%s315 + $0x81] sm:$0xff] %vm306, %v826
      %1056 = vst.msk [vmem:[%s315 + $0x91] sm:$0xff] %vm306, %v827
      %1057 = vst.msk [vmem:[%s315 + $0x99] sm:$0xff] %vm306, %v828
      %1058 = vst.msk [vmem:[%s315 + $0xa9] sm:$0xff] %vm306, %v829
      %1059 = vst.msk [vmem:[%s315 + $0xb1] sm:$0xff] %vm306, %v830
      %1060 = vst.msk [vmem:[%s315 + $0xc1] sm:$0xff] %vm306, %v831
      %1061 = vst.msk [vmem:[%s315 + $0xc9] sm:$0xff] %vm306, %v832
      %1062 = vst.msk [vmem:[%s315 + $0xd9] sm:$0xff] %vm306, %v833
      %1063 = vst.msk [vmem:[%s315 + $0xe1] sm:$0xff] %vm306, %v834
      %1064 = vst.msk [vmem:[%s315 + $0xf1] sm:$0xff] %vm306, %v835
      %1065 = vst.msk [vmem:[%s315 + $0xf9] sm:$0xff] %vm306, %v836
      %1066 = vst.msk [vmem:[%s315 + $0x109] sm:$0xff] %vm306, %v837
      %1067 = vst.msk [vmem:[%s315 + $0x111] sm:$0xff] %vm306, %v838
      %1068 = vst.msk [vmem:[%s315 + $0x121] sm:$0xff] %vm306, %v839
      %1069 = vst.msk [vmem:[%s315 + $0x129] sm:$0xff] %vm306, %v840
      %1070 = vst.msk [vmem:[%s315 + $0x139] sm:$0xff] %vm306, %v841
      %1071 = vst.msk [vmem:[%s315 + $0x141] sm:$0xff] %vm306, %v842
      %1072 = vst.msk [vmem:[%s315 + $0x151] sm:$0xff] %vm306, %v843
      %1073 = vst.msk [vmem:[%s315 + $0x159] sm:$0xff] %vm306, %v844
      %1074 = vst.msk [vmem:[%s315 + $0x169] sm:$0xff] %vm306, %v845
      %1075 = vst.msk [vmem:[%s315 + $0x171] sm:$0xff] %vm306, %v846
      %v1076 = vld [vmem:[#allocation2] sm:$0xff]
      %v1077 = vld [vmem:[#allocation2 + $0x8] sm:$0xff]
      %v1078 = vld [vmem:[#allocation2 + $0x18] sm:$0xff]
      %v1079 = vld [vmem:[#allocation2 + $0x20] sm:$0xff]
      %v1080 = vld [vmem:[#allocation2 + $0x30] sm:$0xff]
      %v1081 = vld [vmem:[#allocation2 + $0x38] sm:$0xff]
      %v1082 = vld [vmem:[#allocation2 + $0x48] sm:$0xff]
      %v1083 = vld [vmem:[#allocation2 + $0x50] sm:$0xff]
      %v1084 = vld [vmem:[#allocation2 + $0x60] sm:$0xff]
      %v1085 = vld [vmem:[#allocation2 + $0x68] sm:$0xff]
      %v1086 = vld [vmem:[#allocation2 + $0x78] sm:$0xff]
      %v1087 = vld [vmem:[#allocation2 + $0x80] sm:$0xff]
      %v1088 = vld [vmem:[#allocation2 + $0x90] sm:$0xff]
      %v1089 = vld [vmem:[#allocation2 + $0x98] sm:$0xff]
      %v1090 = vld [vmem:[#allocation2 + $0xa8] sm:$0xff]
      %v1091 = vld [vmem:[#allocation2 + $0xb0] sm:$0xff]
      %v1092 = vld [vmem:[#allocation2 + $0xc0] sm:$0xff]
      %v1093 = vld [vmem:[#allocation2 + $0xc8] sm:$0xff]
      %v1094 = vld [vmem:[#allocation2 + $0xd8] sm:$0xff]
      %v1095 = vld [vmem:[#allocation2 + $0xe0] sm:$0xff]
      %v1096 = vld [vmem:[#allocation2 + $0xf0] sm:$0xff]
      %v1097 = vld [vmem:[#allocation2 + $0xf8] sm:$0xff]
      %v1098 = vld [vmem:[#allocation2 + $0x108] sm:$0xff]
      %v1099 = vld [vmem:[#allocation2 + $0x110] sm:$0xff]
      %v1100 = vld [vmem:[#allocation2 + $0x120] sm:$0xff]
      %v1101 = vld [vmem:[#allocation2 + $0x128] sm:$0xff]
      %v1102 = vld [vmem:[#allocation2 + $0x138] sm:$0xff]
      %v1103 = vld [vmem:[#allocation2 + $0x140] sm:$0xff]
      %v1104 = vld [vmem:[#allocation2 + $0x150] sm:$0xff]
      %v1105 = vld [vmem:[#allocation2 + $0x158] sm:$0xff]
      %v1106 = vld [vmem:[#allocation2 + $0x168] sm:$0xff]
      %v1107 = vld [vmem:[#allocation2 + $0x170] sm:$0xff]
      %v1108 = vld [vmem:[#allocation2 + $0x1] sm:$0xff]
      %v1109 = vld [vmem:[#allocation2 + $0x9] sm:$0xff]
      %v1110 = vld [vmem:[#allocation2 + $0x19] sm:$0xff]
      %v1111 = vld [vmem:[#allocation2 + $0x21] sm:$0xff]
      %v1112 = vld [vmem:[#allocation2 + $0x31] sm:$0xff]
      %v1113 = vld [vmem:[#allocation2 + $0x39] sm:$0xff]
      %v1114 = vld [vmem:[#allocation2 + $0x49] sm:$0xff]
      %v1115 = vld [vmem:[#allocation2 + $0x51] sm:$0xff]
      %v1116 = vld [vmem:[#allocation2 + $0x61] sm:$0xff]
      %v1117 = vld [vmem:[#allocation2 + $0x69] sm:$0xff]
      %v1118 = vld [vmem:[#allocation2 + $0x79] sm:$0xff]
      %v1119 = vld [vmem:[#allocation2 + $0x81] sm:$0xff]
      %v1120 = vld [vmem:[#allocation2 + $0x91] sm:$0xff]
      %v1121 = vld [vmem:[#allocation2 + $0x99] sm:$0xff]
      %v1122 = vld [vmem:[#allocation2 + $0xa9] sm:$0xff]
      %v1123 = vld [vmem:[#allocation2 + $0xb1] sm:$0xff]
      %v1124 = vld [vmem:[#allocation2 + $0xc1] sm:$0xff]
      %v1125 = vld [vmem:[#allocation2 + $0xc9] sm:$0xff]
      %v1126 = vld [vmem:[#allocation2 + $0xd9] sm:$0xff]
      %v1127 = vld [vmem:[#allocation2 + $0xe1] sm:$0xff]
      %v1128 = vld [vmem:[#allocation2 + $0xf1] sm:$0xff]
      %v1129 = vld [vmem:[#allocation2 + $0xf9] sm:$0xff]
      %v1130 = vld [vmem:[#allocation2 + $0x109] sm:$0xff]
      %v1131 = vld [vmem:[#allocation2 + $0x111] sm:$0xff]
      %v1132 = vld [vmem:[#allocation2 + $0x121] sm:$0xff]
      %v1133 = vld [vmem:[#allocation2 + $0x129] sm:$0xff]
      %v1134 = vld [vmem:[#allocation2 + $0x139] sm:$0xff]
      %v1135 = vld [vmem:[#allocation2 + $0x141] sm:$0xff]
      %v1136 = vld [vmem:[#allocation2 + $0x151] sm:$0xff]
      %v1137 = vld [vmem:[#allocation2 + $0x159] sm:$0xff]
      %v1138 = vld [vmem:[#allocation2 + $0x169] sm:$0xff]
      %v1139 = vld [vmem:[#allocation2 + $0x171] sm:$0xff]
      %1172 = vrot.lane.b32.xlu0 %v1108, 64
      %v1173 = vpop.permute.xlu0 %1172
      %1174 = vrot.lane.b32.xlu0 %v1109, 64
      %v1175 = vpop.permute.xlu0 %1174
      %1176 = vrot.lane.b32.xlu0 %v1110, 64
      %v1177 = vpop.permute.xlu0 %1176
      %1178 = vrot.lane.b32.xlu0 %v1111, 64
      %v1179 = vpop.permute.xlu0 %1178
      %1180 = vrot.lane.b32.xlu0 %v1112, 64
      %v1181 = vpop.permute.xlu0 %1180
      %1182 = vrot.lane.b32.xlu0 %v1113, 64
      %v1183 = vpop.permute.xlu0 %1182
      %1184 = vrot.lane.b32.xlu0 %v1114, 64
      %v1185 = vpop.permute.xlu0 %1184
      %1186 = vrot.lane.b32.xlu0 %v1115, 64
      %v1187 = vpop.permute.xlu0 %1186
      %1188 = vrot.lane.b32.xlu0 %v1116, 64
      %v1189 = vpop.permute.xlu0 %1188
      %1190 = vrot.lane.b32.xlu0 %v1117, 64
      %v1191 = vpop.permute.xlu0 %1190
      %1192 = vrot.lane.b32.xlu0 %v1118, 64
      %v1193 = vpop.permute.xlu0 %1192
      %1194 = vrot.lane.b32.xlu0 %v1119, 64
      %v1195 = vpop.permute.xlu0 %1194
      %1196 = vrot.lane.b32.xlu0 %v1120, 64
      %v1197 = vpop.permute.xlu0 %1196
      %1198 = vrot.lane.b32.xlu0 %v1121, 64
      %v1199 = vpop.permute.xlu0 %1198
      %1200 = vrot.lane.b32.xlu0 %v1122, 64
      %v1201 = vpop.permute.xlu0 %1200
      %1202 = vrot.lane.b32.xlu0 %v1123, 64
      %v1203 = vpop.permute.xlu0 %1202
      %1204 = vrot.lane.b32.xlu0 %v1124, 64
      %v1205 = vpop.permute.xlu0 %1204
      %1206 = vrot.lane.b32.xlu0 %v1125, 64
      %v1207 = vpop.permute.xlu0 %1206
      %1208 = vrot.lane.b32.xlu0 %v1126, 64
      %v1209 = vpop.permute.xlu0 %1208
      %1210 = vrot.lane.b32.xlu0 %v1127, 64
      %v1211 = vpop.permute.xlu0 %1210
      %1212 = vrot.lane.b32.xlu0 %v1128, 64
      %v1213 = vpop.permute.xlu0 %1212
      %1214 = vrot.lane.b32.xlu0 %v1129, 64
      %v1215 = vpop.permute.xlu0 %1214
      %1216 = vrot.lane.b32.xlu0 %v1130, 64
      %v1217 = vpop.permute.xlu0 %1216
      %1218 = vrot.lane.b32.xlu0 %v1131, 64
      %v1219 = vpop.permute.xlu0 %1218
      %1220 = vrot.lane.b32.xlu0 %v1132, 64
      %v1221 = vpop.permute.xlu0 %1220
      %1222 = vrot.lane.b32.xlu0 %v1133, 64
      %v1223 = vpop.permute.xlu0 %1222
      %1224 = vrot.lane.b32.xlu0 %v1134, 64
      %v1225 = vpop.permute.xlu0 %1224
      %1226 = vrot.lane.b32.xlu0 %v1135, 64
      %v1227 = vpop.permute.xlu0 %1226
      %1228 = vrot.lane.b32.xlu0 %v1136, 64
      %v1229 = vpop.permute.xlu0 %1228
      %1230 = vrot.lane.b32.xlu0 %v1137, 64
      %v1231 = vpop.permute.xlu0 %1230
      %1232 = vrot.lane.b32.xlu0 %v1138, 64
      %v1233 = vpop.permute.xlu0 %1232
      %1234 = vrot.lane.b32.xlu0 %v1139, 64
      %v1235 = vpop.permute.xlu0 %1234
      %v1268 = vsel %vm306, %v1076, %v1173
      %v1269 = vsel %vm306, %v1077, %v1175
      %v1270 = vsel %vm306, %v1078, %v1177
      %v1271 = vsel %vm306, %v1079, %v1179
      %v1272 = vsel %vm306, %v1080, %v1181
      %v1273 = vsel %vm306, %v1081, %v1183
      %v1274 = vsel %vm306, %v1082, %v1185
      %v1275 = vsel %vm306, %v1083, %v1187
      %v1276 = vsel %vm306, %v1084, %v1189
      %v1277 = vsel %vm306, %v1085, %v1191
      %v1278 = vsel %vm306, %v1086, %v1193
      %v1279 = vsel %vm306, %v1087, %v1195
      %v1280 = vsel %vm306, %v1088, %v1197
      %v1281 = vsel %vm306, %v1089, %v1199
      %v1282 = vsel %vm306, %v1090, %v1201
      %v1283 = vsel %vm306, %v1091, %v1203
      %v1284 = vsel %vm306, %v1092, %v1205
      %v1285 = vsel %vm306, %v1093, %v1207
      %v1286 = vsel %vm306, %v1094, %v1209
      %v1287 = vsel %vm306, %v1095, %v1211
      %v1288 = vsel %vm306, %v1096, %v1213
      %v1289 = vsel %vm306, %v1097, %v1215
      %v1290 = vsel %vm306, %v1098, %v1217
      %v1291 = vsel %vm306, %v1099, %v1219
      %v1292 = vsel %vm306, %v1100, %v1221
      %v1293 = vsel %vm306, %v1101, %v1223
      %v1294 = vsel %vm306, %v1102, %v1225
      %v1295 = vsel %vm306, %v1103, %v1227
      %v1296 = vsel %vm306, %v1104, %v1229
      %v1297 = vsel %vm306, %v1105, %v1231
      %v1298 = vsel %vm306, %v1106, %v1233
      %v1299 = vsel %vm306, %v1107, %v1235
      %1300 = vst [vmem:[#allocation3] sm:$0xff] %v1268
      %1301 = vst [vmem:[#allocation3 + $0x28] sm:$0xff] %v1269
      %1302 = vst [vmem:[#allocation3 + $0x50] sm:$0xff] %v1270
      %1303 = vst [vmem:[#allocation3 + $0x78] sm:$0xff] %v1271
      %1304 = vst [vmem:[#allocation3 + $0xa0] sm:$0xff] %v1272
      %1305 = vst [vmem:[#allocation3 + $0xc8] sm:$0xff] %v1273
      %1306 = vst [vmem:[#allocation3 + $0xf0] sm:$0xff] %v1274
      %1307 = vst [vmem:[#allocation3 + $0x118] sm:$0xff] %v1275
      %1308 = vst [vmem:[#allocation3 + $0x140] sm:$0xff] %v1276
      %1309 = vst [vmem:[#allocation3 + $0x168] sm:$0xff] %v1277
      %1310 = vst [vmem:[#allocation3 + $0x190] sm:$0xff] %v1278
      %1311 = vst [vmem:[#allocation3 + $0x1b8] sm:$0xff] %v1279
      %1312 = vst [vmem:[#allocation3 + $0x1e0] sm:$0xff] %v1280
      %1313 = vst [vmem:[#allocation3 + $0x208] sm:$0xff] %v1281
      %1314 = vst [vmem:[#allocation3 + $0x230] sm:$0xff] %v1282
      %1315 = vst [vmem:[#allocation3 + $0x258] sm:$0xff] %v1283
      %1316 = vst [vmem:[#allocation3 + $0x280] sm:$0xff] %v1284
      %1317 = vst [vmem:[#allocation3 + $0x2a8] sm:$0xff] %v1285
      %1318 = vst [vmem:[#allocation3 + $0x2d0] sm:$0xff] %v1286
      %1319 = vst [vmem:[#allocation3 + $0x2f8] sm:$0xff] %v1287
      %1320 = vst [vmem:[#allocation3 + $0x320] sm:$0xff] %v1288
      %1321 = vst [vmem:[#allocation3 + $0x348] sm:$0xff] %v1289
      %1322 = vst [vmem:[#allocation3 + $0x370] sm:$0xff] %v1290
      %1323 = vst [vmem:[#allocation3 + $0x398] sm:$0xff] %v1291
      %1324 = vst [vmem:[#allocation3 + $0x3c0] sm:$0xff] %v1292
      %1325 = vst [vmem:[#allocation3 + $0x3e8] sm:$0xff] %v1293
      %1326 = vst [vmem:[#allocation3 + $0x410] sm:$0xff] %v1294
      %1327 = vst [vmem:[#allocation3 + $0x438] sm:$0xff] %v1295
      %1328 = vst [vmem:[#allocation3 + $0x460] sm:$0xff] %v1296
      %1329 = vst [vmem:[#allocation3 + $0x488] sm:$0xff] %v1297
      %1330 = vst [vmem:[#allocation3 + $0x4b0] sm:$0xff] %v1298
      %1331 = vst [vmem:[#allocation3 + $0x4d8] sm:$0xff] %v1299
      %v1332 = vld [vmem:[#allocation2 + $0x2] sm:$0xff]
      %v1333 = vld [vmem:[#allocation2 + $0xa] sm:$0xff]
      %v1334 = vld [vmem:[#allocation2 + $0x1a] sm:$0xff]
      %v1335 = vld [vmem:[#allocation2 + $0x22] sm:$0xff]
      %v1336 = vld [vmem:[#allocation2 + $0x32] sm:$0xff]
      %v1337 = vld [vmem:[#allocation2 + $0x3a] sm:$0xff]
      %v1338 = vld [vmem:[#allocation2 + $0x4a] sm:$0xff]
      %v1339 = vld [vmem:[#allocation2 + $0x52] sm:$0xff]
      %v1340 = vld [vmem:[#allocation2 + $0x62] sm:$0xff]
      %v1341 = vld [vmem:[#allocation2 + $0x6a] sm:$0xff]
      %v1342 = vld [vmem:[#allocation2 + $0x7a] sm:$0xff]
      %v1343 = vld [vmem:[#allocation2 + $0x82] sm:$0xff]
      %v1344 = vld [vmem:[#allocation2 + $0x92] sm:$0xff]
      %v1345 = vld [vmem:[#allocation2 + $0x9a] sm:$0xff]
      %v1346 = vld [vmem:[#allocation2 + $0xaa] sm:$0xff]
      %v1347 = vld [vmem:[#allocation2 + $0xb2] sm:$0xff]
      %v1348 = vld [vmem:[#allocation2 + $0xc2] sm:$0xff]
      %v1349 = vld [vmem:[#allocation2 + $0xca] sm:$0xff]
      %v1350 = vld [vmem:[#allocation2 + $0xda] sm:$0xff]
      %v1351 = vld [vmem:[#allocation2 + $0xe2] sm:$0xff]
      %v1352 = vld [vmem:[#allocation2 + $0xf2] sm:$0xff]
      %v1353 = vld [vmem:[#allocation2 + $0xfa] sm:$0xff]
      %v1354 = vld [vmem:[#allocation2 + $0x10a] sm:$0xff]
      %v1355 = vld [vmem:[#allocation2 + $0x112] sm:$0xff]
      %v1356 = vld [vmem:[#allocation2 + $0x122] sm:$0xff]
      %v1357 = vld [vmem:[#allocation2 + $0x12a] sm:$0xff]
      %v1358 = vld [vmem:[#allocation2 + $0x13a] sm:$0xff]
      %v1359 = vld [vmem:[#allocation2 + $0x142] sm:$0xff]
      %v1360 = vld [vmem:[#allocation2 + $0x152] sm:$0xff]
      %v1361 = vld [vmem:[#allocation2 + $0x15a] sm:$0xff]
      %v1362 = vld [vmem:[#allocation2 + $0x16a] sm:$0xff]
      %v1363 = vld [vmem:[#allocation2 + $0x172] sm:$0xff]
      %v1364 = vld [vmem:[%s315] sm:$0xff]
      %v1365 = vld [vmem:[%s315 + $0x8] sm:$0xff]
      %v1366 = vld [vmem:[%s315 + $0x18] sm:$0xff]
      %v1367 = vld [vmem:[%s315 + $0x20] sm:$0xff]
      %v1368 = vld [vmem:[%s315 + $0x30] sm:$0xff]
      %v1369 = vld [vmem:[%s315 + $0x38] sm:$0xff]
      %v1370 = vld [vmem:[%s315 + $0x48] sm:$0xff]
      %v1371 = vld [vmem:[%s315 + $0x50] sm:$0xff]
      %v1372 = vld [vmem:[%s315 + $0x60] sm:$0xff]
      %v1373 = vld [vmem:[%s315 + $0x68] sm:$0xff]
      %v1374 = vld [vmem:[%s315 + $0x78] sm:$0xff]
      %v1375 = vld [vmem:[%s315 + $0x80] sm:$0xff]
      %v1376 = vld [vmem:[%s315 + $0x90] sm:$0xff]
      %v1377 = vld [vmem:[%s315 + $0x98] sm:$0xff]
      %v1378 = vld [vmem:[%s315 + $0xa8] sm:$0xff]
      %v1379 = vld [vmem:[%s315 + $0xb0] sm:$0xff]
      %v1380 = vld [vmem:[%s315 + $0xc0] sm:$0xff]
      %v1381 = vld [vmem:[%s315 + $0xc8] sm:$0xff]
      %v1382 = vld [vmem:[%s315 + $0xd8] sm:$0xff]
      %v1383 = vld [vmem:[%s315 + $0xe0] sm:$0xff]
      %v1384 = vld [vmem:[%s315 + $0xf0] sm:$0xff]
      %v1385 = vld [vmem:[%s315 + $0xf8] sm:$0xff]
      %v1386 = vld [vmem:[%s315 + $0x108] sm:$0xff]
      %v1387 = vld [vmem:[%s315 + $0x110] sm:$0xff]
      %v1388 = vld [vmem:[%s315 + $0x120] sm:$0xff]
      %v1389 = vld [vmem:[%s315 + $0x128] sm:$0xff]
      %v1390 = vld [vmem:[%s315 + $0x138] sm:$0xff]
      %v1391 = vld [vmem:[%s315 + $0x140] sm:$0xff]
      %v1392 = vld [vmem:[%s315 + $0x150] sm:$0xff]
      %v1393 = vld [vmem:[%s315 + $0x158] sm:$0xff]
      %v1394 = vld [vmem:[%s315 + $0x168] sm:$0xff]
      %v1395 = vld [vmem:[%s315 + $0x170] sm:$0xff]
      %1428 = vrot.lane.b32.xlu0 %v1364, 64
      %v1429 = vpop.permute.xlu0 %1428
      %1430 = vrot.lane.b32.xlu0 %v1365, 64
      %v1431 = vpop.permute.xlu0 %1430
      %1432 = vrot.lane.b32.xlu0 %v1366, 64
      %v1433 = vpop.permute.xlu0 %1432
      %1434 = vrot.lane.b32.xlu0 %v1367, 64
      %v1435 = vpop.permute.xlu0 %1434
      %1436 = vrot.lane.b32.xlu0 %v1368, 64
      %v1437 = vpop.permute.xlu0 %1436
      %1438 = vrot.lane.b32.xlu0 %v1369, 64
      %v1439 = vpop.permute.xlu0 %1438
      %1440 = vrot.lane.b32.xlu0 %v1370, 64
      %v1441 = vpop.permute.xlu0 %1440
      %1442 = vrot.lane.b32.xlu0 %v1371, 64
      %v1443 = vpop.permute.xlu0 %1442
      %1444 = vrot.lane.b32.xlu0 %v1372, 64
      %v1445 = vpop.permute.xlu0 %1444
      %1446 = vrot.lane.b32.xlu0 %v1373, 64
      %v1447 = vpop.permute.xlu0 %1446
      %1448 = vrot.lane.b32.xlu0 %v1374, 64
      %v1449 = vpop.permute.xlu0 %1448
      %1450 = vrot.lane.b32.xlu0 %v1375, 64
      %v1451 = vpop.permute.xlu0 %1450
      %1452 = vrot.lane.b32.xlu0 %v1376, 64
      %v1453 = vpop.permute.xlu0 %1452
      %1454 = vrot.lane.b32.xlu0 %v1377, 64
      %v1455 = vpop.permute.xlu0 %1454
      %1456 = vrot.lane.b32.xlu0 %v1378, 64
      %v1457 = vpop.permute.xlu0 %1456
      %1458 = vrot.lane.b32.xlu0 %v1379, 64
      %v1459 = vpop.permute.xlu0 %1458
      %1460 = vrot.lane.b32.xlu0 %v1380, 64
      %v1461 = vpop.permute.xlu0 %1460
      %1462 = vrot.lane.b32.xlu0 %v1381, 64
      %v1463 = vpop.permute.xlu0 %1462
      %1464 = vrot.lane.b32.xlu0 %v1382, 64
      %v1465 = vpop.permute.xlu0 %1464
      %1466 = vrot.lane.b32.xlu0 %v1383, 64
      %v1467 = vpop.permute.xlu0 %1466
      %1468 = vrot.lane.b32.xlu0 %v1384, 64
      %v1469 = vpop.permute.xlu0 %1468
      %1470 = vrot.lane.b32.xlu0 %v1385, 64
      %v1471 = vpop.permute.xlu0 %1470
      %1472 = vrot.lane.b32.xlu0 %v1386, 64
      %v1473 = vpop.permute.xlu0 %1472
      %1474 = vrot.lane.b32.xlu0 %v1387, 64
      %v1475 = vpop.permute.xlu0 %1474
      %1476 = vrot.lane.b32.xlu0 %v1388, 64
      %v1477 = vpop.permute.xlu0 %1476
      %1478 = vrot.lane.b32.xlu0 %v1389, 64
      %v1479 = vpop.permute.xlu0 %1478
      %1480 = vrot.lane.b32.xlu0 %v1390, 64
      %v1481 = vpop.permute.xlu0 %1480
      %1482 = vrot.lane.b32.xlu0 %v1391, 64
      %v1483 = vpop.permute.xlu0 %1482
      %1484 = vrot.lane.b32.xlu0 %v1392, 64
      %v1485 = vpop.permute.xlu0 %1484
      %1486 = vrot.lane.b32.xlu0 %v1393, 64
      %v1487 = vpop.permute.xlu0 %1486
      %1488 = vrot.lane.b32.xlu0 %v1394, 64
      %v1489 = vpop.permute.xlu0 %1488
      %1490 = vrot.lane.b32.xlu0 %v1395, 64
      %v1491 = vpop.permute.xlu0 %1490
      %v1524 = vsel %vm306, %v1332, %v1429
      %v1525 = vsel %vm306, %v1333, %v1431
      %v1526 = vsel %vm306, %v1334, %v1433
      %v1527 = vsel %vm306, %v1335, %v1435
      %v1528 = vsel %vm306, %v1336, %v1437
      %v1529 = vsel %vm306, %v1337, %v1439
      %v1530 = vsel %vm306, %v1338, %v1441
      %v1531 = vsel %vm306, %v1339, %v1443
      %v1532 = vsel %vm306, %v1340, %v1445
      %v1533 = vsel %vm306, %v1341, %v1447
      %v1534 = vsel %vm306, %v1342, %v1449
      %v1535 = vsel %vm306, %v1343, %v1451
      %v1536 = vsel %vm306, %v1344, %v1453
      %v1537 = vsel %vm306, %v1345, %v1455
      %v1538 = vsel %vm306, %v1346, %v1457
      %v1539 = vsel %vm306, %v1347, %v1459
      %v1540 = vsel %vm306, %v1348, %v1461
      %v1541 = vsel %vm306, %v1349, %v1463
      %v1542 = vsel %vm306, %v1350, %v1465
      %v1543 = vsel %vm306, %v1351, %v1467
      %v1544 = vsel %vm306, %v1352, %v1469
      %v1545 = vsel %vm306, %v1353, %v1471
      %v1546 = vsel %vm306, %v1354, %v1473
      %v1547 = vsel %vm306, %v1355, %v1475
      %v1548 = vsel %vm306, %v1356, %v1477
      %v1549 = vsel %vm306, %v1357, %v1479
      %v1550 = vsel %vm306, %v1358, %v1481
      %v1551 = vsel %vm306, %v1359, %v1483
      %v1552 = vsel %vm306, %v1360, %v1485
      %v1553 = vsel %vm306, %v1361, %v1487
      %v1554 = vsel %vm306, %v1362, %v1489
      %v1555 = vsel %vm306, %v1363, %v1491
      %1556 = vst [vmem:[#allocation3 + $0x8] sm:$0xff] %v1524
      %1557 = vst [vmem:[#allocation3 + $0x30] sm:$0xff] %v1525
      %1558 = vst [vmem:[#allocation3 + $0x58] sm:$0xff] %v1526
      %1559 = vst [vmem:[#allocation3 + $0x80] sm:$0xff] %v1527
      %1560 = vst [vmem:[#allocation3 + $0xa8] sm:$0xff] %v1528
      %1561 = vst [vmem:[#allocation3 + $0xd0] sm:$0xff] %v1529
      %1562 = vst [vmem:[#allocation3 + $0xf8] sm:$0xff] %v1530
      %1563 = vst [vmem:[#allocation3 + $0x120] sm:$0xff] %v1531
      %1564 = vst [vmem:[#allocation3 + $0x148] sm:$0xff] %v1532
      %1565 = vst [vmem:[#allocation3 + $0x170] sm:$0xff] %v1533
      %1566 = vst [vmem:[#allocation3 + $0x198] sm:$0xff] %v1534
      %1567 = vst [vmem:[#allocation3 + $0x1c0] sm:$0xff] %v1535
      %1568 = vst [vmem:[#allocation3 + $0x1e8] sm:$0xff] %v1536
      %1569 = vst [vmem:[#allocation3 + $0x210] sm:$0xff] %v1537
      %1570 = vst [vmem:[#allocation3 + $0x238] sm:$0xff] %v1538
      %1571 = vst [vmem:[#allocation3 + $0x260] sm:$0xff] %v1539
      %1572 = vst [vmem:[#allocation3 + $0x288] sm:$0xff] %v1540
      %1573 = vst [vmem:[#allocation3 + $0x2b0] sm:$0xff] %v1541
      %1574 = vst [vmem:[#allocation3 + $0x2d8] sm:$0xff] %v1542
      %1575 = vst [vmem:[#allocation3 + $0x300] sm:$0xff] %v1543
      %1576 = vst [vmem:[#allocation3 + $0x328] sm:$0xff] %v1544
      %1577 = vst [vmem:[#allocation3 + $0x350] sm:$0xff] %v1545
      %1578 = vst [vmem:[#allocation3 + $0x378] sm:$0xff] %v1546
      %1579 = vst [vmem:[#allocation3 + $0x3a0] sm:$0xff] %v1547
      %1580 = vst [vmem:[#allocation3 + $0x3c8] sm:$0xff] %v1548
      %1581 = vst [vmem:[#allocation3 + $0x3f0] sm:$0xff] %v1549
      %1582 = vst [vmem:[#allocation3 + $0x418] sm:$0xff] %v1550
      %1583 = vst [vmem:[#allocation3 + $0x440] sm:$0xff] %v1551
      %1584 = vst [vmem:[#allocation3 + $0x468] sm:$0xff] %v1552
      %1585 = vst [vmem:[#allocation3 + $0x490] sm:$0xff] %v1553
      %1586 = vst [vmem:[#allocation3 + $0x4b8] sm:$0xff] %v1554
      %1587 = vst [vmem:[#allocation3 + $0x4e0] sm:$0xff] %v1555
      %v1588 = vld [vmem:[%s315 + $0x1] sm:$0xff]
      %v1589 = vld [vmem:[%s315 + $0x9] sm:$0xff]
      %v1590 = vld [vmem:[%s315 + $0x19] sm:$0xff]
      %v1591 = vld [vmem:[%s315 + $0x21] sm:$0xff]
      %v1592 = vld [vmem:[%s315 + $0x31] sm:$0xff]
      %v1593 = vld [vmem:[%s315 + $0x39] sm:$0xff]
      %v1594 = vld [vmem:[%s315 + $0x49] sm:$0xff]
      %v1595 = vld [vmem:[%s315 + $0x51] sm:$0xff]
      %v1596 = vld [vmem:[%s315 + $0x61] sm:$0xff]
      %v1597 = vld [vmem:[%s315 + $0x69] sm:$0xff]
      %v1598 = vld [vmem:[%s315 + $0x79] sm:$0xff]
      %v1599 = vld [vmem:[%s315 + $0x81] sm:$0xff]
      %v1600 = vld [vmem:[%s315 + $0x91] sm:$0xff]
      %v1601 = vld [vmem:[%s315 + $0x99] sm:$0xff]
      %v1602 = vld [vmem:[%s315 + $0xa9] sm:$0xff]
      %v1603 = vld [vmem:[%s315 + $0xb1] sm:$0xff]
      %v1604 = vld [vmem:[%s315 + $0xc1] sm:$0xff]
      %v1605 = vld [vmem:[%s315 + $0xc9] sm:$0xff]
      %v1606 = vld [vmem:[%s315 + $0xd9] sm:$0xff]
      %v1607 = vld [vmem:[%s315 + $0xe1] sm:$0xff]
      %v1608 = vld [vmem:[%s315 + $0xf1] sm:$0xff]
      %v1609 = vld [vmem:[%s315 + $0xf9] sm:$0xff]
      %v1610 = vld [vmem:[%s315 + $0x109] sm:$0xff]
      %v1611 = vld [vmem:[%s315 + $0x111] sm:$0xff]
      %v1612 = vld [vmem:[%s315 + $0x121] sm:$0xff]
      %v1613 = vld [vmem:[%s315 + $0x129] sm:$0xff]
      %v1614 = vld [vmem:[%s315 + $0x139] sm:$0xff]
      %v1615 = vld [vmem:[%s315 + $0x141] sm:$0xff]
      %v1616 = vld [vmem:[%s315 + $0x151] sm:$0xff]
      %v1617 = vld [vmem:[%s315 + $0x159] sm:$0xff]
      %v1618 = vld [vmem:[%s315 + $0x169] sm:$0xff]
      %v1619 = vld [vmem:[%s315 + $0x171] sm:$0xff]
      %v1620 = vld [vmem:[%s315 + $0x2] sm:$0xff]
      %v1621 = vld [vmem:[%s315 + $0xa] sm:$0xff]
      %v1622 = vld [vmem:[%s315 + $0x1a] sm:$0xff]
      %v1623 = vld [vmem:[%s315 + $0x22] sm:$0xff]
      %v1624 = vld [vmem:[%s315 + $0x32] sm:$0xff]
      %v1625 = vld [vmem:[%s315 + $0x3a] sm:$0xff]
      %v1626 = vld [vmem:[%s315 + $0x4a] sm:$0xff]
      %v1627 = vld [vmem:[%s315 + $0x52] sm:$0xff]
      %v1628 = vld [vmem:[%s315 + $0x62] sm:$0xff]
      %v1629 = vld [vmem:[%s315 + $0x6a] sm:$0xff]
      %v1630 = vld [vmem:[%s315 + $0x7a] sm:$0xff]
      %v1631 = vld [vmem:[%s315 + $0x82] sm:$0xff]
      %v1632 = vld [vmem:[%s315 + $0x92] sm:$0xff]
      %v1633 = vld [vmem:[%s315 + $0x9a] sm:$0xff]
      %v1634 = vld [vmem:[%s315 + $0xaa] sm:$0xff]
      %v1635 = vld [vmem:[%s315 + $0xb2] sm:$0xff]
      %v1636 = vld [vmem:[%s315 + $0xc2] sm:$0xff]
      %v1637 = vld [vmem:[%s315 + $0xca] sm:$0xff]
      %v1638 = vld [vmem:[%s315 + $0xda] sm:$0xff]
      %v1639 = vld [vmem:[%s315 + $0xe2] sm:$0xff]
      %v1640 = vld [vmem:[%s315 + $0xf2] sm:$0xff]
      %v1641 = vld [vmem:[%s315 + $0xfa] sm:$0xff]
      %v1642 = vld [vmem:[%s315 + $0x10a] sm:$0xff]
      %v1643 = vld [vmem:[%s315 + $0x112] sm:$0xff]
      %v1644 = vld [vmem:[%s315 + $0x122] sm:$0xff]
      %v1645 = vld [vmem:[%s315 + $0x12a] sm:$0xff]
      %v1646 = vld [vmem:[%s315 + $0x13a] sm:$0xff]
      %v1647 = vld [vmem:[%s315 + $0x142] sm:$0xff]
      %v1648 = vld [vmem:[%s315 + $0x152] sm:$0xff]
      %v1649 = vld [vmem:[%s315 + $0x15a] sm:$0xff]
      %v1650 = vld [vmem:[%s315 + $0x16a] sm:$0xff]
      %v1651 = vld [vmem:[%s315 + $0x172] sm:$0xff]
      %1684 = vrot.lane.b32.xlu0 %v1620, 64
      %v1685 = vpop.permute.xlu0 %1684
      %1686 = vrot.lane.b32.xlu0 %v1621, 64
      %v1687 = vpop.permute.xlu0 %1686
      %1688 = vrot.lane.b32.xlu0 %v1622, 64
      %v1689 = vpop.permute.xlu0 %1688
      %1690 = vrot.lane.b32.xlu0 %v1623, 64
      %v1691 = vpop.permute.xlu0 %1690
      %1692 = vrot.lane.b32.xlu0 %v1624, 64
      %v1693 = vpop.permute.xlu0 %1692
      %1694 = vrot.lane.b32.xlu0 %v1625, 64
      %v1695 = vpop.permute.xlu0 %1694
      %1696 = vrot.lane.b32.xlu0 %v1626, 64
      %v1697 = vpop.permute.xlu0 %1696
      %1698 = vrot.lane.b32.xlu0 %v1627, 64
      %v1699 = vpop.permute.xlu0 %1698
      %1700 = vrot.lane.b32.xlu0 %v1628, 64
      %v1701 = vpop.permute.xlu0 %1700
      %1702 = vrot.lane.b32.xlu0 %v1629, 64
      %v1703 = vpop.permute.xlu0 %1702
      %1704 = vrot.lane.b32.xlu0 %v1630, 64
      %v1705 = vpop.permute.xlu0 %1704
      %1706 = vrot.lane.b32.xlu0 %v1631, 64
      %v1707 = vpop.permute.xlu0 %1706
      %1708 = vrot.lane.b32.xlu0 %v1632, 64
      %v1709 = vpop.permute.xlu0 %1708
      %1710 = vrot.lane.b32.xlu0 %v1633, 64
      %v1711 = vpop.permute.xlu0 %1710
      %1712 = vrot.lane.b32.xlu0 %v1634, 64
      %v1713 = vpop.permute.xlu0 %1712
      %1714 = vrot.lane.b32.xlu0 %v1635, 64
      %v1715 = vpop.permute.xlu0 %1714
      %1716 = vrot.lane.b32.xlu0 %v1636, 64
      %v1717 = vpop.permute.xlu0 %1716
      %1718 = vrot.lane.b32.xlu0 %v1637, 64
      %v1719 = vpop.permute.xlu0 %1718
      %1720 = vrot.lane.b32.xlu0 %v1638, 64
      %v1721 = vpop.permute.xlu0 %1720
      %1722 = vrot.lane.b32.xlu0 %v1639, 64
      %v1723 = vpop.permute.xlu0 %1722
      %1724 = vrot.lane.b32.xlu0 %v1640, 64
      %v1725 = vpop.permute.xlu0 %1724
      %1726 = vrot.lane.b32.xlu0 %v1641, 64
      %v1727 = vpop.permute.xlu0 %1726
      %1728 = vrot.lane.b32.xlu0 %v1642, 64
      %v1729 = vpop.permute.xlu0 %1728
      %1730 = vrot.lane.b32.xlu0 %v1643, 64
      %v1731 = vpop.permute.xlu0 %1730
      %1732 = vrot.lane.b32.xlu0 %v1644, 64
      %v1733 = vpop.permute.xlu0 %1732
      %1734 = vrot.lane.b32.xlu0 %v1645, 64
      %v1735 = vpop.permute.xlu0 %1734
      %1736 = vrot.lane.b32.xlu0 %v1646, 64
      %v1737 = vpop.permute.xlu0 %1736
      %1738 = vrot.lane.b32.xlu0 %v1647, 64
      %v1739 = vpop.permute.xlu0 %1738
      %1740 = vrot.lane.b32.xlu0 %v1648, 64
      %v1741 = vpop.permute.xlu0 %1740
      %1742 = vrot.lane.b32.xlu0 %v1649, 64
      %v1743 = vpop.permute.xlu0 %1742
      %1744 = vrot.lane.b32.xlu0 %v1650, 64
      %v1745 = vpop.permute.xlu0 %1744
      %1746 = vrot.lane.b32.xlu0 %v1651, 64
      %v1747 = vpop.permute.xlu0 %1746
      %v1780 = vsel %vm306, %v1588, %v1685
      %v1781 = vsel %vm306, %v1589, %v1687
      %v1782 = vsel %vm306, %v1590, %v1689
      %v1783 = vsel %vm306, %v1591, %v1691
      %v1784 = vsel %vm306, %v1592, %v1693
      %v1785 = vsel %vm306, %v1593, %v1695
      %v1786 = vsel %vm306, %v1594, %v1697
      %v1787 = vsel %vm306, %v1595, %v1699
      %v1788 = vsel %vm306, %v1596, %v1701
      %v1789 = vsel %vm306, %v1597, %v1703
      %v1790 = vsel %vm306, %v1598, %v1705
      %v1791 = vsel %vm306, %v1599, %v1707
      %v1792 = vsel %vm306, %v1600, %v1709
      %v1793 = vsel %vm306, %v1601, %v1711
      %v1794 = vsel %vm306, %v1602, %v1713
      %v1795 = vsel %vm306, %v1603, %v1715
      %v1796 = vsel %vm306, %v1604, %v1717
      %v1797 = vsel %vm306, %v1605, %v1719
      %v1798 = vsel %vm306, %v1606, %v1721
      %v1799 = vsel %vm306, %v1607, %v1723
      %v1800 = vsel %vm306, %v1608, %v1725
      %v1801 = vsel %vm306, %v1609, %v1727
      %v1802 = vsel %vm306, %v1610, %v1729
      %v1803 = vsel %vm306, %v1611, %v1731
      %v1804 = vsel %vm306, %v1612, %v1733
      %v1805 = vsel %vm306, %v1613, %v1735
      %v1806 = vsel %vm306, %v1614, %v1737
      %v1807 = vsel %vm306, %v1615, %v1739
      %v1808 = vsel %vm306, %v1616, %v1741
      %v1809 = vsel %vm306, %v1617, %v1743
      %v1810 = vsel %vm306, %v1618, %v1745
      %v1811 = vsel %vm306, %v1619, %v1747
      %1812 = vst [vmem:[#allocation3 + $0x10] sm:$0xff] %v1780
      %1813 = vst [vmem:[#allocation3 + $0x38] sm:$0xff] %v1781
      %1814 = vst [vmem:[#allocation3 + $0x60] sm:$0xff] %v1782
      %1815 = vst [vmem:[#allocation3 + $0x88] sm:$0xff] %v1783
      %1816 = vst [vmem:[#allocation3 + $0xb0] sm:$0xff] %v1784
      %1817 = vst [vmem:[#allocation3 + $0xd8] sm:$0xff] %v1785
      %1818 = vst [vmem:[#allocation3 + $0x100] sm:$0xff] %v1786
      %1819 = vst [vmem:[#allocation3 + $0x128] sm:$0xff] %v1787
      %1820 = vst [vmem:[#allocation3 + $0x150] sm:$0xff] %v1788
      %1821 = vst [vmem:[#allocation3 + $0x178] sm:$0xff] %v1789
      %1822 = vst [vmem:[#allocation3 + $0x1a0] sm:$0xff] %v1790
      %1823 = vst [vmem:[#allocation3 + $0x1c8] sm:$0xff] %v1791
      %1824 = vst [vmem:[#allocation3 + $0x1f0] sm:$0xff] %v1792
      %1825 = vst [vmem:[#allocation3 + $0x218] sm:$0xff] %v1793
      %1826 = vst [vmem:[#allocation3 + $0x240] sm:$0xff] %v1794
      %1827 = vst [vmem:[#allocation3 + $0x268] sm:$0xff] %v1795
      %1828 = vst [vmem:[#allocation3 + $0x290] sm:$0xff] %v1796
      %1829 = vst [vmem:[#allocation3 + $0x2b8] sm:$0xff] %v1797
      %1830 = vst [vmem:[#allocation3 + $0x2e0] sm:$0xff] %v1798
      %1831 = vst [vmem:[#allocation3 + $0x308] sm:$0xff] %v1799
      %1832 = vst [vmem:[#allocation3 + $0x330] sm:$0xff] %v1800
      %1833 = vst [vmem:[#allocation3 + $0x358] sm:$0xff] %v1801
      %1834 = vst [vmem:[#allocation3 + $0x380] sm:$0xff] %v1802
      %1835 = vst [vmem:[#allocation3 + $0x3a8] sm:$0xff] %v1803
      %1836 = vst [vmem:[#allocation3 + $0x3d0] sm:$0xff] %v1804
      %1837 = vst [vmem:[#allocation3 + $0x3f8] sm:$0xff] %v1805
      %1838 = vst [vmem:[#allocation3 + $0x420] sm:$0xff] %v1806
      %1839 = vst [vmem:[#allocation3 + $0x448] sm:$0xff] %v1807
      %1840 = vst [vmem:[#allocation3 + $0x470] sm:$0xff] %v1808
      %1841 = vst [vmem:[#allocation3 + $0x498] sm:$0xff] %v1809
      %1842 = vst [vmem:[#allocation3 + $0x4c0] sm:$0xff] %v1810
      %1843 = vst [vmem:[#allocation3 + $0x4e8] sm:$0xff] %v1811
      %s1844 = scalar_lea.vmem [#allocation2], 48
      %v1845 = vld [vmem:[%s1844] sm:$0xff]
      %v1846 = vld [vmem:[%s1844 + $0x8] sm:$0xff]
      %v1847 = vld [vmem:[%s1844 + $0x18] sm:$0xff]
      %v1848 = vld [vmem:[%s1844 + $0x20] sm:$0xff]
      %v1849 = vld [vmem:[%s1844 + $0x30] sm:$0xff]
      %v1850 = vld [vmem:[%s1844 + $0x38] sm:$0xff]
      %v1851 = vld [vmem:[%s1844 + $0x48] sm:$0xff]
      %v1852 = vld [vmem:[%s1844 + $0x50] sm:$0xff]
      %v1853 = vld [vmem:[%s1844 + $0x60] sm:$0xff]
      %v1854 = vld [vmem:[%s1844 + $0x68] sm:$0xff]
      %v1855 = vld [vmem:[%s1844 + $0x78] sm:$0xff]
      %v1856 = vld [vmem:[%s1844 + $0x80] sm:$0xff]
      %v1857 = vld [vmem:[%s1844 + $0x90] sm:$0xff]
      %v1858 = vld [vmem:[%s1844 + $0x98] sm:$0xff]
      %v1859 = vld [vmem:[%s1844 + $0xa8] sm:$0xff]
      %v1860 = vld [vmem:[%s1844 + $0xb0] sm:$0xff]
      %v1861 = vld [vmem:[%s1844 + $0xc0] sm:$0xff]
      %v1862 = vld [vmem:[%s1844 + $0xc8] sm:$0xff]
      %v1863 = vld [vmem:[%s1844 + $0xd8] sm:$0xff]
      %v1864 = vld [vmem:[%s1844 + $0xe0] sm:$0xff]
      %v1865 = vld [vmem:[%s1844 + $0xf0] sm:$0xff]
      %v1866 = vld [vmem:[%s1844 + $0xf8] sm:$0xff]
      %v1867 = vld [vmem:[%s1844 + $0x108] sm:$0xff]
      %v1868 = vld [vmem:[%s1844 + $0x110] sm:$0xff]
      %v1869 = vld [vmem:[%s1844 + $0x120] sm:$0xff]
      %v1870 = vld [vmem:[%s1844 + $0x128] sm:$0xff]
      %v1871 = vld [vmem:[%s1844 + $0x138] sm:$0xff]
      %v1872 = vld [vmem:[%s1844 + $0x140] sm:$0xff]
      %v1873 = vld [vmem:[%s1844 + $0x150] sm:$0xff]
      %v1874 = vld [vmem:[%s1844 + $0x158] sm:$0xff]
      %v1875 = vld [vmem:[%s1844 + $0x168] sm:$0xff]
      %v1876 = vld [vmem:[%s1844 + $0x170] sm:$0xff]
      %v1877 = vld [vmem:[%s1844 + $0x1] sm:$0xff]
      %v1878 = vld [vmem:[%s1844 + $0x9] sm:$0xff]
      %v1879 = vld [vmem:[%s1844 + $0x19] sm:$0xff]
      %v1880 = vld [vmem:[%s1844 + $0x21] sm:$0xff]
      %v1881 = vld [vmem:[%s1844 + $0x31] sm:$0xff]
      %v1882 = vld [vmem:[%s1844 + $0x39] sm:$0xff]
      %v1883 = vld [vmem:[%s1844 + $0x49] sm:$0xff]
      %v1884 = vld [vmem:[%s1844 + $0x51] sm:$0xff]
      %v1885 = vld [vmem:[%s1844 + $0x61] sm:$0xff]
      %v1886 = vld [vmem:[%s1844 + $0x69] sm:$0xff]
      %v1887 = vld [vmem:[%s1844 + $0x79] sm:$0xff]
      %v1888 = vld [vmem:[%s1844 + $0x81] sm:$0xff]
      %v1889 = vld [vmem:[%s1844 + $0x91] sm:$0xff]
      %v1890 = vld [vmem:[%s1844 + $0x99] sm:$0xff]
      %v1891 = vld [vmem:[%s1844 + $0xa9] sm:$0xff]
      %v1892 = vld [vmem:[%s1844 + $0xb1] sm:$0xff]
      %v1893 = vld [vmem:[%s1844 + $0xc1] sm:$0xff]
      %v1894 = vld [vmem:[%s1844 + $0xc9] sm:$0xff]
      %v1895 = vld [vmem:[%s1844 + $0xd9] sm:$0xff]
      %v1896 = vld [vmem:[%s1844 + $0xe1] sm:$0xff]
      %v1897 = vld [vmem:[%s1844 + $0xf1] sm:$0xff]
      %v1898 = vld [vmem:[%s1844 + $0xf9] sm:$0xff]
      %v1899 = vld [vmem:[%s1844 + $0x109] sm:$0xff]
      %v1900 = vld [vmem:[%s1844 + $0x111] sm:$0xff]
      %v1901 = vld [vmem:[%s1844 + $0x121] sm:$0xff]
      %v1902 = vld [vmem:[%s1844 + $0x129] sm:$0xff]
      %v1903 = vld [vmem:[%s1844 + $0x139] sm:$0xff]
      %v1904 = vld [vmem:[%s1844 + $0x141] sm:$0xff]
      %v1905 = vld [vmem:[%s1844 + $0x151] sm:$0xff]
      %v1906 = vld [vmem:[%s1844 + $0x159] sm:$0xff]
      %v1907 = vld [vmem:[%s1844 + $0x169] sm:$0xff]
      %v1908 = vld [vmem:[%s1844 + $0x171] sm:$0xff]
      %1941 = vrot.lane.b32.xlu0 %v1877, 64
      %v1942 = vpop.permute.xlu0 %1941
      %1943 = vrot.lane.b32.xlu0 %v1878, 64
      %v1944 = vpop.permute.xlu0 %1943
      %1945 = vrot.lane.b32.xlu0 %v1879, 64
      %v1946 = vpop.permute.xlu0 %1945
      %1947 = vrot.lane.b32.xlu0 %v1880, 64
      %v1948 = vpop.permute.xlu0 %1947
      %1949 = vrot.lane.b32.xlu0 %v1881, 64
      %v1950 = vpop.permute.xlu0 %1949
      %1951 = vrot.lane.b32.xlu0 %v1882, 64
      %v1952 = vpop.permute.xlu0 %1951
      %1953 = vrot.lane.b32.xlu0 %v1883, 64
      %v1954 = vpop.permute.xlu0 %1953
      %1955 = vrot.lane.b32.xlu0 %v1884, 64
      %v1956 = vpop.permute.xlu0 %1955
      %1957 = vrot.lane.b32.xlu0 %v1885, 64
      %v1958 = vpop.permute.xlu0 %1957
      %1959 = vrot.lane.b32.xlu0 %v1886, 64
      %v1960 = vpop.permute.xlu0 %1959
      %1961 = vrot.lane.b32.xlu0 %v1887, 64
      %v1962 = vpop.permute.xlu0 %1961
      %1963 = vrot.lane.b32.xlu0 %v1888, 64
      %v1964 = vpop.permute.xlu0 %1963
      %1965 = vrot.lane.b32.xlu0 %v1889, 64
      %v1966 = vpop.permute.xlu0 %1965
      %1967 = vrot.lane.b32.xlu0 %v1890, 64
      %v1968 = vpop.permute.xlu0 %1967
      %1969 = vrot.lane.b32.xlu0 %v1891, 64
      %v1970 = vpop.permute.xlu0 %1969
      %1971 = vrot.lane.b32.xlu0 %v1892, 64
      %v1972 = vpop.permute.xlu0 %1971
      %1973 = vrot.lane.b32.xlu0 %v1893, 64
      %v1974 = vpop.permute.xlu0 %1973
      %1975 = vrot.lane.b32.xlu0 %v1894, 64
      %v1976 = vpop.permute.xlu0 %1975
      %1977 = vrot.lane.b32.xlu0 %v1895, 64
      %v1978 = vpop.permute.xlu0 %1977
      %1979 = vrot.lane.b32.xlu0 %v1896, 64
      %v1980 = vpop.permute.xlu0 %1979
      %1981 = vrot.lane.b32.xlu0 %v1897, 64
      %v1982 = vpop.permute.xlu0 %1981
      %1983 = vrot.lane.b32.xlu0 %v1898, 64
      %v1984 = vpop.permute.xlu0 %1983
      %1985 = vrot.lane.b32.xlu0 %v1899, 64
      %v1986 = vpop.permute.xlu0 %1985
      %1987 = vrot.lane.b32.xlu0 %v1900, 64
      %v1988 = vpop.permute.xlu0 %1987
      %1989 = vrot.lane.b32.xlu0 %v1901, 64
      %v1990 = vpop.permute.xlu0 %1989
      %1991 = vrot.lane.b32.xlu0 %v1902, 64
      %v1992 = vpop.permute.xlu0 %1991
      %1993 = vrot.lane.b32.xlu0 %v1903, 64
      %v1994 = vpop.permute.xlu0 %1993
      %1995 = vrot.lane.b32.xlu0 %v1904, 64
      %v1996 = vpop.permute.xlu0 %1995
      %1997 = vrot.lane.b32.xlu0 %v1905, 64
      %v1998 = vpop.permute.xlu0 %1997
      %1999 = vrot.lane.b32.xlu0 %v1906, 64
      %v2000 = vpop.permute.xlu0 %1999
      %2001 = vrot.lane.b32.xlu0 %v1907, 64
      %v2002 = vpop.permute.xlu0 %2001
      %2003 = vrot.lane.b32.xlu0 %v1908, 64
      %v2004 = vpop.permute.xlu0 %2003
      %v2037 = vsel %vm306, %v1845, %v1942
      %v2038 = vsel %vm306, %v1846, %v1944
      %v2039 = vsel %vm306, %v1847, %v1946
      %v2040 = vsel %vm306, %v1848, %v1948
      %v2041 = vsel %vm306, %v1849, %v1950
      %v2042 = vsel %vm306, %v1850, %v1952
      %v2043 = vsel %vm306, %v1851, %v1954
      %v2044 = vsel %vm306, %v1852, %v1956
      %v2045 = vsel %vm306, %v1853, %v1958
      %v2046 = vsel %vm306, %v1854, %v1960
      %v2047 = vsel %vm306, %v1855, %v1962
      %v2048 = vsel %vm306, %v1856, %v1964
      %v2049 = vsel %vm306, %v1857, %v1966
      %v2050 = vsel %vm306, %v1858, %v1968
      %v2051 = vsel %vm306, %v1859, %v1970
      %v2052 = vsel %vm306, %v1860, %v1972
      %v2053 = vsel %vm306, %v1861, %v1974
      %v2054 = vsel %vm306, %v1862, %v1976
      %v2055 = vsel %vm306, %v1863, %v1978
      %v2056 = vsel %vm306, %v1864, %v1980
      %v2057 = vsel %vm306, %v1865, %v1982
      %v2058 = vsel %vm306, %v1866, %v1984
      %v2059 = vsel %vm306, %v1867, %v1986
      %v2060 = vsel %vm306, %v1868, %v1988
      %v2061 = vsel %vm306, %v1869, %v1990
      %v2062 = vsel %vm306, %v1870, %v1992
      %v2063 = vsel %vm306, %v1871, %v1994
      %v2064 = vsel %vm306, %v1872, %v1996
      %v2065 = vsel %vm306, %v1873, %v1998
      %v2066 = vsel %vm306, %v1874, %v2000
      %v2067 = vsel %vm306, %v1875, %v2002
      %v2068 = vsel %vm306, %v1876, %v2004
      %2069 = vst [vmem:[#allocation3 + $0x18] sm:$0xff] %v2037
      %2070 = vst [vmem:[#allocation3 + $0x40] sm:$0xff] %v2038
      %2071 = vst [vmem:[#allocation3 + $0x68] sm:$0xff] %v2039
      %2072 = vst [vmem:[#allocation3 + $0x90] sm:$0xff] %v2040
      %2073 = vst [vmem:[#allocation3 + $0xb8] sm:$0xff] %v2041
      %2074 = vst [vmem:[#allocation3 + $0xe0] sm:$0xff] %v2042
      %2075 = vst [vmem:[#allocation3 + $0x108] sm:$0xff] %v2043
      %2076 = vst [vmem:[#allocation3 + $0x130] sm:$0xff] %v2044
      %2077 = vst [vmem:[#allocation3 + $0x158] sm:$0xff] %v2045
      %2078 = vst [vmem:[#allocation3 + $0x180] sm:$0xff] %v2046
      %2079 = vst [vmem:[#allocation3 + $0x1a8] sm:$0xff] %v2047
      %2080 = vst [vmem:[#allocation3 + $0x1d0] sm:$0xff] %v2048
      %2081 = vst [vmem:[#allocation3 + $0x1f8] sm:$0xff] %v2049
      %2082 = vst [vmem:[#allocation3 + $0x220] sm:$0xff] %v2050
      %2083 = vst [vmem:[#allocation3 + $0x248] sm:$0xff] %v2051
      %2084 = vst [vmem:[#allocation3 + $0x270] sm:$0xff] %v2052
      %2085 = vst [vmem:[#allocation3 + $0x298] sm:$0xff] %v2053
      %2086 = vst [vmem:[#allocation3 + $0x2c0] sm:$0xff] %v2054
      %2087 = vst [vmem:[#allocation3 + $0x2e8] sm:$0xff] %v2055
      %2088 = vst [vmem:[#allocation3 + $0x310] sm:$0xff] %v2056
      %2089 = vst [vmem:[#allocation3 + $0x338] sm:$0xff] %v2057
      %2090 = vst [vmem:[#allocation3 + $0x360] sm:$0xff] %v2058
      %2091 = vst [vmem:[#allocation3 + $0x388] sm:$0xff] %v2059
      %2092 = vst [vmem:[#allocation3 + $0x3b0] sm:$0xff] %v2060
      %2093 = vst [vmem:[#allocation3 + $0x3d8] sm:$0xff] %v2061
      %2094 = vst [vmem:[#allocation3 + $0x400] sm:$0xff] %v2062
      %2095 = vst [vmem:[#allocation3 + $0x428] sm:$0xff] %v2063
      %2096 = vst [vmem:[#allocation3 + $0x450] sm:$0xff] %v2064
      %2097 = vst [vmem:[#allocation3 + $0x478] sm:$0xff] %v2065
      %2098 = vst [vmem:[#allocation3 + $0x4a0] sm:$0xff] %v2066
      %2099 = vst [vmem:[#allocation3 + $0x4c8] sm:$0xff] %v2067
      %2100 = vst [vmem:[#allocation3 + $0x4f0] sm:$0xff] %v2068
      %v2101 = vld [vmem:[%s1844 + $0x2] sm:$0xff]
      %v2102 = vld [vmem:[%s1844 + $0xa] sm:$0xff]
      %v2103 = vld [vmem:[%s1844 + $0x1a] sm:$0xff]
      %v2104 = vld [vmem:[%s1844 + $0x22] sm:$0xff]
      %v2105 = vld [vmem:[%s1844 + $0x32] sm:$0xff]
      %v2106 = vld [vmem:[%s1844 + $0x3a] sm:$0xff]
      %v2107 = vld [vmem:[%s1844 + $0x4a] sm:$0xff]
      %v2108 = vld [vmem:[%s1844 + $0x52] sm:$0xff]
      %v2109 = vld [vmem:[%s1844 + $0x62] sm:$0xff]
      %v2110 = vld [vmem:[%s1844 + $0x6a] sm:$0xff]
      %v2111 = vld [vmem:[%s1844 + $0x7a] sm:$0xff]
      %v2112 = vld [vmem:[%s1844 + $0x82] sm:$0xff]
      %v2113 = vld [vmem:[%s1844 + $0x92] sm:$0xff]
      %v2114 = vld [vmem:[%s1844 + $0x9a] sm:$0xff]
      %v2115 = vld [vmem:[%s1844 + $0xaa] sm:$0xff]
      %v2116 = vld [vmem:[%s1844 + $0xb2] sm:$0xff]
      %v2117 = vld [vmem:[%s1844 + $0xc2] sm:$0xff]
      %v2118 = vld [vmem:[%s1844 + $0xca] sm:$0xff]
      %v2119 = vld [vmem:[%s1844 + $0xda] sm:$0xff]
      %v2120 = vld [vmem:[%s1844 + $0xe2] sm:$0xff]
      %v2121 = vld [vmem:[%s1844 + $0xf2] sm:$0xff]
      %v2122 = vld [vmem:[%s1844 + $0xfa] sm:$0xff]
      %v2123 = vld [vmem:[%s1844 + $0x10a] sm:$0xff]
      %v2124 = vld [vmem:[%s1844 + $0x112] sm:$0xff]
      %v2125 = vld [vmem:[%s1844 + $0x122] sm:$0xff]
      %v2126 = vld [vmem:[%s1844 + $0x12a] sm:$0xff]
      %v2127 = vld [vmem:[%s1844 + $0x13a] sm:$0xff]
      %v2128 = vld [vmem:[%s1844 + $0x142] sm:$0xff]
      %v2129 = vld [vmem:[%s1844 + $0x152] sm:$0xff]
      %v2130 = vld [vmem:[%s1844 + $0x15a] sm:$0xff]
      %v2131 = vld [vmem:[%s1844 + $0x16a] sm:$0xff]
      %v2132 = vld [vmem:[%s1844 + $0x172] sm:$0xff]
      %2133 = vst.msk [vmem:[#allocation3 + $0x20] sm:$0xff] %vm306, %v2101
      %2134 = vst.msk [vmem:[#allocation3 + $0x48] sm:$0xff] %vm306, %v2102
      %2135 = vst.msk [vmem:[#allocation3 + $0x70] sm:$0xff] %vm306, %v2103
      %2136 = vst.msk [vmem:[#allocation3 + $0x98] sm:$0xff] %vm306, %v2104
      %2137 = vst.msk [vmem:[#allocation3 + $0xc0] sm:$0xff] %vm306, %v2105
      %2138 = vst.msk [vmem:[#allocation3 + $0xe8] sm:$0xff] %vm306, %v2106
      %2139 = vst.msk [vmem:[#allocation3 + $0x110] sm:$0xff] %vm306, %v2107
      %2140 = vst.msk [vmem:[#allocation3 + $0x138] sm:$0xff] %vm306, %v2108
      %2141 = vst.msk [vmem:[#allocation3 + $0x160] sm:$0xff] %vm306, %v2109
      %2142 = vst.msk [vmem:[#allocation3 + $0x188] sm:$0xff] %vm306, %v2110
      %2143 = vst.msk [vmem:[#allocation3 + $0x1b0] sm:$0xff] %vm306, %v2111
      %2144 = vst.msk [vmem:[#allocation3 + $0x1d8] sm:$0xff] %vm306, %v2112
      %2145 = vst.msk [vmem:[#allocation3 + $0x200] sm:$0xff] %vm306, %v2113
      %2146 = vst.msk [vmem:[#allocation3 + $0x228] sm:$0xff] %vm306, %v2114
      %2147 = vst.msk [vmem:[#allocation3 + $0x250] sm:$0xff] %vm306, %v2115
      %2148 = vst.msk [vmem:[#allocation3 + $0x278] sm:$0xff] %vm306, %v2116
      %2149 = vst.msk [vmem:[#allocation3 + $0x2a0] sm:$0xff] %vm306, %v2117
      %2150 = vst.msk [vmem:[#allocation3 + $0x2c8] sm:$0xff] %vm306, %v2118
      %2151 = vst.msk [vmem:[#allocation3 + $0x2f0] sm:$0xff] %vm306, %v2119
      %2152 = vst.msk [vmem:[#allocation3 + $0x318] sm:$0xff] %vm306, %v2120
      %2153 = vst.msk [vmem:[#allocation3 + $0x340] sm:$0xff] %vm306, %v2121
      %2154 = vst.msk [vmem:[#allocation3 + $0x368] sm:$0xff] %vm306, %v2122
      %2155 = vst.msk [vmem:[#allocation3 + $0x390] sm:$0xff] %vm306, %v2123
      %2156 = vst.msk [vmem:[#allocation3 + $0x3b8] sm:$0xff] %vm306, %v2124
      %2157 = vst.msk [vmem:[#allocation3 + $0x3e0] sm:$0xff] %vm306, %v2125
      %2158 = vst.msk [vmem:[#allocation3 + $0x408] sm:$0xff] %vm306, %v2126
      %2159 = vst.msk [vmem:[#allocation3 + $0x430] sm:$0xff] %vm306, %v2127
      %2160 = vst.msk [vmem:[#allocation3 + $0x458] sm:$0xff] %vm306, %v2128
      %2161 = vst.msk [vmem:[#allocation3 + $0x480] sm:$0xff] %vm306, %v2129
      %2162 = vst.msk [vmem:[#allocation3 + $0x4a8] sm:$0xff] %vm306, %v2130
      %2163 = vst.msk [vmem:[#allocation3 + $0x4d0] sm:$0xff] %vm306, %v2131
      %2164 = vst.msk [vmem:[#allocation3 + $0x4f8] sm:$0xff] %vm306, %v2132
      %v2165 = vld [vmem:[#allocation3] sm:$0xff]
      %v2166 = vld [vmem:[#allocation3 + $0x8] sm:$0xff]
      %v2167 = vld [vmem:[#allocation3 + $0x10] sm:$0xff]
      %v2168 = vld [vmem:[#allocation3 + $0x18] sm:$0xff]
      %v2169 = vld [vmem:[#allocation3 + $0x20] sm:$0xff]
      %v2170 = vld [vmem:[#allocation3 + $0x28] sm:$0xff]
      %v2171 = vld [vmem:[#allocation3 + $0x30] sm:$0xff]
      %v2172 = vld [vmem:[#allocation3 + $0x38] sm:$0xff]
      %v2173 = vld [vmem:[#allocation3 + $0x40] sm:$0xff]
      %v2174 = vld [vmem:[#allocation3 + $0x48] sm:$0xff]
      %v2175 = vld [vmem:[#allocation3 + $0x50] sm:$0xff]
      %v2176 = vld [vmem:[#allocation3 + $0x58] sm:$0xff]
      %v2177 = vld [vmem:[#allocation3 + $0x60] sm:$0xff]
      %v2178 = vld [vmem:[#allocation3 + $0x68] sm:$0xff]
      %v2179 = vld [vmem:[#allocation3 + $0x70] sm:$0xff]
      %v2180 = vld [vmem:[#allocation3 + $0x78] sm:$0xff]
      %v2181 = vld [vmem:[#allocation3 + $0x80] sm:$0xff]
      %v2182 = vld [vmem:[#allocation3 + $0x88] sm:$0xff]
      %v2183 = vld [vmem:[#allocation3 + $0x90] sm:$0xff]
      %v2184 = vld [vmem:[#allocation3 + $0x98] sm:$0xff]
      %v2185 = vld [vmem:[#allocation3 + $0xa0] sm:$0xff]
      %v2186 = vld [vmem:[#allocation3 + $0xa8] sm:$0xff]
      %v2187 = vld [vmem:[#allocation3 + $0xb0] sm:$0xff]
      %v2188 = vld [vmem:[#allocation3 + $0xb8] sm:$0xff]
      %v2189 = vld [vmem:[#allocation3 + $0xc0] sm:$0xff]
      %v2190 = vld [vmem:[#allocation3 + $0xc8] sm:$0xff]
      %v2191 = vld [vmem:[#allocation3 + $0xd0] sm:$0xff]
      %v2192 = vld [vmem:[#allocation3 + $0xd8] sm:$0xff]
      %v2193 = vld [vmem:[#allocation3 + $0xe0] sm:$0xff]
      %v2194 = vld [vmem:[#allocation3 + $0xe8] sm:$0xff]
      %v2195 = vld [vmem:[#allocation3 + $0xf0] sm:$0xff]
      %v2196 = vld [vmem:[#allocation3 + $0xf8] sm:$0xff]
      %v2197 = vld [vmem:[#allocation3 + $0x100] sm:$0xff]
      %v2198 = vld [vmem:[#allocation3 + $0x108] sm:$0xff]
      %v2199 = vld [vmem:[#allocation3 + $0x110] sm:$0xff]
      %v2200 = vld [vmem:[#allocation3 + $0x118] sm:$0xff]
      %v2201 = vld [vmem:[#allocation3 + $0x120] sm:$0xff]
      %v2202 = vld [vmem:[#allocation3 + $0x128] sm:$0xff]
      %v2203 = vld [vmem:[#allocation3 + $0x130] sm:$0xff]
      %v2204 = vld [vmem:[#allocation3 + $0x138] sm:$0xff]
      %v2205 = vld [vmem:[#allocation3 + $0x140] sm:$0xff]
      %v2206 = vld [vmem:[#allocation3 + $0x148] sm:$0xff]
      %v2207 = vld [vmem:[#allocation3 + $0x150] sm:$0xff]
      %v2208 = vld [vmem:[#allocation3 + $0x158] sm:$0xff]
      %v2209 = vld [vmem:[#allocation3 + $0x160] sm:$0xff]
      %v2210 = vld [vmem:[#allocation3 + $0x168] sm:$0xff]
      %v2211 = vld [vmem:[#allocation3 + $0x170] sm:$0xff]
      %v2212 = vld [vmem:[#allocation3 + $0x178] sm:$0xff]
      %v2213 = vld [vmem:[#allocation3 + $0x180] sm:$0xff]
      %v2214 = vld [vmem:[#allocation3 + $0x188] sm:$0xff]
      %v2215 = vld [vmem:[#allocation3 + $0x190] sm:$0xff]
      %v2216 = vld [vmem:[#allocation3 + $0x198] sm:$0xff]
      %v2217 = vld [vmem:[#allocation3 + $0x1a0] sm:$0xff]
      %v2218 = vld [vmem:[#allocation3 + $0x1a8] sm:$0xff]
      %v2219 = vld [vmem:[#allocation3 + $0x1b0] sm:$0xff]
      %v2220 = vld [vmem:[#allocation3 + $0x1b8] sm:$0xff]
      %v2221 = vld [vmem:[#allocation3 + $0x1c0] sm:$0xff]
      %v2222 = vld [vmem:[#allocation3 + $0x1c8] sm:$0xff]
      %v2223 = vld [vmem:[#allocation3 + $0x1d0] sm:$0xff]
      %v2224 = vld [vmem:[#allocation3 + $0x1d8] sm:$0xff]
      %v2225 = vld [vmem:[#allocation3 + $0x1e0] sm:$0xff]
      %v2226 = vld [vmem:[#allocation3 + $0x1e8] sm:$0xff]
      %v2227 = vld [vmem:[#allocation3 + $0x1f0] sm:$0xff]
      %v2228 = vld [vmem:[#allocation3 + $0x1f8] sm:$0xff]
      %v2229 = vld [vmem:[#allocation3 + $0x200] sm:$0xff]
      %v2230 = vld [vmem:[#allocation3 + $0x208] sm:$0xff]
      %v2231 = vld [vmem:[#allocation3 + $0x210] sm:$0xff]
      %v2232 = vld [vmem:[#allocation3 + $0x218] sm:$0xff]
      %v2233 = vld [vmem:[#allocation3 + $0x220] sm:$0xff]
      %v2234 = vld [vmem:[#allocation3 + $0x228] sm:$0xff]
      %v2235 = vld [vmem:[#allocation3 + $0x230] sm:$0xff]
      %v2236 = vld [vmem:[#allocation3 + $0x238] sm:$0xff]
      %v2237 = vld [vmem:[#allocation3 + $0x240] sm:$0xff]
      %v2238 = vld [vmem:[#allocation3 + $0x248] sm:$0xff]
      %v2239 = vld [vmem:[#allocation3 + $0x250] sm:$0xff]
      %v2240 = vld [vmem:[#allocation3 + $0x258] sm:$0xff]
      %v2241 = vld [vmem:[#allocation3 + $0x260] sm:$0xff]
      %v2242 = vld [vmem:[#allocation3 + $0x268] sm:$0xff]
      %v2243 = vld [vmem:[#allocation3 + $0x270] sm:$0xff]
      %v2244 = vld [vmem:[#allocation3 + $0x278] sm:$0xff]
      %v2245 = vld [vmem:[#allocation3 + $0x280] sm:$0xff]
      %v2246 = vld [vmem:[#allocation3 + $0x288] sm:$0xff]
      %v2247 = vld [vmem:[#allocation3 + $0x290] sm:$0xff]
      %v2248 = vld [vmem:[#allocation3 + $0x298] sm:$0xff]
      %v2249 = vld [vmem:[#allocation3 + $0x2a0] sm:$0xff]
      %v2250 = vld [vmem:[#allocation3 + $0x2a8] sm:$0xff]
      %v2251 = vld [vmem:[#allocation3 + $0x2b0] sm:$0xff]
      %v2252 = vld [vmem:[#allocation3 + $0x2b8] sm:$0xff]
      %v2253 = vld [vmem:[#allocation3 + $0x2c0] sm:$0xff]
      %v2254 = vld [vmem:[#allocation3 + $0x2c8] sm:$0xff]
      %v2255 = vld [vmem:[#allocation3 + $0x2d0] sm:$0xff]
      %v2256 = vld [vmem:[#allocation3 + $0x2d8] sm:$0xff]
      %v2257 = vld [vmem:[#allocation3 + $0x2e0] sm:$0xff]
      %v2258 = vld [vmem:[#allocation3 + $0x2e8] sm:$0xff]
      %v2259 = vld [vmem:[#allocation3 + $0x2f0] sm:$0xff]
      %v2260 = vld [vmem:[#allocation3 + $0x2f8] sm:$0xff]
      %v2261 = vld [vmem:[#allocation3 + $0x300] sm:$0xff]
      %v2262 = vld [vmem:[#allocation3 + $0x308] sm:$0xff]
      %v2263 = vld [vmem:[#allocation3 + $0x310] sm:$0xff]
      %v2264 = vld [vmem:[#allocation3 + $0x318] sm:$0xff]
      %v2265 = vld [vmem:[#allocation3 + $0x320] sm:$0xff]
      %v2266 = vld [vmem:[#allocation3 + $0x328] sm:$0xff]
      %v2267 = vld [vmem:[#allocation3 + $0x330] sm:$0xff]
      %v2268 = vld [vmem:[#allocation3 + $0x338] sm:$0xff]
      %v2269 = vld [vmem:[#allocation3 + $0x340] sm:$0xff]
      %v2270 = vld [vmem:[#allocation3 + $0x348] sm:$0xff]
      %v2271 = vld [vmem:[#allocation3 + $0x350] sm:$0xff]
      %v2272 = vld [vmem:[#allocation3 + $0x358] sm:$0xff]
      %v2273 = vld [vmem:[#allocation3 + $0x360] sm:$0xff]
      %v2274 = vld [vmem:[#allocation3 + $0x368] sm:$0xff]
      %v2275 = vld [vmem:[#allocation3 + $0x370] sm:$0xff]
      %v2276 = vld [vmem:[#allocation3 + $0x378] sm:$0xff]
      %v2277 = vld [vmem:[#allocation3 + $0x380] sm:$0xff]
      %v2278 = vld [vmem:[#allocation3 + $0x388] sm:$0xff]
      %v2279 = vld [vmem:[#allocation3 + $0x390] sm:$0xff]
      %v2280 = vld [vmem:[#allocation3 + $0x398] sm:$0xff]
      %v2281 = vld [vmem:[#allocation3 + $0x3a0] sm:$0xff]
      %v2282 = vld [vmem:[#allocation3 + $0x3a8] sm:$0xff]
      %v2283 = vld [vmem:[#allocation3 + $0x3b0] sm:$0xff]
      %v2284 = vld [vmem:[#allocation3 + $0x3b8] sm:$0xff]
      %v2285 = vld [vmem:[#allocation3 + $0x3c0] sm:$0xff]
      %v2286 = vld [vmem:[#allocation3 + $0x3c8] sm:$0xff]
      %v2287 = vld [vmem:[#allocation3 + $0x3d0] sm:$0xff]
      %v2288 = vld [vmem:[#allocation3 + $0x3d8] sm:$0xff]
      %v2289 = vld [vmem:[#allocation3 + $0x3e0] sm:$0xff]
      %v2290 = vld [vmem:[#allocation3 + $0x3e8] sm:$0xff]
      %v2291 = vld [vmem:[#allocation3 + $0x3f0] sm:$0xff]
      %v2292 = vld [vmem:[#allocation3 + $0x3f8] sm:$0xff]
      %v2293 = vld [vmem:[#allocation3 + $0x400] sm:$0xff]
      %v2294 = vld [vmem:[#allocation3 + $0x408] sm:$0xff]
      %v2295 = vld [vmem:[#allocation3 + $0x410] sm:$0xff]
      %v2296 = vld [vmem:[#allocation3 + $0x418] sm:$0xff]
      %v2297 = vld [vmem:[#allocation3 + $0x420] sm:$0xff]
      %v2298 = vld [vmem:[#allocation3 + $0x428] sm:$0xff]
      %v2299 = vld [vmem:[#allocation3 + $0x430] sm:$0xff]
      %v2300 = vld [vmem:[#allocation3 + $0x438] sm:$0xff]
      %v2301 = vld [vmem:[#allocation3 + $0x440] sm:$0xff]
      %v2302 = vld [vmem:[#allocation3 + $0x448] sm:$0xff]
      %v2303 = vld [vmem:[#allocation3 + $0x450] sm:$0xff]
      %v2304 = vld [vmem:[#allocation3 + $0x458] sm:$0xff]
      %v2305 = vld [vmem:[#allocation3 + $0x460] sm:$0xff]
      %v2306 = vld [vmem:[#allocation3 + $0x468] sm:$0xff]
      %v2307 = vld [vmem:[#allocation3 + $0x470] sm:$0xff]
      %v2308 = vld [vmem:[#allocation3 + $0x478] sm:$0xff]
      %v2309 = vld [vmem:[#allocation3 + $0x480] sm:$0xff]
      %v2310 = vld [vmem:[#allocation3 + $0x488] sm:$0xff]
      %v2311 = vld [vmem:[#allocation3 + $0x490] sm:$0xff]
      %v2312 = vld [vmem:[#allocation3 + $0x498] sm:$0xff]
      %v2313 = vld [vmem:[#allocation3 + $0x4a0] sm:$0xff]
      %v2314 = vld [vmem:[#allocation3 + $0x4a8] sm:$0xff]
      %v2315 = vld [vmem:[#allocation3 + $0x4b0] sm:$0xff]
      %v2316 = vld [vmem:[#allocation3 + $0x4b8] sm:$0xff]
      %v2317 = vld [vmem:[#allocation3 + $0x4c0] sm:$0xff]
      %v2318 = vld [vmem:[#allocation3 + $0x4c8] sm:$0xff]
      %v2319 = vld [vmem:[#allocation3 + $0x4d0] sm:$0xff]
      %v2320 = vld [vmem:[#allocation3 + $0x4d8] sm:$0xff]
      %v2321 = vld [vmem:[#allocation3 + $0x4e0] sm:$0xff]
      %v2322 = vld [vmem:[#allocation3 + $0x4e8] sm:$0xff]
      %v2323 = vld [vmem:[#allocation3 + $0x4f0] sm:$0xff]
      %v2324 = vld [vmem:[#allocation3 + $0x4f8] sm:$0xff]
      %v2325 = vld [vmem:[%s3] sm:$0xff]
      %v2326 = vld [vmem:[%s3 + $0x8] sm:$0xff]
      %v2327 = vld [vmem:[%s3 + $0x10] sm:$0xff]
      %v2328 = vld [vmem:[%s3 + $0x18] sm:$0xff]
      %v2329 = vld [vmem:[%s3 + $0x20] sm:$0xff]
      %v2330 = vld [vmem:[%s3 + $0x28] sm:$0xff]
      %v2331 = vld [vmem:[%s3 + $0x30] sm:$0xff]
      %v2332 = vld [vmem:[%s3 + $0x38] sm:$0xff]
      %v2333 = vld [vmem:[%s3 + $0x40] sm:$0xff]
      %v2334 = vld [vmem:[%s3 + $0x48] sm:$0xff]
      %v2335 = vld [vmem:[%s3 + $0x50] sm:$0xff]
      %v2336 = vld [vmem:[%s3 + $0x58] sm:$0xff]
      %v2337 = vld [vmem:[%s3 + $0x60] sm:$0xff]
      %v2338 = vld [vmem:[%s3 + $0x68] sm:$0xff]
      %v2339 = vld [vmem:[%s3 + $0x70] sm:$0xff]
      %v2340 = vld [vmem:[%s3 + $0x78] sm:$0xff]
      %v2341 = vld [vmem:[%s3 + $0x80] sm:$0xff]
      %v2342 = vld [vmem:[%s3 + $0x88] sm:$0xff]
      %v2343 = vld [vmem:[%s3 + $0x90] sm:$0xff]
      %v2344 = vld [vmem:[%s3 + $0x98] sm:$0xff]
      %v2345 = vld [vmem:[%s3 + $0xa0] sm:$0xff]
      %v2346 = vld [vmem:[%s3 + $0xa8] sm:$0xff]
      %v2347 = vld [vmem:[%s3 + $0xb0] sm:$0xff]
      %v2348 = vld [vmem:[%s3 + $0xb8] sm:$0xff]
      %v2349 = vld [vmem:[%s3 + $0xc0] sm:$0xff]
      %v2350 = vld [vmem:[%s3 + $0xc8] sm:$0xff]
      %v2351 = vld [vmem:[%s3 + $0xd0] sm:$0xff]
      %v2352 = vld [vmem:[%s3 + $0xd8] sm:$0xff]
      %v2353 = vld [vmem:[%s3 + $0xe0] sm:$0xff]
      %v2354 = vld [vmem:[%s3 + $0xe8] sm:$0xff]
      %v2355 = vld [vmem:[%s3 + $0xf0] sm:$0xff]
      %v2356 = vld [vmem:[%s3 + $0xf8] sm:$0xff]
      %v2357 = vld [vmem:[%s3 + $0x100] sm:$0xff]
      %v2358 = vld [vmem:[%s3 + $0x108] sm:$0xff]
      %v2359 = vld [vmem:[%s3 + $0x110] sm:$0xff]
      %v2360 = vld [vmem:[%s3 + $0x118] sm:$0xff]
      %v2361 = vld [vmem:[%s3 + $0x120] sm:$0xff]
      %v2362 = vld [vmem:[%s3 + $0x128] sm:$0xff]
      %v2363 = vld [vmem:[%s3 + $0x130] sm:$0xff]
      %v2364 = vld [vmem:[%s3 + $0x138] sm:$0xff]
      %v2365 = vld [vmem:[%s3 + $0x140] sm:$0xff]
      %v2366 = vld [vmem:[%s3 + $0x148] sm:$0xff]
      %v2367 = vld [vmem:[%s3 + $0x150] sm:$0xff]
      %v2368 = vld [vmem:[%s3 + $0x158] sm:$0xff]
      %v2369 = vld [vmem:[%s3 + $0x160] sm:$0xff]
      %v2370 = vld [vmem:[%s3 + $0x168] sm:$0xff]
      %v2371 = vld [vmem:[%s3 + $0x170] sm:$0xff]
      %v2372 = vld [vmem:[%s3 + $0x178] sm:$0xff]
      %v2373 = vld [vmem:[%s3 + $0x180] sm:$0xff]
      %v2374 = vld [vmem:[%s3 + $0x188] sm:$0xff]
      %v2375 = vld [vmem:[%s3 + $0x190] sm:$0xff]
      %v2376 = vld [vmem:[%s3 + $0x198] sm:$0xff]
      %v2377 = vld [vmem:[%s3 + $0x1a0] sm:$0xff]
      %v2378 = vld [vmem:[%s3 + $0x1a8] sm:$0xff]
      %v2379 = vld [vmem:[%s3 + $0x1b0] sm:$0xff]
      %v2380 = vld [vmem:[%s3 + $0x1b8] sm:$0xff]
      %v2381 = vld [vmem:[%s3 + $0x1c0] sm:$0xff]
      %v2382 = vld [vmem:[%s3 + $0x1c8] sm:$0xff]
      %v2383 = vld [vmem:[%s3 + $0x1d0] sm:$0xff]
      %v2384 = vld [vmem:[%s3 + $0x1d8] sm:$0xff]
      %v2385 = vld [vmem:[%s3 + $0x1e0] sm:$0xff]
      %v2386 = vld [vmem:[%s3 + $0x1e8] sm:$0xff]
      %v2387 = vld [vmem:[%s3 + $0x1f0] sm:$0xff]
      %v2388 = vld [vmem:[%s3 + $0x1f8] sm:$0xff]
      %v2389 = vld [vmem:[%s3 + $0x200] sm:$0xff]
      %v2390 = vld [vmem:[%s3 + $0x208] sm:$0xff]
      %v2391 = vld [vmem:[%s3 + $0x210] sm:$0xff]
      %v2392 = vld [vmem:[%s3 + $0x218] sm:$0xff]
      %v2393 = vld [vmem:[%s3 + $0x220] sm:$0xff]
      %v2394 = vld [vmem:[%s3 + $0x228] sm:$0xff]
      %v2395 = vld [vmem:[%s3 + $0x230] sm:$0xff]
      %v2396 = vld [vmem:[%s3 + $0x238] sm:$0xff]
      %v2397 = vld [vmem:[%s4] sm:$0x1]
      %v2399 = vlaneseq
      %v2400 = vshrl.u32 %v2399, 7
      %v2401 = vsub.s32 0, %v2400
      %v2402 = vrot.slane %v2397, %v2401
      %v2405 = vsel %vm306, %v2169, 0
      %v2408 = vsel %vm306, %v2174, 0
      %v2411 = vsel %vm306, %v2179, 0
      %v2414 = vsel %vm306, %v2184, 0
      %v2417 = vsel %vm306, %v2189, 0
      %v2420 = vsel %vm306, %v2194, 0
      %v2423 = vsel %vm306, %v2199, 0
      %v2426 = vsel %vm306, %v2204, 0
      %v2429 = vsel %vm306, %v2209, 0
      %v2432 = vsel %vm306, %v2214, 0
      %v2435 = vsel %vm306, %v2219, 0
      %v2438 = vsel %vm306, %v2224, 0
      %v2441 = vsel %vm306, %v2229, 0
      %v2444 = vsel %vm306, %v2234, 0
      %v2447 = vsel %vm306, %v2239, 0
      %v2450 = vsel %vm306, %v2244, 0
      %v2453 = vsel %vm306, %v2249, 0
      %v2456 = vsel %vm306, %v2254, 0
      %v2459 = vsel %vm306, %v2259, 0
      %v2462 = vsel %vm306, %v2264, 0
      %v2465 = vsel %vm306, %v2269, 0
      %v2468 = vsel %vm306, %v2274, 0
      %v2471 = vsel %vm306, %v2279, 0
      %v2474 = vsel %vm306, %v2284, 0
      %v2477 = vsel %vm306, %v2289, 0
      %v2480 = vsel %vm306, %v2294, 0
      %v2483 = vsel %vm306, %v2299, 0
      %v2486 = vsel %vm306, %v2304, 0
      %v2489 = vsel %vm306, %v2309, 0
      %v2492 = vsel %vm306, %v2314, 0
      %v2495 = vsel %vm306, %v2319, 0
      %v2498 = vsel %vm306, %v2324, 0
      %2500 = vmatprep.subr.mxu0 0.0
      %2501 = vmatpush1.msra.mxu0 %v2325
      %2502 = vmatprep.subr.mxu0 0.0
      %2503 = vmatpush1.msra.mxu0 %v2326
      %2504 = vmatprep.subr.mxu0 0.0
      %2505 = vmatpush1.msra.mxu0 %v2327
      %2506 = vmatprep.subr.mxu0 0.0
      %2507 = vmatpush1.msra.mxu0 %v2328
      %2508 = vmatprep.subr.mxu0 0.0
      %2509 = vmatpush1.msra.mxu0 %v2329
      %2510 = vmatprep.subr.mxu0 0.0
      %2511 = vmatpush1.msra.mxu0 %v2330
      %2512 = vmatprep.subr.mxu0 0.0
      %2513 = vmatpush1.msra.mxu0 %v2331
      %2514 = vmatprep.subr.mxu0 0.0
      %2515 = vmatpush1.msra.mxu0 %v2332
      %2516 = vmatprep.subr.mxu0 0.0
      %2517 = vmatpush1.msra.mxu0 %v2333
      %2518 = vmatprep.subr.mxu0 0.0
      %2519 = vmatpush1.msra.mxu0 %v2334
      %2520 = vmatprep.subr.mxu0 0.0
      %2521 = vmatpush1.msra.mxu0 %v2335
      %2522 = vmatprep.subr.mxu0 0.0
      %2523 = vmatpush1.msra.mxu0 %v2336
      %2524 = vmatprep.subr.mxu0 0.0
      %2525 = vmatpush1.msra.mxu0 %v2337
      %2526 = vmatprep.subr.mxu0 0.0
      %2527 = vmatpush1.msra.mxu0 %v2338
      %2528 = vmatprep.subr.mxu0 0.0
      %2529 = vmatpush1.msra.mxu0 %v2339
      %2530 = vmatprep.subr.mxu0 0.0
      %2531 = vmatpush1.msra.mxu0 %v2340
      %2532 = vmatprep.subr.mxu0 0.0
      %2533 = vmatpush1.msra.mxu0 %v2341
      %2534 = vmatprep.subr.mxu0 0.0
      %2535 = vmatpush1.msra.mxu0 %v2342
      %2536 = vmatprep.subr.mxu0 0.0
      %2537 = vmatpush1.msra.mxu0 %v2343
      %2538 = vmatprep.subr.mxu0 0.0
      %2539 = vmatpush1.msra.mxu0 %v2344
      %2540 = vmatprep.subr.mxu0 0.0
      %2541 = vmatpush1.msra.mxu0 %v2345
      %2542 = vmatprep.subr.mxu0 0.0
      %2543 = vmatpush1.msra.mxu0 %v2346
      %2544 = vmatprep.subr.mxu0 0.0
      %2545 = vmatpush1.msra.mxu0 %v2347
      %2546 = vmatprep.subr.mxu0 0.0
      %2547 = vmatpush1.msra.mxu0 %v2348
      %2548 = vmatprep.subr.mxu0 0.0
      %2549 = vmatpush1.msra.mxu0 %v2349
      %2550 = vmatprep.subr.mxu0 0.0
      %2551 = vmatpush1.msra.mxu0 %v2350
      %2552 = vmatprep.subr.mxu0 0.0
      %2553 = vmatpush1.msra.mxu0 %v2351
      %2554 = vmatprep.subr.mxu0 0.0
      %2555 = vmatpush1.msra.mxu0 %v2352
      %2556 = vmatprep.subr.mxu0 0.0
      %2557 = vmatpush1.msra.mxu0 %v2353
      %2558 = vmatprep.subr.mxu0 0.0
      %2559 = vmatpush1.msra.mxu0 %v2354
      %2560 = vmatprep.subr.mxu0 0.0
      %2561 = vmatpush1.msra.mxu0 %v2355
      %2562 = vmatprep.subr.mxu0 0.0
      %2563 = vmatpush1.msra.mxu0 %v2356
      %2564 = vmatprep.mubr.f32.mxu0 %v2166
      %2565 = vmatmul.mubr.f32.gmra.mrb[0].mxu0 %v2165
      %v2566 = vpop.f32.mrb[0].mxu0
      %v2567 = vadd.f32 %v2402, %v2566
      %v2568 = vpop.f32.mrb[0].mxu0
      %2569 = vmatprep.mubr.f32.mxu0 %v2171
      %2570 = vmatmul.mubr.f32.gmra.mrb[0].mxu0 %v2170
      %v2571 = vpop.f32.mrb[0].mxu0
      %v2572 = vadd.f32 %v2402, %v2571
      %v2573 = vpop.f32.mrb[0].mxu0
      %2574 = vmatprep.mubr.f32.mxu0 %v2176
      %2575 = vmatmul.mubr.f32.gmra.mrb[0].mxu0 %v2175
      %v2576 = vpop.f32.mrb[0].mxu0
      %v2577 = vadd.f32 %v2402, %v2576
      %v2578 = vpop.f32.mrb[0].mxu0
      %2579 = vmatprep.mubr.f32.mxu0 %v2181
      %2580 = vmatmul.mubr.f32.gmra.mrb[0].mxu0 %v2180
      %v2581 = vpop.f32.mrb[0].mxu0
      %v2582 = vadd.f32 %v2402, %v2581
      %v2583 = vpop.f32.mrb[0].mxu0
      %2584 = vmatprep.mubr.f32.mxu0 %v2186
      %2585 = vmatmul.mubr.f32.gmra.mrb[0].mxu0 %v2185
      %v2586 = vpop.f32.mrb[0].mxu0
      %v2587 = vadd.f32 %v2402, %v2586
      %v2588 = vpop.f32.mrb[0].mxu0
      %2589 = vmatprep.mubr.f32.mxu0 %v2191
      %2590 = vmatmul.mubr.f32.gmra.mrb[0].mxu0 %v2190
      %v2591 = vpop.f32.mrb[0].mxu0
      %v2592 = vadd.f32 %v2402, %v2591
      %v2593 = vpop.f32.mrb[0].mxu0
      %2594 = vmatprep.mubr.f32.mxu0 %v2196
      %2595 = vmatmul.mubr.f32.gmra.mrb[0].mxu0 %v2195
      %v2596 = vpop.f32.mrb[0].mxu0
      %v2597 = vadd.f32 %v2402, %v2596
      %v2598 = vpop.f32.mrb[0].mxu0
      %2599 = vmatprep.mubr.f32.mxu0 %v2201
      %2600 = vmatmul.mubr.f32.gmra.mrb[0].mxu0 %v2200
      %v2601 = vpop.f32.mrb[0].mxu0
      %v2602 = vadd.f32 %v2402, %v2601
      %v2603 = vpop.f32.mrb[0].mxu0
      %2604 = vmatprep.mubr.f32.mxu0 %v2206
      %2605 = vmatmul.mubr.f32.gmra.mrb[0].mxu0 %v2205
      %v2606 = vpop.f32.mrb[0].mxu0
      %v2607 = vadd.f32 %v2402, %v2606
      %v2608 = vpop.f32.mrb[0].mxu0
      %2609 = vmatprep.mubr.f32.mxu0 %v2211
      %2610 = vmatmul.mubr.f32.gmra.mrb[0].mxu0 %v2210
      %v2611 = vpop.f32.mrb[0].mxu0
      %v2612 = vadd.f32 %v2402, %v2611
      %v2613 = vpop.f32.mrb[0].mxu0
      %2614 = vmatprep.mubr.f32.mxu0 %v2216
      %2615 = vmatmul.mubr.f32.gmra.mrb[0].mxu0 %v2215
      %v2616 = vpop.f32.mrb[0].mxu0
      %v2617 = vadd.f32 %v2402, %v2616
      %v2618 = vpop.f32.mrb[0].mxu0
      %2619 = vmatprep.mubr.f32.mxu0 %v2221
      %2620 = vmatmul.mubr.f32.gmra.mrb[0].mxu0 %v2220
      %v2621 = vpop.f32.mrb[0].mxu0
      %v2622 = vadd.f32 %v2402, %v2621
      %v2623 = vpop.f32.mrb[0].mxu0
      %2624 = vmatprep.mubr.f32.mxu0 %v2226
      %2625 = vmatmul.mubr.f32.gmra.mrb[0].mxu0 %v2225
      %v2626 = vpop.f32.mrb[0].mxu0
      %v2627 = vadd.f32 %v2402, %v2626
      %v2628 = vpop.f32.mrb[0].mxu0
      %2629 = vmatprep.mubr.f32.mxu0 %v2231
      %2630 = vmatmul.mubr.f32.gmra.mrb[0].mxu0 %v2230
      %v2631 = vpop.f32.mrb[0].mxu0
      %v2632 = vadd.f32 %v2402, %v2631
      %v2633 = vpop.f32.mrb[0].mxu0
      %2634 = vmatprep.mubr.f32.mxu0 %v2236
      %2635 = vmatmul.mubr.f32.gmra.mrb[0].mxu0 %v2235
      %v2636 = vpop.f32.mrb[0].mxu0
      %v2637 = vadd.f32 %v2402, %v2636
      %v2638 = vpop.f32.mrb[0].mxu0
      %2639 = vmatprep.mubr.f32.mxu0 %v2241
      %2640 = vmatmul.mubr.f32.gmra.mrb[0].mxu0 %v2240
      %v2641 = vpop.f32.mrb[0].mxu0
      %v2642 = vadd.f32 %v2402, %v2641
      %v2643 = vpop.f32.mrb[0].mxu0
      %2644 = vmatprep.mubr.f32.mxu0 %v2246
      %2645 = vmatmul.mubr.f32.gmra.mrb[0].mxu0 %v2245
      %v2646 = vpop.f32.mrb[0].mxu0
      %v2647 = vadd.f32 %v2402, %v2646
      %v2648 = vpop.f32.mrb[0].mxu0
      %2649 = vmatprep.mubr.f32.mxu0 %v2251
      %2650 = vmatmul.mubr.f32.gmra.mrb[0].mxu0 %v2250
      %v2651 = vpop.f32.mrb[0].mxu0
      %v2652 = vadd.f32 %v2402, %v2651
      %v2653 = vpop.f32.mrb[0].mxu0
      %2654 = vmatprep.mubr.f32.mxu0 %v2256
      %2655 = vmatmul.mubr.f32.gmra.mrb[0].mxu0 %v2255
      %v2656 = vpop.f32.mrb[0].mxu0
      %v2657 = vadd.f32 %v2402, %v2656
      %v2658 = vpop.f32.mrb[0].mxu0
      %2659 = vmatprep.mubr.f32.mxu0 %v2261
      %2660 = vmatmul.mubr.f32.gmra.mrb[0].mxu0 %v2260
      %v2661 = vpop.f32.mrb[0].mxu0
      %v2662 = vadd.f32 %v2402, %v2661
      %v2663 = vpop.f32.mrb[0].mxu0
      %2664 = vmatprep.mubr.f32.mxu0 %v2266
      %2665 = vmatmul.mubr.f32.gmra.mrb[0].mxu0 %v2265
      %v2666 = vpop.f32.mrb[0].mxu0
      %v2667 = vadd.f32 %v2402, %v2666
      %v2668 = vpop.f32.mrb[0].mxu0
      %2669 = vmatprep.mubr.f32.mxu0 %v2271
      %2670 = vmatmul.mubr.f32.gmra.mrb[0].mxu0 %v2270
      %v2671 = vpop.f32.mrb[0].mxu0
      %v2672 = vadd.f32 %v2402, %v2671
      %v2673 = vpop.f32.mrb[0].mxu0
      %2674 = vmatprep.mubr.f32.mxu0 %v2276
      %2675 = vmatmul.mubr.f32.gmra.mrb[0].mxu0 %v2275
      %v2676 = vpop.f32.mrb[0].mxu0
      %v2677 = vadd.f32 %v2402, %v2676
      %v2678 = vpop.f32.mrb[0].mxu0
      %2679 = vmatprep.mubr.f32.mxu0 %v2281
      %2680 = vmatmul.mubr.f32.gmra.mrb[0].mxu0 %v2280
      %v2681 = vpop.f32.mrb[0].mxu0
      %v2682 = vadd.f32 %v2402, %v2681
      %v2683 = vpop.f32.mrb[0].mxu0
      %2684 = vmatprep.mubr.f32.mxu0 %v2286
      %2685 = vmatmul.mubr.f32.gmra.mrb[0].mxu0 %v2285
      %v2686 = vpop.f32.mrb[0].mxu0
      %v2687 = vadd.f32 %v2402, %v2686
      %v2688 = vpop.f32.mrb[0].mxu0
      %2689 = vmatprep.mubr.f32.mxu0 %v2291
      %2690 = vmatmul.mubr.f32.gmra.mrb[0].mxu0 %v2290
      %v2691 = vpop.f32.mrb[0].mxu0
      %v2692 = vadd.f32 %v2402, %v2691
      %v2693 = vpop.f32.mrb[0].mxu0
      %2694 = vmatprep.mubr.f32.mxu0 %v2296
      %2695 = vmatmul.mubr.f32.gmra.mrb[0].mxu0 %v2295
      %v2696 = vpop.f32.mrb[0].mxu0
      %v2697 = vadd.f32 %v2402, %v2696
      %v2698 = vpop.f32.mrb[0].mxu0
      %2699 = vmatprep.mubr.f32.mxu0 %v2301
      %2700 = vmatmul.mubr.f32.gmra.mrb[0].mxu0 %v2300
      %v2701 = vpop.f32.mrb[0].mxu0
      %v2702 = vadd.f32 %v2402, %v2701
      %v2703 = vpop.f32.mrb[0].mxu0
      %2704 = vmatprep.mubr.f32.mxu0 %v2306
      %2705 = vmatmul.mubr.f32.gmra.mrb[0].mxu0 %v2305
      %v2706 = vpop.f32.mrb[0].mxu0
      %v2707 = vadd.f32 %v2402, %v2706
      %v2708 = vpop.f32.mrb[0].mxu0
      %2709 = vmatprep.mubr.f32.mxu0 %v2311
      %2710 = vmatmul.mubr.f32.gmra.mrb[0].mxu0 %v2310
      %v2711 = vpop.f32.mrb[0].mxu0
      %v2712 = vadd.f32 %v2402, %v2711
      %v2713 = vpop.f32.mrb[0].mxu0
      %2714 = vmatprep.mubr.f32.mxu0 %v2316
      %2715 = vmatmul.mubr.f32.gmra.mrb[0].mxu0 %v2315
      %v2716 = vpop.f32.mrb[0].mxu0
      %v2717 = vadd.f32 %v2402, %v2716
      %v2718 = vpop.f32.mrb[0].mxu0
      %2719 = vmatprep.mubr.f32.mxu0 %v2321
      %2720 = vmatmul.mubr.f32.gmra.mrb[0].mxu0 %v2320
      %v2721 = vpop.f32.mrb[0].mxu0
      %v2722 = vadd.f32 %v2402, %v2721
      %v2723 = vpop.f32.mrb[0].mxu0
      %2724 = vdwg.mxu0
      %2725 = vmatprep.subr.mxu0 0.0
      %2726 = vmatpush1.msra.mxu0 %v2357
      %2727 = vmatprep.subr.mxu0 0.0
      %2728 = vmatpush1.msra.mxu0 %v2358
      %2729 = vmatprep.subr.mxu0 0.0
      %2730 = vmatpush1.msra.mxu0 %v2359
      %2731 = vmatprep.subr.mxu0 0.0
      %2732 = vmatpush1.msra.mxu0 %v2360
      %2733 = vmatprep.subr.mxu0 0.0
      %2734 = vmatpush1.msra.mxu0 %v2361
      %2735 = vmatprep.subr.mxu0 0.0
      %2736 = vmatpush1.msra.mxu0 %v2362
      %2737 = vmatprep.subr.mxu0 0.0
      %2738 = vmatpush1.msra.mxu0 %v2363
      %2739 = vmatprep.subr.mxu0 0.0
      %2740 = vmatpush1.msra.mxu0 %v2364
      %2741 = vmatprep.subr.mxu0 0.0
      %2742 = vmatpush1.msra.mxu0 %v2365
      %2743 = vmatprep.subr.mxu0 0.0
      %2744 = vmatpush1.msra.mxu0 %v2366
      %2745 = vmatprep.subr.mxu0 0.0
      %2746 = vmatpush1.msra.mxu0 %v2367
      %2747 = vmatprep.subr.mxu0 0.0
      %2748 = vmatpush1.msra.mxu0 %v2368
      %2749 = vmatprep.subr.mxu0 0.0
      %2750 = vmatpush1.msra.mxu0 %v2369
      %2751 = vmatprep.subr.mxu0 0.0
      %2752 = vmatpush1.msra.mxu0 %v2370
      %2753 = vmatprep.subr.mxu0 0.0
      %2754 = vmatpush1.msra.mxu0 %v2371
      %2755 = vmatprep.subr.mxu0 0.0
      %2756 = vmatpush1.msra.mxu0 %v2372
      %2757 = vmatprep.subr.mxu0 0.0
      %2758 = vmatpush1.msra.mxu0 %v2373
      %2759 = vmatprep.subr.mxu0 0.0
      %2760 = vmatpush1.msra.mxu0 %v2374
      %2761 = vmatprep.subr.mxu0 0.0
      %2762 = vmatpush1.msra.mxu0 %v2375
      %2763 = vmatprep.subr.mxu0 0.0
      %2764 = vmatpush1.msra.mxu0 %v2376
      %2765 = vmatprep.subr.mxu0 0.0
      %2766 = vmatpush1.msra.mxu0 %v2377
      %2767 = vmatprep.subr.mxu0 0.0
      %2768 = vmatpush1.msra.mxu0 %v2378
      %2769 = vmatprep.subr.mxu0 0.0
      %2770 = vmatpush1.msra.mxu0 %v2379
      %2771 = vmatprep.subr.mxu0 0.0
      %2772 = vmatpush1.msra.mxu0 %v2380
      %2773 = vmatprep.subr.mxu0 0.0
      %2774 = vmatpush1.msra.mxu0 %v2381
      %2775 = vmatprep.subr.mxu0 0.0
      %2776 = vmatpush1.msra.mxu0 %v2382
      %2777 = vmatprep.subr.mxu0 0.0
      %2778 = vmatpush1.msra.mxu0 %v2383
      %2779 = vmatprep.subr.mxu0 0.0
      %2780 = vmatpush1.msra.mxu0 %v2384
      %2781 = vmatprep.subr.mxu0 0.0
      %2782 = vmatpush1.msra.mxu0 %v2385
      %2783 = vmatprep.subr.mxu0 0.0
      %2784 = vmatpush1.msra.mxu0 %v2386
      %2785 = vmatprep.subr.mxu0 0.0
      %2786 = vmatpush1.msra.mxu0 %v2387
      %2787 = vmatprep.subr.mxu0 0.0
      %2788 = vmatpush1.msra.mxu0 %v2388
      %2789 = vmatprep.mubr.f32.mxu0 %v2168
      %2790 = vmatmul.mubr.f32.gmra.mrb[0].mxu0 %v2167
      %v2791 = vpop.f32.mrb[0].mxu0
      %v2792 = vadd.f32 %v2567, %v2791
      %v2793 = vpop.f32.mrb[0].mxu0
      %2794 = vmatprep.mubr.f32.mxu0 %v2173
      %2795 = vmatmul.mubr.f32.gmra.mrb[0].mxu0 %v2172
      %v2796 = vpop.f32.mrb[0].mxu0
      %v2797 = vadd.f32 %v2572, %v2796
      %v2798 = vpop.f32.mrb[0].mxu0
      %2799 = vmatprep.mubr.f32.mxu0 %v2178
      %2800 = vmatmul.mubr.f32.gmra.mrb[0].mxu0 %v2177
      %v2801 = vpop.f32.mrb[0].mxu0
      %v2802 = vadd.f32 %v2577, %v2801
      %v2803 = vpop.f32.mrb[0].mxu0
      %2804 = vmatprep.mubr.f32.mxu0 %v2183
      %2805 = vmatmul.mubr.f32.gmra.mrb[0].mxu0 %v2182
      %v2806 = vpop.f32.mrb[0].mxu0
      %v2807 = vadd.f32 %v2582, %v2806
      %v2808 = vpop.f32.mrb[0].mxu0
      %2809 = vmatprep.mubr.f32.mxu0 %v2188
      %2810 = vmatmul.mubr.f32.gmra.mrb[0].mxu0 %v2187
      %v2811 = vpop.f32.mrb[0].mxu0
      %v2812 = vadd.f32 %v2587, %v2811
      %v2813 = vpop.f32.mrb[0].mxu0
      %2814 = vmatprep.mubr.f32.mxu0 %v2193
      %2815 = vmatmul.mubr.f32.gmra.mrb[0].mxu0 %v2192
      %v2816 = vpop.f32.mrb[0].mxu0
      %v2817 = vadd.f32 %v2592, %v2816
      %v2818 = vpop.f32.mrb[0].mxu0
      %2819 = vmatprep.mubr.f32.mxu0 %v2198
      %2820 = vmatmul.mubr.f32.gmra.mrb[0].mxu0 %v2197
      %v2821 = vpop.f32.mrb[0].mxu0
      %v2822 = vadd.f32 %v2597, %v2821
      %v2823 = vpop.f32.mrb[0].mxu0
      %2824 = vmatprep.mubr.f32.mxu0 %v2203
      %2825 = vmatmul.mubr.f32.gmra.mrb[0].mxu0 %v2202
      %v2826 = vpop.f32.mrb[0].mxu0
      %v2827 = vadd.f32 %v2602, %v2826
      %v2828 = vpop.f32.mrb[0].mxu0
      %2829 = vmatprep.mubr.f32.mxu0 %v2208
      %2830 = vmatmul.mubr.f32.gmra.mrb[0].mxu0 %v2207
      %v2831 = vpop.f32.mrb[0].mxu0
      %v2832 = vadd.f32 %v2607, %v2831
      %v2833 = vpop.f32.mrb[0].mxu0
      %2834 = vmatprep.mubr.f32.mxu0 %v2213
      %2835 = vmatmul.mubr.f32.gmra.mrb[0].mxu0 %v2212
      %v2836 = vpop.f32.mrb[0].mxu0
      %v2837 = vadd.f32 %v2612, %v2836
      %v2838 = vpop.f32.mrb[0].mxu0
      %2839 = vmatprep.mubr.f32.mxu0 %v2218
      %2840 = vmatmul.mubr.f32.gmra.mrb[0].mxu0 %v2217
      %v2841 = vpop.f32.mrb[0].mxu0
      %v2842 = vadd.f32 %v2617, %v2841
      %v2843 = vpop.f32.mrb[0].mxu0
      %2844 = vmatprep.mubr.f32.mxu0 %v2223
      %2845 = vmatmul.mubr.f32.gmra.mrb[0].mxu0 %v2222
      %v2846 = vpop.f32.mrb[0].mxu0
      %v2847 = vadd.f32 %v2622, %v2846
      %v2848 = vpop.f32.mrb[0].mxu0
      %2849 = vmatprep.mubr.f32.mxu0 %v2228
      %2850 = vmatmul.mubr.f32.gmra.mrb[0].mxu0 %v2227
      %v2851 = vpop.f32.mrb[0].mxu0
      %v2852 = vadd.f32 %v2627, %v2851
      %v2853 = vpop.f32.mrb[0].mxu0
      %2854 = vmatprep.mubr.f32.mxu0 %v2233
      %2855 = vmatmul.mubr.f32.gmra.mrb[0].mxu0 %v2232
      %v2856 = vpop.f32.mrb[0].mxu0
      %v2857 = vadd.f32 %v2632, %v2856
      %v2858 = vpop.f32.mrb[0].mxu0
      %2859 = vmatprep.mubr.f32.mxu0 %v2238
      %2860 = vmatmul.mubr.f32.gmra.mrb[0].mxu0 %v2237
      %v2861 = vpop.f32.mrb[0].mxu0
      %v2862 = vadd.f32 %v2637, %v2861
      %v2863 = vpop.f32.mrb[0].mxu0
      %2864 = vmatprep.mubr.f32.mxu0 %v2243
      %2865 = vmatmul.mubr.f32.gmra.mrb[0].mxu0 %v2242
      %v2866 = vpop.f32.mrb[0].mxu0
      %v2867 = vadd.f32 %v2642, %v2866
      %v2868 = vpop.f32.mrb[0].mxu0
      %2869 = vmatprep.mubr.f32.mxu0 %v2248
      %2870 = vmatmul.mubr.f32.gmra.mrb[0].mxu0 %v2247
      %v2871 = vpop.f32.mrb[0].mxu0
      %v2872 = vadd.f32 %v2647, %v2871
      %v2873 = vpop.f32.mrb[0].mxu0
      %2874 = vmatprep.mubr.f32.mxu0 %v2253
      %2875 = vmatmul.mubr.f32.gmra.mrb[0].mxu0 %v2252
      %v2876 = vpop.f32.mrb[0].mxu0
      %v2877 = vadd.f32 %v2652, %v2876
      %v2878 = vpop.f32.mrb[0].mxu0
      %2879 = vmatprep.mubr.f32.mxu0 %v2258
      %2880 = vmatmul.mubr.f32.gmra.mrb[0].mxu0 %v2257
      %v2881 = vpop.f32.mrb[0].mxu0
      %v2882 = vadd.f32 %v2657, %v2881
      %v2883 = vpop.f32.mrb[0].mxu0
      %2884 = vmatprep.mubr.f32.mxu0 %v2263
      %2885 = vmatmul.mubr.f32.gmra.mrb[0].mxu0 %v2262
      %v2886 = vpop.f32.mrb[0].mxu0
      %v2887 = vadd.f32 %v2662, %v2886
      %v2888 = vpop.f32.mrb[0].mxu0
      %2889 = vmatprep.mubr.f32.mxu0 %v2268
      %2890 = vmatmul.mubr.f32.gmra.mrb[0].mxu0 %v2267
      %v2891 = vpop.f32.mrb[0].mxu0
      %v2892 = vadd.f32 %v2667, %v2891
      %v2893 = vpop.f32.mrb[0].mxu0
      %2894 = vmatprep.mubr.f32.mxu0 %v2273
      %2895 = vmatmul.mubr.f32.gmra.mrb[0].mxu0 %v2272
      %v2896 = vpop.f32.mrb[0].mxu0
      %v2897 = vadd.f32 %v2672, %v2896
      %v2898 = vpop.f32.mrb[0].mxu0
      %2899 = vmatprep.mubr.f32.mxu0 %v2278
      %2900 = vmatmul.mubr.f32.gmra.mrb[0].mxu0 %v2277
      %v2901 = vpop.f32.mrb[0].mxu0
      %v2902 = vadd.f32 %v2677, %v2901
      %v2903 = vpop.f32.mrb[0].mxu0
      %2904 = vmatprep.mubr.f32.mxu0 %v2283
      %2905 = vmatmul.mubr.f32.gmra.mrb[0].mxu0 %v2282
      %v2906 = vpop.f32.mrb[0].mxu0
      %v2907 = vadd.f32 %v2682, %v2906
      %v2908 = vpop.f32.mrb[0].mxu0
      %2909 = vmatprep.mubr.f32.mxu0 %v2288
      %2910 = vmatmul.mubr.f32.gmra.mrb[0].mxu0 %v2287
      %v2911 = vpop.f32.mrb[0].mxu0
      %v2912 = vadd.f32 %v2687, %v2911
      %v2913 = vpop.f32.mrb[0].mxu0
      %2914 = vmatprep.mubr.f32.mxu0 %v2293
      %2915 = vmatmul.mubr.f32.gmra.mrb[0].mxu0 %v2292
      %v2916 = vpop.f32.mrb[0].mxu0
      %v2917 = vadd.f32 %v2692, %v2916
      %v2918 = vpop.f32.mrb[0].mxu0
      %2919 = vmatprep.mubr.f32.mxu0 %v2298
      %2920 = vmatmul.mubr.f32.gmra.mrb[0].mxu0 %v2297
      %v2921 = vpop.f32.mrb[0].mxu0
      %v2922 = vadd.f32 %v2697, %v2921
      %v2923 = vpop.f32.mrb[0].mxu0
      %2924 = vmatprep.mubr.f32.mxu0 %v2303
      %2925 = vmatmul.mubr.f32.gmra.mrb[0].mxu0 %v2302
      %v2926 = vpop.f32.mrb[0].mxu0
      %v2927 = vadd.f32 %v2702, %v2926
      %v2928 = vpop.f32.mrb[0].mxu0
      %2929 = vmatprep.mubr.f32.mxu0 %v2308
      %2930 = vmatmul.mubr.f32.gmra.mrb[0].mxu0 %v2307
      %v2931 = vpop.f32.mrb[0].mxu0
      %v2932 = vadd.f32 %v2707, %v2931
      %v2933 = vpop.f32.mrb[0].mxu0
      %2934 = vmatprep.mubr.f32.mxu0 %v2313
      %2935 = vmatmul.mubr.f32.gmra.mrb[0].mxu0 %v2312
      %v2936 = vpop.f32.mrb[0].mxu0
      %v2937 = vadd.f32 %v2712, %v2936
      %v2938 = vpop.f32.mrb[0].mxu0
      %2939 = vmatprep.mubr.f32.mxu0 %v2318
      %2940 = vmatmul.mubr.f32.gmra.mrb[0].mxu0 %v2317
      %v2941 = vpop.f32.mrb[0].mxu0
      %v2942 = vadd.f32 %v2717, %v2941
      %v2943 = vpop.f32.mrb[0].mxu0
      %2944 = vmatprep.mubr.f32.mxu0 %v2323
      %2945 = vmatmul.mubr.f32.gmra.mrb[0].mxu0 %v2322
      %v2946 = vpop.f32.mrb[0].mxu0
      %v2947 = vadd.f32 %v2722, %v2946
      %v2948 = vpop.f32.mrb[0].mxu0
      %2949 = vdwg.mxu0
      %2950 = vmatprep.subr.mxu0 0.0
      %2951 = vmatpush1.msra.mxu0 %v2389
      %2952 = vmatprep.subr.mxu0 0.0
      %2953 = vmatpush1.msra.mxu0 %v2390
      %2954 = vmatprep.subr.mxu0 0.0
      %2955 = vmatpush1.msra.mxu0 %v2391
      %2956 = vmatprep.subr.mxu0 0.0
      %2957 = vmatpush1.msra.mxu0 %v2392
      %2958 = vmatprep.subr.mxu0 0.0
      %2959 = vmatpush1.msra.mxu0 %v2393
      %2960 = vmatprep.subr.mxu0 0.0
      %2961 = vmatpush1.msra.mxu0 %v2394
      %2962 = vmatprep.subr.mxu0 0.0
      %2963 = vmatpush1.msra.mxu0 %v2395
      %2964 = vmatprep.subr.mxu0 0.0
      %2965 = vmatpush1.msra.mxu0 %v2396
      %2966 = vmatprep.subr.mxu0 0.0
      %2967 = vmatpush1.msra.mxu0 0.0
      %2968 = vmatprep.subr.mxu0 0.0
      %2969 = vmatpush1.msra.mxu0 0.0
      %2970 = vmatprep.subr.mxu0 0.0
      %2971 = vmatpush1.msra.mxu0 0.0
      %2972 = vmatprep.subr.mxu0 0.0
      %2973 = vmatpush1.msra.mxu0 0.0
      %2974 = vmatprep.subr.mxu0 0.0
      %2975 = vmatpush1.msra.mxu0 0.0
      %2976 = vmatprep.subr.mxu0 0.0
      %2977 = vmatpush1.msra.mxu0 0.0
      %2978 = vmatprep.subr.mxu0 0.0
      %2979 = vmatpush1.msra.mxu0 0.0
      %2980 = vmatprep.subr.mxu0 0.0
      %2981 = vmatpush1.msra.mxu0 0.0
      %2982 = vmatprep.subr.mxu0 0.0
      %2983 = vmatpush1.msra.mxu0 0.0
      %2984 = vmatprep.subr.mxu0 0.0
      %2985 = vmatpush1.msra.mxu0 0.0
      %2986 = vmatprep.subr.mxu0 0.0
      %2987 = vmatpush1.msra.mxu0 0.0
      %2988 = vmatprep.subr.mxu0 0.0
      %2989 = vmatpush1.msra.mxu0 0.0
      %2990 = vmatprep.subr.mxu0 0.0
      %2991 = vmatpush1.msra.mxu0 0.0
      %2992 = vmatprep.subr.mxu0 0.0
      %2993 = vmatpush1.msra.mxu0 0.0
      %2994 = vmatprep.subr.mxu0 0.0
      %2995 = vmatpush1.msra.mxu0 0.0
      %2996 = vmatprep.subr.mxu0 0.0
      %2997 = vmatpush1.msra.mxu0 0.0
      %2998 = vmatprep.subr.mxu0 0.0
      %2999 = vmatpush1.msra.mxu0 0.0
      %3000 = vmatprep.subr.mxu0 0.0
      %3001 = vmatpush1.msra.mxu0 0.0
      %3002 = vmatprep.subr.mxu0 0.0
      %3003 = vmatpush1.msra.mxu0 0.0
      %3004 = vmatprep.subr.mxu0 0.0
      %3005 = vmatpush1.msra.mxu0 0.0
      %3006 = vmatprep.subr.mxu0 0.0
      %3007 = vmatpush1.msra.mxu0 0.0
      %3008 = vmatprep.subr.mxu0 0.0
      %3009 = vmatpush1.msra.mxu0 0.0
      %3010 = vmatprep.subr.mxu0 0.0
      %3011 = vmatpush1.msra.mxu0 0.0
      %3012 = vmatprep.subr.mxu0 0.0
      %3013 = vmatpush1.msra.mxu0 0.0
      %3014 = vmatprep.mubr.f32.mxu0 0.0
      %3015 = vmatmul.mubr.f32.gmra.mrb[0].mxu0 %v2405
      %v3016 = vpop.f32.mrb[0].mxu0
      %v3017 = vadd.f32 %v2792, %v3016
      %v3018 = vpop.f32.mrb[0].mxu0
      %3019 = vmatprep.mubr.f32.mxu0 0.0
      %3020 = vmatmul.mubr.f32.gmra.mrb[0].mxu0 %v2408
      %v3021 = vpop.f32.mrb[0].mxu0
      %v3022 = vadd.f32 %v2797, %v3021
      %v3023 = vpop.f32.mrb[0].mxu0
      %3024 = vmatprep.mubr.f32.mxu0 0.0
      %3025 = vmatmul.mubr.f32.gmra.mrb[0].mxu0 %v2411
      %v3026 = vpop.f32.mrb[0].mxu0
      %v3027 = vadd.f32 %v2802, %v3026
      %v3028 = vpop.f32.mrb[0].mxu0
      %3029 = vmatprep.mubr.f32.mxu0 0.0
      %3030 = vmatmul.mubr.f32.gmra.mrb[0].mxu0 %v2414
      %v3031 = vpop.f32.mrb[0].mxu0
      %v3032 = vadd.f32 %v2807, %v3031
      %v3033 = vpop.f32.mrb[0].mxu0
      %3034 = vmatprep.mubr.f32.mxu0 0.0
      %3035 = vmatmul.mubr.f32.gmra.mrb[0].mxu0 %v2417
      %v3036 = vpop.f32.mrb[0].mxu0
      %v3037 = vadd.f32 %v2812, %v3036
      %v3038 = vpop.f32.mrb[0].mxu0
      %3039 = vmatprep.mubr.f32.mxu0 0.0
      %3040 = vmatmul.mubr.f32.gmra.mrb[0].mxu0 %v2420
      %v3041 = vpop.f32.mrb[0].mxu0
      %v3042 = vadd.f32 %v2817, %v3041
      %v3043 = vpop.f32.mrb[0].mxu0
      %3044 = vmatprep.mubr.f32.mxu0 0.0
      %3045 = vmatmul.mubr.f32.gmra.mrb[0].mxu0 %v2423
      %v3046 = vpop.f32.mrb[0].mxu0
      %v3047 = vadd.f32 %v2822, %v3046
      %v3048 = vpop.f32.mrb[0].mxu0
      %3049 = vmatprep.mubr.f32.mxu0 0.0
      %3050 = vmatmul.mubr.f32.gmra.mrb[0].mxu0 %v2426
      %v3051 = vpop.f32.mrb[0].mxu0
      %v3052 = vadd.f32 %v2827, %v3051
      %v3053 = vpop.f32.mrb[0].mxu0
      %3054 = vmatprep.mubr.f32.mxu0 0.0
      %3055 = vmatmul.mubr.f32.gmra.mrb[0].mxu0 %v2429
      %v3056 = vpop.f32.mrb[0].mxu0
      %v3057 = vadd.f32 %v2832, %v3056
      %v3058 = vpop.f32.mrb[0].mxu0
      %3059 = vmatprep.mubr.f32.mxu0 0.0
      %3060 = vmatmul.mubr.f32.gmra.mrb[0].mxu0 %v2432
      %v3061 = vpop.f32.mrb[0].mxu0
      %v3062 = vadd.f32 %v2837, %v3061
      %v3063 = vpop.f32.mrb[0].mxu0
      %3064 = vmatprep.mubr.f32.mxu0 0.0
      %3065 = vmatmul.mubr.f32.gmra.mrb[0].mxu0 %v2435
      %v3066 = vpop.f32.mrb[0].mxu0
      %v3067 = vadd.f32 %v2842, %v3066
      %v3068 = vpop.f32.mrb[0].mxu0
      %3069 = vmatprep.mubr.f32.mxu0 0.0
      %3070 = vmatmul.mubr.f32.gmra.mrb[0].mxu0 %v2438
      %v3071 = vpop.f32.mrb[0].mxu0
      %v3072 = vadd.f32 %v2847, %v3071
      %v3073 = vpop.f32.mrb[0].mxu0
      %3074 = vmatprep.mubr.f32.mxu0 0.0
      %3075 = vmatmul.mubr.f32.gmra.mrb[0].mxu0 %v2441
      %v3076 = vpop.f32.mrb[0].mxu0
      %v3077 = vadd.f32 %v2852, %v3076
      %v3078 = vpop.f32.mrb[0].mxu0
      %3079 = vmatprep.mubr.f32.mxu0 0.0
      %3080 = vmatmul.mubr.f32.gmra.mrb[0].mxu0 %v2444
      %v3081 = vpop.f32.mrb[0].mxu0
      %v3082 = vadd.f32 %v2857, %v3081
      %v3083 = vpop.f32.mrb[0].mxu0
      %3084 = vmatprep.mubr.f32.mxu0 0.0
      %3085 = vmatmul.mubr.f32.gmra.mrb[0].mxu0 %v2447
      %v3086 = vpop.f32.mrb[0].mxu0
      %v3087 = vadd.f32 %v2862, %v3086
      %v3088 = vpop.f32.mrb[0].mxu0
      %3089 = vmatprep.mubr.f32.mxu0 0.0
      %3090 = vmatmul.mubr.f32.gmra.mrb[0].mxu0 %v2450
      %v3091 = vpop.f32.mrb[0].mxu0
      %v3092 = vadd.f32 %v2867, %v3091
      %v3093 = vpop.f32.mrb[0].mxu0
      %3094 = vmatprep.mubr.f32.mxu0 0.0
      %3095 = vmatmul.mubr.f32.gmra.mrb[0].mxu0 %v2453
      %v3096 = vpop.f32.mrb[0].mxu0
      %v3097 = vadd.f32 %v2872, %v3096
      %v3098 = vpop.f32.mrb[0].mxu0
      %3099 = vmatprep.mubr.f32.mxu0 0.0
      %3100 = vmatmul.mubr.f32.gmra.mrb[0].mxu0 %v2456
      %v3101 = vpop.f32.mrb[0].mxu0
      %v3102 = vadd.f32 %v2877, %v3101
      %v3103 = vpop.f32.mrb[0].mxu0
      %3104 = vmatprep.mubr.f32.mxu0 0.0
      %3105 = vmatmul.mubr.f32.gmra.mrb[0].mxu0 %v2459
      %v3106 = vpop.f32.mrb[0].mxu0
      %v3107 = vadd.f32 %v2882, %v3106
      %v3108 = vpop.f32.mrb[0].mxu0
      %3109 = vmatprep.mubr.f32.mxu0 0.0
      %3110 = vmatmul.mubr.f32.gmra.mrb[0].mxu0 %v2462
      %v3111 = vpop.f32.mrb[0].mxu0
      %v3112 = vadd.f32 %v2887, %v3111
      %v3113 = vpop.f32.mrb[0].mxu0
      %3114 = vmatprep.mubr.f32.mxu0 0.0
      %3115 = vmatmul.mubr.f32.gmra.mrb[0].mxu0 %v2465
      %v3116 = vpop.f32.mrb[0].mxu0
      %v3117 = vadd.f32 %v2892, %v3116
      %v3118 = vpop.f32.mrb[0].mxu0
      %3119 = vmatprep.mubr.f32.mxu0 0.0
      %3120 = vmatmul.mubr.f32.gmra.mrb[0].mxu0 %v2468
      %v3121 = vpop.f32.mrb[0].mxu0
      %v3122 = vadd.f32 %v2897, %v3121
      %v3123 = vpop.f32.mrb[0].mxu0
      %3124 = vmatprep.mubr.f32.mxu0 0.0
      %3125 = vmatmul.mubr.f32.gmra.mrb[0].mxu0 %v2471
      %v3126 = vpop.f32.mrb[0].mxu0
      %v3127 = vadd.f32 %v2902, %v3126
      %v3128 = vpop.f32.mrb[0].mxu0
      %3129 = vmatprep.mubr.f32.mxu0 0.0
      %3130 = vmatmul.mubr.f32.gmra.mrb[0].mxu0 %v2474
      %v3131 = vpop.f32.mrb[0].mxu0
      %v3132 = vadd.f32 %v2907, %v3131
      %v3133 = vpop.f32.mrb[0].mxu0
      %3134 = vmatprep.mubr.f32.mxu0 0.0
      %3135 = vmatmul.mubr.f32.gmra.mrb[0].mxu0 %v2477
      %v3136 = vpop.f32.mrb[0].mxu0
      %v3137 = vadd.f32 %v2912, %v3136
      %v3138 = vpop.f32.mrb[0].mxu0
      %3139 = vmatprep.mubr.f32.mxu0 0.0
      %3140 = vmatmul.mubr.f32.gmra.mrb[0].mxu0 %v2480
      %v3141 = vpop.f32.mrb[0].mxu0
      %v3142 = vadd.f32 %v2917, %v3141
      %v3143 = vpop.f32.mrb[0].mxu0
      %3144 = vmatprep.mubr.f32.mxu0 0.0
      %3145 = vmatmul.mubr.f32.gmra.mrb[0].mxu0 %v2483
      %v3146 = vpop.f32.mrb[0].mxu0
      %v3147 = vadd.f32 %v2922, %v3146
      %v3148 = vpop.f32.mrb[0].mxu0
      %3149 = vmatprep.mubr.f32.mxu0 0.0
      %3150 = vmatmul.mubr.f32.gmra.mrb[0].mxu0 %v2486
      %v3151 = vpop.f32.mrb[0].mxu0
      %v3152 = vadd.f32 %v2927, %v3151
      %v3153 = vpop.f32.mrb[0].mxu0
      %3154 = vmatprep.mubr.f32.mxu0 0.0
      %3155 = vmatmul.mubr.f32.gmra.mrb[0].mxu0 %v2489
      %v3156 = vpop.f32.mrb[0].mxu0
      %v3157 = vadd.f32 %v2932, %v3156
      %v3158 = vpop.f32.mrb[0].mxu0
      %3159 = vmatprep.mubr.f32.mxu0 0.0
      %3160 = vmatmul.mubr.f32.gmra.mrb[0].mxu0 %v2492
      %v3161 = vpop.f32.mrb[0].mxu0
      %v3162 = vadd.f32 %v2937, %v3161
      %v3163 = vpop.f32.mrb[0].mxu0
      %3164 = vmatprep.mubr.f32.mxu0 0.0
      %3165 = vmatmul.mubr.f32.gmra.mrb[0].mxu0 %v2495
      %v3166 = vpop.f32.mrb[0].mxu0
      %v3167 = vadd.f32 %v2942, %v3166
      %v3168 = vpop.f32.mrb[0].mxu0
      %3169 = vmatprep.mubr.f32.mxu0 0.0
      %3170 = vmatmul.mubr.f32.gmra.mrb[0].mxu0 %v2498
      %v3171 = vpop.f32.mrb[0].mxu0
      %v3172 = vadd.f32 %v2947, %v3171
      %v3173 = vpop.f32.mrb[0].mxu0
      %3174 = vdwg.mxu0
      %vm3175 = vcmp.gt.f32.partialorder %v3017, 0.0
      %vm3176 = vcmp.gt.f32.partialorder %v3022, 0.0
      %vm3177 = vcmp.gt.f32.partialorder %v3027, 0.0
      %vm3178 = vcmp.gt.f32.partialorder %v3032, 0.0
      %vm3179 = vcmp.gt.f32.partialorder %v3037, 0.0
      %vm3180 = vcmp.gt.f32.partialorder %v3042, 0.0
      %vm3181 = vcmp.gt.f32.partialorder %v3047, 0.0
      %vm3182 = vcmp.gt.f32.partialorder %v3052, 0.0
      %vm3183 = vcmp.gt.f32.partialorder %v3057, 0.0
      %vm3184 = vcmp.gt.f32.partialorder %v3062, 0.0
      %vm3185 = vcmp.gt.f32.partialorder %v3067, 0.0
      %vm3186 = vcmp.gt.f32.partialorder %v3072, 0.0
      %vm3187 = vcmp.gt.f32.partialorder %v3077, 0.0
      %vm3188 = vcmp.gt.f32.partialorder %v3082, 0.0
      %vm3189 = vcmp.gt.f32.partialorder %v3087, 0.0
      %vm3190 = vcmp.gt.f32.partialorder %v3092, 0.0
      %vm3191 = vcmp.gt.f32.partialorder %v3097, 0.0
      %vm3192 = vcmp.gt.f32.partialorder %v3102, 0.0
      %vm3193 = vcmp.gt.f32.partialorder %v3107, 0.0
      %vm3194 = vcmp.gt.f32.partialorder %v3112, 0.0
      %vm3195 = vcmp.gt.f32.partialorder %v3117, 0.0
      %vm3196 = vcmp.gt.f32.partialorder %v3122, 0.0
      %vm3197 = vcmp.gt.f32.partialorder %v3127, 0.0
      %vm3198 = vcmp.gt.f32.partialorder %v3132, 0.0
      %vm3199 = vcmp.gt.f32.partialorder %v3137, 0.0
      %vm3200 = vcmp.gt.f32.partialorder %v3142, 0.0
      %vm3201 = vcmp.gt.f32.partialorder %v3147, 0.0
      %vm3202 = vcmp.gt.f32.partialorder %v3152, 0.0
      %vm3203 = vcmp.gt.f32.partialorder %v3157, 0.0
      %vm3204 = vcmp.gt.f32.partialorder %v3162, 0.0
      %vm3205 = vcmp.gt.f32.partialorder %v3167, 0.0
      %vm3206 = vcmp.gt.f32.partialorder %v3172, 0.0
      %v3207 = vmul.f32 %v3017, 0.2
      %v3208 = vmul.f32 %v3022, 0.2
      %v3209 = vmul.f32 %v3027, 0.2
      %v3210 = vmul.f32 %v3032, 0.2
      %v3211 = vmul.f32 %v3037, 0.2
      %v3212 = vmul.f32 %v3042, 0.2
      %v3213 = vmul.f32 %v3047, 0.2
      %v3214 = vmul.f32 %v3052, 0.2
      %v3215 = vmul.f32 %v3057, 0.2
      %v3216 = vmul.f32 %v3062, 0.2
      %v3217 = vmul.f32 %v3067, 0.2
      %v3218 = vmul.f32 %v3072, 0.2
      %v3219 = vmul.f32 %v3077, 0.2
      %v3220 = vmul.f32 %v3082, 0.2
      %v3221 = vmul.f32 %v3087, 0.2
      %v3222 = vmul.f32 %v3092, 0.2
      %v3223 = vmul.f32 %v3097, 0.2
      %v3224 = vmul.f32 %v3102, 0.2
      %v3225 = vmul.f32 %v3107, 0.2
      %v3226 = vmul.f32 %v3112, 0.2
      %v3227 = vmul.f32 %v3117, 0.2
      %v3228 = vmul.f32 %v3122, 0.2
      %v3229 = vmul.f32 %v3127, 0.2
      %v3230 = vmul.f32 %v3132, 0.2
      %v3231 = vmul.f32 %v3137, 0.2
      %v3232 = vmul.f32 %v3142, 0.2
      %v3233 = vmul.f32 %v3147, 0.2
      %v3234 = vmul.f32 %v3152, 0.2
      %v3235 = vmul.f32 %v3157, 0.2
      %v3236 = vmul.f32 %v3162, 0.2
      %v3237 = vmul.f32 %v3167, 0.2
      %v3238 = vmul.f32 %v3172, 0.2
      %v3239 = vsel %vm3175, %v3017, %v3207
      %v3240 = vsel %vm3176, %v3022, %v3208
      %v3241 = vsel %vm3177, %v3027, %v3209
      %v3242 = vsel %vm3178, %v3032, %v3210
      %v3243 = vsel %vm3179, %v3037, %v3211
      %v3244 = vsel %vm3180, %v3042, %v3212
      %v3245 = vsel %vm3181, %v3047, %v3213
      %v3246 = vsel %vm3182, %v3052, %v3214
      %v3247 = vsel %vm3183, %v3057, %v3215
      %v3248 = vsel %vm3184, %v3062, %v3216
      %v3249 = vsel %vm3185, %v3067, %v3217
      %v3250 = vsel %vm3186, %v3072, %v3218
      %v3251 = vsel %vm3187, %v3077, %v3219
      %v3252 = vsel %vm3188, %v3082, %v3220
      %v3253 = vsel %vm3189, %v3087, %v3221
      %v3254 = vsel %vm3190, %v3092, %v3222
      %v3255 = vsel %vm3191, %v3097, %v3223
      %v3256 = vsel %vm3192, %v3102, %v3224
      %v3257 = vsel %vm3193, %v3107, %v3225
      %v3258 = vsel %vm3194, %v3112, %v3226
      %v3259 = vsel %vm3195, %v3117, %v3227
      %v3260 = vsel %vm3196, %v3122, %v3228
      %v3261 = vsel %vm3197, %v3127, %v3229
      %v3262 = vsel %vm3198, %v3132, %v3230
      %v3263 = vsel %vm3199, %v3137, %v3231
      %v3264 = vsel %vm3200, %v3142, %v3232
      %v3265 = vsel %vm3201, %v3147, %v3233
      %v3266 = vsel %vm3202, %v3152, %v3234
      %v3267 = vsel %vm3203, %v3157, %v3235
      %v3268 = vsel %vm3204, %v3162, %v3236
      %v3269 = vsel %vm3205, %v3167, %v3237
      %v3270 = vsel %vm3206, %v3172, %v3238
      %v3271 = vsel %vm306, %v3239, 0.0
      %v3272 = vsel %vm306, %v3240, 0.0
      %v3273 = vadd.f32 %v3271, %v3272
      %v3274 = vsel %vm306, %v3241, 0.0
      %v3275 = vadd.f32 %v3273, %v3274
      %v3276 = vsel %vm306, %v3242, 0.0
      %v3277 = vadd.f32 %v3275, %v3276
      %v3278 = vsel %vm306, %v3243, 0.0
      %v3279 = vadd.f32 %v3277, %v3278
      %v3280 = vsel %vm306, %v3244, 0.0
      %v3281 = vadd.f32 %v3279, %v3280
      %v3282 = vsel %vm306, %v3245, 0.0
      %v3283 = vadd.f32 %v3281, %v3282
      %v3284 = vsel %vm306, %v3246, 0.0
      %v3285 = vadd.f32 %v3283, %v3284
      %v3286 = vsel %vm306, %v3247, 0.0
      %v3287 = vadd.f32 %v3285, %v3286
      %v3288 = vsel %vm306, %v3248, 0.0
      %v3289 = vadd.f32 %v3287, %v3288
      %v3290 = vsel %vm306, %v3249, 0.0
      %v3291 = vadd.f32 %v3289, %v3290
      %v3292 = vsel %vm306, %v3250, 0.0
      %v3293 = vadd.f32 %v3291, %v3292
      %v3294 = vsel %vm306, %v3251, 0.0
      %v3295 = vadd.f32 %v3293, %v3294
      %v3296 = vsel %vm306, %v3252, 0.0
      %v3297 = vadd.f32 %v3295, %v3296
      %v3298 = vsel %vm306, %v3253, 0.0
      %v3299 = vadd.f32 %v3297, %v3298
      %v3300 = vsel %vm306, %v3254, 0.0
      %v3301 = vadd.f32 %v3299, %v3300
      %v3302 = vsel %vm306, %v3255, 0.0
      %v3303 = vadd.f32 %v3301, %v3302
      %v3304 = vsel %vm306, %v3256, 0.0
      %v3305 = vadd.f32 %v3303, %v3304
      %v3306 = vsel %vm306, %v3257, 0.0
      %v3307 = vadd.f32 %v3305, %v3306
      %v3308 = vsel %vm306, %v3258, 0.0
      %v3309 = vadd.f32 %v3307, %v3308
      %v3310 = vsel %vm306, %v3259, 0.0
      %v3311 = vadd.f32 %v3309, %v3310
      %v3312 = vsel %vm306, %v3260, 0.0
      %v3313 = vadd.f32 %v3311, %v3312
      %v3314 = vsel %vm306, %v3261, 0.0
      %v3315 = vadd.f32 %v3313, %v3314
      %v3316 = vsel %vm306, %v3262, 0.0
      %v3317 = vadd.f32 %v3315, %v3316
      %v3318 = vsel %vm306, %v3263, 0.0
      %v3319 = vadd.f32 %v3317, %v3318
      %v3320 = vsel %vm306, %v3264, 0.0
      %v3321 = vadd.f32 %v3319, %v3320
      %v3322 = vsel %vm306, %v3265, 0.0
      %v3323 = vadd.f32 %v3321, %v3322
      %v3324 = vsel %vm306, %v3266, 0.0
      %v3325 = vadd.f32 %v3323, %v3324
      %v3326 = vsel %vm306, %v3267, 0.0
      %v3327 = vadd.f32 %v3325, %v3326
      %v3328 = vsel %vm306, %v3268, 0.0
      %v3329 = vadd.f32 %v3327, %v3328
      %v3330 = vsel %vm306, %v3269, 0.0
      %v3331 = vadd.f32 %v3329, %v3330
      %v3332 = vsel %vm306, %v3270, 0.0
      %v3333 = vadd.f32 %v3331, %v3332
      %v3334 = vrot.slane %v3333, 4
      %v3335 = vadd.f32 %v3333, %v3334
      %v3336 = vrot.slane %v3335, 2
      %v3337 = vadd.f32 %v3335, %v3336
      %v3338 = vrot.slane %v3337, 1
      %v3339 = vadd.f32 %v3337, %v3338
      %v3340 = vrcp.pop 256.0
      %v3341 = vmul.f32 %v3339, %v3340
      %v3342 = vld [vmem:[%s7] sm:$0xff]
      %v3343 = vld [vmem:[%s7 + $0x8] sm:$0xff]
      %v3344 = vld [vmem:[%s7 + $0x10] sm:$0xff]
      %v3345 = vld [vmem:[%s7 + $0x18] sm:$0xff]
      %v3346 = vld [vmem:[%s7 + $0x20] sm:$0xff]
      %v3347 = vld [vmem:[%s7 + $0x28] sm:$0xff]
      %v3348 = vld [vmem:[%s7 + $0x30] sm:$0xff]
      %v3349 = vld [vmem:[%s7 + $0x38] sm:$0xff]
      %v3351 = vsel %vm306, %v3341, 0
      %3353 = vmatprep.subr.mxu0 0.0
      %3354 = vmatpush1.msra.mxu0 %v3342
      %3355 = vmatprep.subr.mxu0 0.0
      %3356 = vmatpush1.msra.mxu0 %v3343
      %3357 = vmatprep.subr.mxu0 0.0
      %3358 = vmatpush1.msra.mxu0 %v3344
      %3359 = vmatprep.subr.mxu0 0.0
      %3360 = vmatpush1.msra.mxu0 %v3345
      %3361 = vmatprep.subr.mxu0 0.0
      %3362 = vmatpush1.msra.mxu0 %v3346
      %3363 = vmatprep.subr.mxu0 0.0
      %3364 = vmatpush1.msra.mxu0 %v3347
      %3365 = vmatprep.subr.mxu0 0.0
      %3366 = vmatpush1.msra.mxu0 %v3348
      %3367 = vmatprep.subr.mxu0 0.0
      %3368 = vmatpush1.msra.mxu0 %v3349
      %3369 = vmatprep.subr.mxu0 0.0
      %3370 = vmatpush1.msra.mxu0 0.0
      %3371 = vmatprep.subr.mxu0 0.0
      %3372 = vmatpush1.msra.mxu0 0.0
      %3373 = vmatprep.subr.mxu0 0.0
      %3374 = vmatpush1.msra.mxu0 0.0
      %3375 = vmatprep.subr.mxu0 0.0
      %3376 = vmatpush1.msra.mxu0 0.0
      %3377 = vmatprep.subr.mxu0 0.0
      %3378 = vmatpush1.msra.mxu0 0.0
      %3379 = vmatprep.subr.mxu0 0.0
      %3380 = vmatpush1.msra.mxu0 0.0
      %3381 = vmatprep.subr.mxu0 0.0
      %3382 = vmatpush1.msra.mxu0 0.0
      %3383 = vmatprep.subr.mxu0 0.0
      %3384 = vmatpush1.msra.mxu0 0.0
      %3385 = vmatprep.subr.mxu0 0.0
      %3386 = vmatpush1.msra.mxu0 0.0
      %3387 = vmatprep.subr.mxu0 0.0
      %3388 = vmatpush1.msra.mxu0 0.0
      %3389 = vmatprep.subr.mxu0 0.0
      %3390 = vmatpush1.msra.mxu0 0.0
      %3391 = vmatprep.subr.mxu0 0.0
      %3392 = vmatpush1.msra.mxu0 0.0
      %3393 = vmatprep.subr.mxu0 0.0
      %3394 = vmatpush1.msra.mxu0 0.0
      %3395 = vmatprep.subr.mxu0 0.0
      %3396 = vmatpush1.msra.mxu0 0.0
      %3397 = vmatprep.subr.mxu0 0.0
      %3398 = vmatpush1.msra.mxu0 0.0
      %3399 = vmatprep.subr.mxu0 0.0
      %3400 = vmatpush1.msra.mxu0 0.0
      %3401 = vmatprep.subr.mxu0 0.0
      %3402 = vmatpush1.msra.mxu0 0.0
      %3403 = vmatprep.subr.mxu0 0.0
      %3404 = vmatpush1.msra.mxu0 0.0
      %3405 = vmatprep.subr.mxu0 0.0
      %3406 = vmatpush1.msra.mxu0 0.0
      %3407 = vmatprep.subr.mxu0 0.0
      %3408 = vmatpush1.msra.mxu0 0.0
      %3409 = vmatprep.subr.mxu0 0.0
      %3410 = vmatpush1.msra.mxu0 0.0
      %3411 = vmatprep.subr.mxu0 0.0
      %3412 = vmatpush1.msra.mxu0 0.0
      %3413 = vmatprep.subr.mxu0 0.0
      %3414 = vmatpush1.msra.mxu0 0.0
      %3415 = vmatprep.subr.mxu0 0.0
      %3416 = vmatpush1.msra.mxu0 0.0
      %3417 = vmatprep.mubr.f32.mxu0 0.0
      %3418 = vmatmul.mubr.f32.gmra.mrb[0].mxu0 %v3351
      %v3419 = vpop.f32.mrb[0].mxu0
      %v3420 = vadd.f32 0.0, %v3419
      %v3421 = vpop.f32.mrb[0].mxu0
      %3422 = vdwg.mxu0
      %v3423 = vsub.f32 0.0, %v3420
      %v3424 = vmul.f32 %v3423, 1.442695
      %v3425 = vpow.pop %v3424
      %v3426 = vadd.f32 %v3425, 1.0
      %v3427 = vrcp.pop %v3426
      %v3428 = vmul.f32 1.0, %v3427
      %v3429 = vlaneseq
      %v3430 = vshrl.u32 %v3429, 7
      %v3431 = vsub.s32 0, %v3430
      %v3432 = vrot.slane %v3428, %v3431
      %v3433 = vmul.f32 %v3239, %v3432
      %v3434 = vmul.f32 %v3240, %v3432
      %v3435 = vmul.f32 %v3241, %v3432
      %v3436 = vmul.f32 %v3242, %v3432
      %v3437 = vmul.f32 %v3243, %v3432
      %v3438 = vmul.f32 %v3244, %v3432
      %v3439 = vmul.f32 %v3245, %v3432
      %v3440 = vmul.f32 %v3246, %v3432
      %v3441 = vmul.f32 %v3247, %v3432
      %v3442 = vmul.f32 %v3248, %v3432
      %v3443 = vmul.f32 %v3249, %v3432
      %v3444 = vmul.f32 %v3250, %v3432
      %v3445 = vmul.f32 %v3251, %v3432
      %v3446 = vmul.f32 %v3252, %v3432
      %v3447 = vmul.f32 %v3253, %v3432
      %v3448 = vmul.f32 %v3254, %v3432
      %v3449 = vmul.f32 %v3255, %v3432
      %v3450 = vmul.f32 %v3256, %v3432
      %v3451 = vmul.f32 %v3257, %v3432
      %v3452 = vmul.f32 %v3258, %v3432
      %v3453 = vmul.f32 %v3259, %v3432
      %v3454 = vmul.f32 %v3260, %v3432
      %v3455 = vmul.f32 %v3261, %v3432
      %v3456 = vmul.f32 %v3262, %v3432
      %v3457 = vmul.f32 %v3263, %v3432
      %v3458 = vmul.f32 %v3264, %v3432
      %v3459 = vmul.f32 %v3265, %v3432
      %v3460 = vmul.f32 %v3266, %v3432
      %v3461 = vmul.f32 %v3267, %v3432
      %v3462 = vmul.f32 %v3268, %v3432
      %v3463 = vmul.f32 %v3269, %v3432
      %v3464 = vmul.f32 %v3270, %v3432
      %3465 = vst.msk [vmem:[%s315 + $0x1] sm:$0xff] %vm306, %v3433
      %3466 = vst.msk [vmem:[%s315 + $0x9] sm:$0xff] %vm306, %v3434
      %3467 = vst.msk [vmem:[%s315 + $0x19] sm:$0xff] %vm306, %v3435
      %3468 = vst.msk [vmem:[%s315 + $0x21] sm:$0xff] %vm306, %v3436
      %3469 = vst.msk [vmem:[%s315 + $0x31] sm:$0xff] %vm306, %v3437
      %3470 = vst.msk [vmem:[%s315 + $0x39] sm:$0xff] %vm306, %v3438
      %3471 = vst.msk [vmem:[%s315 + $0x49] sm:$0xff] %vm306, %v3439
      %3472 = vst.msk [vmem:[%s315 + $0x51] sm:$0xff] %vm306, %v3440
      %3473 = vst.msk [vmem:[%s315 + $0x61] sm:$0xff] %vm306, %v3441
      %3474 = vst.msk [vmem:[%s315 + $0x69] sm:$0xff] %vm306, %v3442
      %3475 = vst.msk [vmem:[%s315 + $0x79] sm:$0xff] %vm306, %v3443
      %3476 = vst.msk [vmem:[%s315 + $0x81] sm:$0xff] %vm306, %v3444
      %3477 = vst.msk [vmem:[%s315 + $0x91] sm:$0xff] %vm306, %v3445
      %3478 = vst.msk [vmem:[%s315 + $0x99] sm:$0xff] %vm306, %v3446
      %3479 = vst.msk [vmem:[%s315 + $0xa9] sm:$0xff] %vm306, %v3447
      %3480 = vst.msk [vmem:[%s315 + $0xb1] sm:$0xff] %vm306, %v3448
      %3481 = vst.msk [vmem:[%s315 + $0xc1] sm:$0xff] %vm306, %v3449
      %3482 = vst.msk [vmem:[%s315 + $0xc9] sm:$0xff] %vm306, %v3450
      %3483 = vst.msk [vmem:[%s315 + $0xd9] sm:$0xff] %vm306, %v3451
      %3484 = vst.msk [vmem:[%s315 + $0xe1] sm:$0xff] %vm306, %v3452
      %3485 = vst.msk [vmem:[%s315 + $0xf1] sm:$0xff] %vm306, %v3453
      %3486 = vst.msk [vmem:[%s315 + $0xf9] sm:$0xff] %vm306, %v3454
      %3487 = vst.msk [vmem:[%s315 + $0x109] sm:$0xff] %vm306, %v3455
      %3488 = vst.msk [vmem:[%s315 + $0x111] sm:$0xff] %vm306, %v3456
      %3489 = vst.msk [vmem:[%s315 + $0x121] sm:$0xff] %vm306, %v3457
      %3490 = vst.msk [vmem:[%s315 + $0x129] sm:$0xff] %vm306, %v3458
      %3491 = vst.msk [vmem:[%s315 + $0x139] sm:$0xff] %vm306, %v3459
      %3492 = vst.msk [vmem:[%s315 + $0x141] sm:$0xff] %vm306, %v3460
      %3493 = vst.msk [vmem:[%s315 + $0x151] sm:$0xff] %vm306, %v3461
      %3494 = vst.msk [vmem:[%s315 + $0x159] sm:$0xff] %vm306, %v3462
      %3495 = vst.msk [vmem:[%s315 + $0x169] sm:$0xff] %vm306, %v3463
      %3496 = vst.msk [vmem:[%s315 + $0x171] sm:$0xff] %vm306, %v3464
      %v3497 = vld [vmem:[#allocation2] sm:$0xff]
      %v3498 = vld [vmem:[#allocation2 + $0x8] sm:$0xff]
      %v3499 = vld [vmem:[#allocation2 + $0x18] sm:$0xff]
      %v3500 = vld [vmem:[#allocation2 + $0x20] sm:$0xff]
      %v3501 = vld [vmem:[#allocation2 + $0x30] sm:$0xff]
      %v3502 = vld [vmem:[#allocation2 + $0x38] sm:$0xff]
      %v3503 = vld [vmem:[#allocation2 + $0x48] sm:$0xff]
      %v3504 = vld [vmem:[#allocation2 + $0x50] sm:$0xff]
      %v3505 = vld [vmem:[#allocation2 + $0x60] sm:$0xff]
      %v3506 = vld [vmem:[#allocation2 + $0x68] sm:$0xff]
      %v3507 = vld [vmem:[#allocation2 + $0x78] sm:$0xff]
      %v3508 = vld [vmem:[#allocation2 + $0x80] sm:$0xff]
      %v3509 = vld [vmem:[#allocation2 + $0x90] sm:$0xff]
      %v3510 = vld [vmem:[#allocation2 + $0x98] sm:$0xff]
      %v3511 = vld [vmem:[#allocation2 + $0xa8] sm:$0xff]
      %v3512 = vld [vmem:[#allocation2 + $0xb0] sm:$0xff]
      %v3513 = vld [vmem:[#allocation2 + $0xc0] sm:$0xff]
      %v3514 = vld [vmem:[#allocation2 + $0xc8] sm:$0xff]
      %v3515 = vld [vmem:[#allocation2 + $0xd8] sm:$0xff]
      %v3516 = vld [vmem:[#allocation2 + $0xe0] sm:$0xff]
      %v3517 = vld [vmem:[#allocation2 + $0xf0] sm:$0xff]
      %v3518 = vld [vmem:[#allocation2 + $0xf8] sm:$0xff]
      %v3519 = vld [vmem:[#allocation2 + $0x108] sm:$0xff]
      %v3520 = vld [vmem:[#allocation2 + $0x110] sm:$0xff]
      %v3521 = vld [vmem:[#allocation2 + $0x120] sm:$0xff]
      %v3522 = vld [vmem:[#allocation2 + $0x128] sm:$0xff]
      %v3523 = vld [vmem:[#allocation2 + $0x138] sm:$0xff]
      %v3524 = vld [vmem:[#allocation2 + $0x140] sm:$0xff]
      %v3525 = vld [vmem:[#allocation2 + $0x150] sm:$0xff]
      %v3526 = vld [vmem:[#allocation2 + $0x158] sm:$0xff]
      %v3527 = vld [vmem:[#allocation2 + $0x168] sm:$0xff]
      %v3528 = vld [vmem:[#allocation2 + $0x170] sm:$0xff]
      %v3529 = vld [vmem:[#allocation2 + $0x1] sm:$0xff]
      %v3530 = vld [vmem:[#allocation2 + $0x9] sm:$0xff]
      %v3531 = vld [vmem:[#allocation2 + $0x19] sm:$0xff]
      %v3532 = vld [vmem:[#allocation2 + $0x21] sm:$0xff]
      %v3533 = vld [vmem:[#allocation2 + $0x31] sm:$0xff]
      %v3534 = vld [vmem:[#allocation2 + $0x39] sm:$0xff]
      %v3535 = vld [vmem:[#allocation2 + $0x49] sm:$0xff]
      %v3536 = vld [vmem:[#allocation2 + $0x51] sm:$0xff]
      %v3537 = vld [vmem:[#allocation2 + $0x61] sm:$0xff]
      %v3538 = vld [vmem:[#allocation2 + $0x69] sm:$0xff]
      %v3539 = vld [vmem:[#allocation2 + $0x79] sm:$0xff]
      %v3540 = vld [vmem:[#allocation2 + $0x81] sm:$0xff]
      %v3541 = vld [vmem:[#allocation2 + $0x91] sm:$0xff]
      %v3542 = vld [vmem:[#allocation2 + $0x99] sm:$0xff]
      %v3543 = vld [vmem:[#allocation2 + $0xa9] sm:$0xff]
      %v3544 = vld [vmem:[#allocation2 + $0xb1] sm:$0xff]
      %v3545 = vld [vmem:[#allocation2 + $0xc1] sm:$0xff]
      %v3546 = vld [vmem:[#allocation2 + $0xc9] sm:$0xff]
      %v3547 = vld [vmem:[#allocation2 + $0xd9] sm:$0xff]
      %v3548 = vld [vmem:[#allocation2 + $0xe1] sm:$0xff]
      %v3549 = vld [vmem:[#allocation2 + $0xf1] sm:$0xff]
      %v3550 = vld [vmem:[#allocation2 + $0xf9] sm:$0xff]
      %v3551 = vld [vmem:[#allocation2 + $0x109] sm:$0xff]
      %v3552 = vld [vmem:[#allocation2 + $0x111] sm:$0xff]
      %v3553 = vld [vmem:[#allocation2 + $0x121] sm:$0xff]
      %v3554 = vld [vmem:[#allocation2 + $0x129] sm:$0xff]
      %v3555 = vld [vmem:[#allocation2 + $0x139] sm:$0xff]
      %v3556 = vld [vmem:[#allocation2 + $0x141] sm:$0xff]
      %v3557 = vld [vmem:[#allocation2 + $0x151] sm:$0xff]
      %v3558 = vld [vmem:[#allocation2 + $0x159] sm:$0xff]
      %v3559 = vld [vmem:[#allocation2 + $0x169] sm:$0xff]
      %v3560 = vld [vmem:[#allocation2 + $0x171] sm:$0xff]
      %3593 = vrot.lane.b32.xlu0 %v3529, 64
      %v3594 = vpop.permute.xlu0 %3593
      %3595 = vrot.lane.b32.xlu0 %v3530, 64
      %v3596 = vpop.permute.xlu0 %3595
      %3597 = vrot.lane.b32.xlu0 %v3531, 64
      %v3598 = vpop.permute.xlu0 %3597
      %3599 = vrot.lane.b32.xlu0 %v3532, 64
      %v3600 = vpop.permute.xlu0 %3599
      %3601 = vrot.lane.b32.xlu0 %v3533, 64
      %v3602 = vpop.permute.xlu0 %3601
      %3603 = vrot.lane.b32.xlu0 %v3534, 64
      %v3604 = vpop.permute.xlu0 %3603
      %3605 = vrot.lane.b32.xlu0 %v3535, 64
      %v3606 = vpop.permute.xlu0 %3605
      %3607 = vrot.lane.b32.xlu0 %v3536, 64
      %v3608 = vpop.permute.xlu0 %3607
      %3609 = vrot.lane.b32.xlu0 %v3537, 64
      %v3610 = vpop.permute.xlu0 %3609
      %3611 = vrot.lane.b32.xlu0 %v3538, 64
      %v3612 = vpop.permute.xlu0 %3611
      %3613 = vrot.lane.b32.xlu0 %v3539, 64
      %v3614 = vpop.permute.xlu0 %3613
      %3615 = vrot.lane.b32.xlu0 %v3540, 64
      %v3616 = vpop.permute.xlu0 %3615
      %3617 = vrot.lane.b32.xlu0 %v3541, 64
      %v3618 = vpop.permute.xlu0 %3617
      %3619 = vrot.lane.b32.xlu0 %v3542, 64
      %v3620 = vpop.permute.xlu0 %3619
      %3621 = vrot.lane.b32.xlu0 %v3543, 64
      %v3622 = vpop.permute.xlu0 %3621
      %3623 = vrot.lane.b32.xlu0 %v3544, 64
      %v3624 = vpop.permute.xlu0 %3623
      %3625 = vrot.lane.b32.xlu0 %v3545, 64
      %v3626 = vpop.permute.xlu0 %3625
      %3627 = vrot.lane.b32.xlu0 %v3546, 64
      %v3628 = vpop.permute.xlu0 %3627
      %3629 = vrot.lane.b32.xlu0 %v3547, 64
      %v3630 = vpop.permute.xlu0 %3629
      %3631 = vrot.lane.b32.xlu0 %v3548, 64
      %v3632 = vpop.permute.xlu0 %3631
      %3633 = vrot.lane.b32.xlu0 %v3549, 64
      %v3634 = vpop.permute.xlu0 %3633
      %3635 = vrot.lane.b32.xlu0 %v3550, 64
      %v3636 = vpop.permute.xlu0 %3635
      %3637 = vrot.lane.b32.xlu0 %v3551, 64
      %v3638 = vpop.permute.xlu0 %3637
      %3639 = vrot.lane.b32.xlu0 %v3552, 64
      %v3640 = vpop.permute.xlu0 %3639
      %3641 = vrot.lane.b32.xlu0 %v3553, 64
      %v3642 = vpop.permute.xlu0 %3641
      %3643 = vrot.lane.b32.xlu0 %v3554, 64
      %v3644 = vpop.permute.xlu0 %3643
      %3645 = vrot.lane.b32.xlu0 %v3555, 64
      %v3646 = vpop.permute.xlu0 %3645
      %3647 = vrot.lane.b32.xlu0 %v3556, 64
      %v3648 = vpop.permute.xlu0 %3647
      %3649 = vrot.lane.b32.xlu0 %v3557, 64
      %v3650 = vpop.permute.xlu0 %3649
      %3651 = vrot.lane.b32.xlu0 %v3558, 64
      %v3652 = vpop.permute.xlu0 %3651
      %3653 = vrot.lane.b32.xlu0 %v3559, 64
      %v3654 = vpop.permute.xlu0 %3653
      %3655 = vrot.lane.b32.xlu0 %v3560, 64
      %v3656 = vpop.permute.xlu0 %3655
      %v3689 = vsel %vm306, %v3497, %v3594
      %v3690 = vsel %vm306, %v3498, %v3596
      %v3691 = vsel %vm306, %v3499, %v3598
      %v3692 = vsel %vm306, %v3500, %v3600
      %v3693 = vsel %vm306, %v3501, %v3602
      %v3694 = vsel %vm306, %v3502, %v3604
      %v3695 = vsel %vm306, %v3503, %v3606
      %v3696 = vsel %vm306, %v3504, %v3608
      %v3697 = vsel %vm306, %v3505, %v3610
      %v3698 = vsel %vm306, %v3506, %v3612
      %v3699 = vsel %vm306, %v3507, %v3614
      %v3700 = vsel %vm306, %v3508, %v3616
      %v3701 = vsel %vm306, %v3509, %v3618
      %v3702 = vsel %vm306, %v3510, %v3620
      %v3703 = vsel %vm306, %v3511, %v3622
      %v3704 = vsel %vm306, %v3512, %v3624
      %v3705 = vsel %vm306, %v3513, %v3626
      %v3706 = vsel %vm306, %v3514, %v3628
      %v3707 = vsel %vm306, %v3515, %v3630
      %v3708 = vsel %vm306, %v3516, %v3632
      %v3709 = vsel %vm306, %v3517, %v3634
      %v3710 = vsel %vm306, %v3518, %v3636
      %v3711 = vsel %vm306, %v3519, %v3638
      %v3712 = vsel %vm306, %v3520, %v3640
      %v3713 = vsel %vm306, %v3521, %v3642
      %v3714 = vsel %vm306, %v3522, %v3644
      %v3715 = vsel %vm306, %v3523, %v3646
      %v3716 = vsel %vm306, %v3524, %v3648
      %v3717 = vsel %vm306, %v3525, %v3650
      %v3718 = vsel %vm306, %v3526, %v3652
      %v3719 = vsel %vm306, %v3527, %v3654
      %v3720 = vsel %vm306, %v3528, %v3656
      %3721 = vst [vmem:[#allocation3] sm:$0xff] %v3689
      %3722 = vst [vmem:[#allocation3 + $0x28] sm:$0xff] %v3690
      %3723 = vst [vmem:[#allocation3 + $0x50] sm:$0xff] %v3691
      %3724 = vst [vmem:[#allocation3 + $0x78] sm:$0xff] %v3692
      %3725 = vst [vmem:[#allocation3 + $0xa0] sm:$0xff] %v3693
      %3726 = vst [vmem:[#allocation3 + $0xc8] sm:$0xff] %v3694
      %3727 = vst [vmem:[#allocation3 + $0xf0] sm:$0xff] %v3695
      %3728 = vst [vmem:[#allocation3 + $0x118] sm:$0xff] %v3696
      %3729 = vst [vmem:[#allocation3 + $0x140] sm:$0xff] %v3697
      %3730 = vst [vmem:[#allocation3 + $0x168] sm:$0xff] %v3698
      %3731 = vst [vmem:[#allocation3 + $0x190] sm:$0xff] %v3699
      %3732 = vst [vmem:[#allocation3 + $0x1b8] sm:$0xff] %v3700
      %3733 = vst [vmem:[#allocation3 + $0x1e0] sm:$0xff] %v3701
      %3734 = vst [vmem:[#allocation3 + $0x208] sm:$0xff] %v3702
      %3735 = vst [vmem:[#allocation3 + $0x230] sm:$0xff] %v3703
      %3736 = vst [vmem:[#allocation3 + $0x258] sm:$0xff] %v3704
      %3737 = vst [vmem:[#allocation3 + $0x280] sm:$0xff] %v3705
      %3738 = vst [vmem:[#allocation3 + $0x2a8] sm:$0xff] %v3706
      %3739 = vst [vmem:[#allocation3 + $0x2d0] sm:$0xff] %v3707
      %3740 = vst [vmem:[#allocation3 + $0x2f8] sm:$0xff] %v3708
      %3741 = vst [vmem:[#allocation3 + $0x320] sm:$0xff] %v3709
      %3742 = vst [vmem:[#allocation3 + $0x348] sm:$0xff] %v3710
      %3743 = vst [vmem:[#allocation3 + $0x370] sm:$0xff] %v3711
      %3744 = vst [vmem:[#allocation3 + $0x398] sm:$0xff] %v3712
      %3745 = vst [vmem:[#allocation3 + $0x3c0] sm:$0xff] %v3713
      %3746 = vst [vmem:[#allocation3 + $0x3e8] sm:$0xff] %v3714
      %3747 = vst [vmem:[#allocation3 + $0x410] sm:$0xff] %v3715
      %3748 = vst [vmem:[#allocation3 + $0x438] sm:$0xff] %v3716
      %3749 = vst [vmem:[#allocation3 + $0x460] sm:$0xff] %v3717
      %3750 = vst [vmem:[#allocation3 + $0x488] sm:$0xff] %v3718
      %3751 = vst [vmem:[#allocation3 + $0x4b0] sm:$0xff] %v3719
      %3752 = vst [vmem:[#allocation3 + $0x4d8] sm:$0xff] %v3720
      %v3753 = vld [vmem:[#allocation2 + $0x2] sm:$0xff]
      %v3754 = vld [vmem:[#allocation2 + $0xa] sm:$0xff]
      %v3755 = vld [vmem:[#allocation2 + $0x1a] sm:$0xff]
      %v3756 = vld [vmem:[#allocation2 + $0x22] sm:$0xff]
      %v3757 = vld [vmem:[#allocation2 + $0x32] sm:$0xff]
      %v3758 = vld [vmem:[#allocation2 + $0x3a] sm:$0xff]
      %v3759 = vld [vmem:[#allocation2 + $0x4a] sm:$0xff]
      %v3760 = vld [vmem:[#allocation2 + $0x52] sm:$0xff]
      %v3761 = vld [vmem:[#allocation2 + $0x62] sm:$0xff]
      %v3762 = vld [vmem:[#allocation2 + $0x6a] sm:$0xff]
      %v3763 = vld [vmem:[#allocation2 + $0x7a] sm:$0xff]
      %v3764 = vld [vmem:[#allocation2 + $0x82] sm:$0xff]
      %v3765 = vld [vmem:[#allocation2 + $0x92] sm:$0xff]
      %v3766 = vld [vmem:[#allocation2 + $0x9a] sm:$0xff]
      %v3767 = vld [vmem:[#allocation2 + $0xaa] sm:$0xff]
      %v3768 = vld [vmem:[#allocation2 + $0xb2] sm:$0xff]
      %v3769 = vld [vmem:[#allocation2 + $0xc2] sm:$0xff]
      %v3770 = vld [vmem:[#allocation2 + $0xca] sm:$0xff]
      %v3771 = vld [vmem:[#allocation2 + $0xda] sm:$0xff]
      %v3772 = vld [vmem:[#allocation2 + $0xe2] sm:$0xff]
      %v3773 = vld [vmem:[#allocation2 + $0xf2] sm:$0xff]
      %v3774 = vld [vmem:[#allocation2 + $0xfa] sm:$0xff]
      %v3775 = vld [vmem:[#allocation2 + $0x10a] sm:$0xff]
      %v3776 = vld [vmem:[#allocation2 + $0x112] sm:$0xff]
      %v3777 = vld [vmem:[#allocation2 + $0x122] sm:$0xff]
      %v3778 = vld [vmem:[#allocation2 + $0x12a] sm:$0xff]
      %v3779 = vld [vmem:[#allocation2 + $0x13a] sm:$0xff]
      %v3780 = vld [vmem:[#allocation2 + $0x142] sm:$0xff]
      %v3781 = vld [vmem:[#allocation2 + $0x152] sm:$0xff]
      %v3782 = vld [vmem:[#allocation2 + $0x15a] sm:$0xff]
      %v3783 = vld [vmem:[#allocation2 + $0x16a] sm:$0xff]
      %v3784 = vld [vmem:[#allocation2 + $0x172] sm:$0xff]
      %v3785 = vld [vmem:[%s315] sm:$0xff]
      %v3786 = vld [vmem:[%s315 + $0x8] sm:$0xff]
      %v3787 = vld [vmem:[%s315 + $0x18] sm:$0xff]
      %v3788 = vld [vmem:[%s315 + $0x20] sm:$0xff]
      %v3789 = vld [vmem:[%s315 + $0x30] sm:$0xff]
      %v3790 = vld [vmem:[%s315 + $0x38] sm:$0xff]
      %v3791 = vld [vmem:[%s315 + $0x48] sm:$0xff]
      %v3792 = vld [vmem:[%s315 + $0x50] sm:$0xff]
      %v3793 = vld [vmem:[%s315 + $0x60] sm:$0xff]
      %v3794 = vld [vmem:[%s315 + $0x68] sm:$0xff]
      %v3795 = vld [vmem:[%s315 + $0x78] sm:$0xff]
      %v3796 = vld [vmem:[%s315 + $0x80] sm:$0xff]
      %v3797 = vld [vmem:[%s315 + $0x90] sm:$0xff]
      %v3798 = vld [vmem:[%s315 + $0x98] sm:$0xff]
      %v3799 = vld [vmem:[%s315 + $0xa8] sm:$0xff]
      %v3800 = vld [vmem:[%s315 + $0xb0] sm:$0xff]
      %v3801 = vld [vmem:[%s315 + $0xc0] sm:$0xff]
      %v3802 = vld [vmem:[%s315 + $0xc8] sm:$0xff]
      %v3803 = vld [vmem:[%s315 + $0xd8] sm:$0xff]
      %v3804 = vld [vmem:[%s315 + $0xe0] sm:$0xff]
      %v3805 = vld [vmem:[%s315 + $0xf0] sm:$0xff]
      %v3806 = vld [vmem:[%s315 + $0xf8] sm:$0xff]
      %v3807 = vld [vmem:[%s315 + $0x108] sm:$0xff]
      %v3808 = vld [vmem:[%s315 + $0x110] sm:$0xff]
      %v3809 = vld [vmem:[%s315 + $0x120] sm:$0xff]
      %v3810 = vld [vmem:[%s315 + $0x128] sm:$0xff]
      %v3811 = vld [vmem:[%s315 + $0x138] sm:$0xff]
      %v3812 = vld [vmem:[%s315 + $0x140] sm:$0xff]
      %v3813 = vld [vmem:[%s315 + $0x150] sm:$0xff]
      %v3814 = vld [vmem:[%s315 + $0x158] sm:$0xff]
      %v3815 = vld [vmem:[%s315 + $0x168] sm:$0xff]
      %v3816 = vld [vmem:[%s315 + $0x170] sm:$0xff]
      %3849 = vrot.lane.b32.xlu0 %v3785, 64
      %v3850 = vpop.permute.xlu0 %3849
      %3851 = vrot.lane.b32.xlu0 %v3786, 64
      %v3852 = vpop.permute.xlu0 %3851
      %3853 = vrot.lane.b32.xlu0 %v3787, 64
      %v3854 = vpop.permute.xlu0 %3853
      %3855 = vrot.lane.b32.xlu0 %v3788, 64
      %v3856 = vpop.permute.xlu0 %3855
      %3857 = vrot.lane.b32.xlu0 %v3789, 64
      %v3858 = vpop.permute.xlu0 %3857
      %3859 = vrot.lane.b32.xlu0 %v3790, 64
      %v3860 = vpop.permute.xlu0 %3859
      %3861 = vrot.lane.b32.xlu0 %v3791, 64
      %v3862 = vpop.permute.xlu0 %3861
      %3863 = vrot.lane.b32.xlu0 %v3792, 64
      %v3864 = vpop.permute.xlu0 %3863
      %3865 = vrot.lane.b32.xlu0 %v3793, 64
      %v3866 = vpop.permute.xlu0 %3865
      %3867 = vrot.lane.b32.xlu0 %v3794, 64
      %v3868 = vpop.permute.xlu0 %3867
      %3869 = vrot.lane.b32.xlu0 %v3795, 64
      %v3870 = vpop.permute.xlu0 %3869
      %3871 = vrot.lane.b32.xlu0 %v3796, 64
      %v3872 = vpop.permute.xlu0 %3871
      %3873 = vrot.lane.b32.xlu0 %v3797, 64
      %v3874 = vpop.permute.xlu0 %3873
      %3875 = vrot.lane.b32.xlu0 %v3798, 64
      %v3876 = vpop.permute.xlu0 %3875
      %3877 = vrot.lane.b32.xlu0 %v3799, 64
      %v3878 = vpop.permute.xlu0 %3877
      %3879 = vrot.lane.b32.xlu0 %v3800, 64
      %v3880 = vpop.permute.xlu0 %3879
      %3881 = vrot.lane.b32.xlu0 %v3801, 64
      %v3882 = vpop.permute.xlu0 %3881
      %3883 = vrot.lane.b32.xlu0 %v3802, 64
      %v3884 = vpop.permute.xlu0 %3883
      %3885 = vrot.lane.b32.xlu0 %v3803, 64
      %v3886 = vpop.permute.xlu0 %3885
      %3887 = vrot.lane.b32.xlu0 %v3804, 64
      %v3888 = vpop.permute.xlu0 %3887
      %3889 = vrot.lane.b32.xlu0 %v3805, 64
      %v3890 = vpop.permute.xlu0 %3889
      %3891 = vrot.lane.b32.xlu0 %v3806, 64
      %v3892 = vpop.permute.xlu0 %3891
      %3893 = vrot.lane.b32.xlu0 %v3807, 64
      %v3894 = vpop.permute.xlu0 %3893
      %3895 = vrot.lane.b32.xlu0 %v3808, 64
      %v3896 = vpop.permute.xlu0 %3895
      %3897 = vrot.lane.b32.xlu0 %v3809, 64
      %v3898 = vpop.permute.xlu0 %3897
      %3899 = vrot.lane.b32.xlu0 %v3810, 64
      %v3900 = vpop.permute.xlu0 %3899
      %3901 = vrot.lane.b32.xlu0 %v3811, 64
      %v3902 = vpop.permute.xlu0 %3901
      %3903 = vrot.lane.b32.xlu0 %v3812, 64
      %v3904 = vpop.permute.xlu0 %3903
      %3905 = vrot.lane.b32.xlu0 %v3813, 64
      %v3906 = vpop.permute.xlu0 %3905
      %3907 = vrot.lane.b32.xlu0 %v3814, 64
      %v3908 = vpop.permute.xlu0 %3907
      %3909 = vrot.lane.b32.xlu0 %v3815, 64
      %v3910 = vpop.permute.xlu0 %3909
      %3911 = vrot.lane.b32.xlu0 %v3816, 64
      %v3912 = vpop.permute.xlu0 %3911
      %v3945 = vsel %vm306, %v3753, %v3850
      %v3946 = vsel %vm306, %v3754, %v3852
      %v3947 = vsel %vm306, %v3755, %v3854
      %v3948 = vsel %vm306, %v3756, %v3856
      %v3949 = vsel %vm306, %v3757, %v3858
      %v3950 = vsel %vm306, %v3758, %v3860
      %v3951 = vsel %vm306, %v3759, %v3862
      %v3952 = vsel %vm306, %v3760, %v3864
      %v3953 = vsel %vm306, %v3761, %v3866
      %v3954 = vsel %vm306, %v3762, %v3868
      %v3955 = vsel %vm306, %v3763, %v3870
      %v3956 = vsel %vm306, %v3764, %v3872
      %v3957 = vsel %vm306, %v3765, %v3874
      %v3958 = vsel %vm306, %v3766, %v3876
      %v3959 = vsel %vm306, %v3767, %v3878
      %v3960 = vsel %vm306, %v3768, %v3880
      %v3961 = vsel %vm306, %v3769, %v3882
      %v3962 = vsel %vm306, %v3770, %v3884
      %v3963 = vsel %vm306, %v3771, %v3886
      %v3964 = vsel %vm306, %v3772, %v3888
      %v3965 = vsel %vm306, %v3773, %v3890
      %v3966 = vsel %vm306, %v3774, %v3892
      %v3967 = vsel %vm306, %v3775, %v3894
      %v3968 = vsel %vm306, %v3776, %v3896
      %v3969 = vsel %vm306, %v3777, %v3898
      %v3970 = vsel %vm306, %v3778, %v3900
      %v3971 = vsel %vm306, %v3779, %v3902
      %v3972 = vsel %vm306, %v3780, %v3904
      %v3973 = vsel %vm306, %v3781, %v3906
      %v3974 = vsel %vm306, %v3782, %v3908
      %v3975 = vsel %vm306, %v3783, %v3910
      %v3976 = vsel %vm306, %v3784, %v3912
      %3977 = vst [vmem:[#allocation3 + $0x8] sm:$0xff] %v3945
      %3978 = vst [vmem:[#allocation3 + $0x30] sm:$0xff] %v3946
      %3979 = vst [vmem:[#allocation3 + $0x58] sm:$0xff] %v3947
      %3980 = vst [vmem:[#allocation3 + $0x80] sm:$0xff] %v3948
      %3981 = vst [vmem:[#allocation3 + $0xa8] sm:$0xff] %v3949
      %3982 = vst [vmem:[#allocation3 + $0xd0] sm:$0xff] %v3950
      %3983 = vst [vmem:[#allocation3 + $0xf8] sm:$0xff] %v3951
      %3984 = vst [vmem:[#allocation3 + $0x120] sm:$0xff] %v3952
      %3985 = vst [vmem:[#allocation3 + $0x148] sm:$0xff] %v3953
      %3986 = vst [vmem:[#allocation3 + $0x170] sm:$0xff] %v3954
      %3987 = vst [vmem:[#allocation3 + $0x198] sm:$0xff] %v3955
      %3988 = vst [vmem:[#allocation3 + $0x1c0] sm:$0xff] %v3956
      %3989 = vst [vmem:[#allocation3 + $0x1e8] sm:$0xff] %v3957
      %3990 = vst [vmem:[#allocation3 + $0x210] sm:$0xff] %v3958
      %3991 = vst [vmem:[#allocation3 + $0x238] sm:$0xff] %v3959
      %3992 = vst [vmem:[#allocation3 + $0x260] sm:$0xff] %v3960
      %3993 = vst [vmem:[#allocation3 + $0x288] sm:$0xff] %v3961
      %3994 = vst [vmem:[#allocation3 + $0x2b0] sm:$0xff] %v3962
      %3995 = vst [vmem:[#allocation3 + $0x2d8] sm:$0xff] %v3963
      %3996 = vst [vmem:[#allocation3 + $0x300] sm:$0xff] %v3964
      %3997 = vst [vmem:[#allocation3 + $0x328] sm:$0xff] %v3965
      %3998 = vst [vmem:[#allocation3 + $0x350] sm:$0xff] %v3966
      %3999 = vst [vmem:[#allocation3 + $0x378] sm:$0xff] %v3967
      %4000 = vst [vmem:[#allocation3 + $0x3a0] sm:$0xff] %v3968
      %4001 = vst [vmem:[#allocation3 + $0x3c8] sm:$0xff] %v3969
      %4002 = vst [vmem:[#allocation3 + $0x3f0] sm:$0xff] %v3970
      %4003 = vst [vmem:[#allocation3 + $0x418] sm:$0xff] %v3971
      %4004 = vst [vmem:[#allocation3 + $0x440] sm:$0xff] %v3972
      %4005 = vst [vmem:[#allocation3 + $0x468] sm:$0xff] %v3973
      %4006 = vst [vmem:[#allocation3 + $0x490] sm:$0xff] %v3974
      %4007 = vst [vmem:[#allocation3 + $0x4b8] sm:$0xff] %v3975
      %4008 = vst [vmem:[#allocation3 + $0x4e0] sm:$0xff] %v3976
      %v4009 = vld [vmem:[%s315 + $0x1] sm:$0xff]
      %v4010 = vld [vmem:[%s315 + $0x9] sm:$0xff]
      %v4011 = vld [vmem:[%s315 + $0x19] sm:$0xff]
      %v4012 = vld [vmem:[%s315 + $0x21] sm:$0xff]
      %v4013 = vld [vmem:[%s315 + $0x31] sm:$0xff]
      %v4014 = vld [vmem:[%s315 + $0x39] sm:$0xff]
      %v4015 = vld [vmem:[%s315 + $0x49] sm:$0xff]
      %v4016 = vld [vmem:[%s315 + $0x51] sm:$0xff]
      %v4017 = vld [vmem:[%s315 + $0x61] sm:$0xff]
      %v4018 = vld [vmem:[%s315 + $0x69] sm:$0xff]
      %v4019 = vld [vmem:[%s315 + $0x79] sm:$0xff]
      %v4020 = vld [vmem:[%s315 + $0x81] sm:$0xff]
      %v4021 = vld [vmem:[%s315 + $0x91] sm:$0xff]
      %v4022 = vld [vmem:[%s315 + $0x99] sm:$0xff]
      %v4023 = vld [vmem:[%s315 + $0xa9] sm:$0xff]
      %v4024 = vld [vmem:[%s315 + $0xb1] sm:$0xff]
      %v4025 = vld [vmem:[%s315 + $0xc1] sm:$0xff]
      %v4026 = vld [vmem:[%s315 + $0xc9] sm:$0xff]
      %v4027 = vld [vmem:[%s315 + $0xd9] sm:$0xff]
      %v4028 = vld [vmem:[%s315 + $0xe1] sm:$0xff]
      %v4029 = vld [vmem:[%s315 + $0xf1] sm:$0xff]
      %v4030 = vld [vmem:[%s315 + $0xf9] sm:$0xff]
      %v4031 = vld [vmem:[%s315 + $0x109] sm:$0xff]
      %v4032 = vld [vmem:[%s315 + $0x111] sm:$0xff]
      %v4033 = vld [vmem:[%s315 + $0x121] sm:$0xff]
      %v4034 = vld [vmem:[%s315 + $0x129] sm:$0xff]
      %v4035 = vld [vmem:[%s315 + $0x139] sm:$0xff]
      %v4036 = vld [vmem:[%s315 + $0x141] sm:$0xff]
      %v4037 = vld [vmem:[%s315 + $0x151] sm:$0xff]
      %v4038 = vld [vmem:[%s315 + $0x159] sm:$0xff]
      %v4039 = vld [vmem:[%s315 + $0x169] sm:$0xff]
      %v4040 = vld [vmem:[%s315 + $0x171] sm:$0xff]
      %v4041 = vld [vmem:[%s315 + $0x2] sm:$0xff]
      %v4042 = vld [vmem:[%s315 + $0xa] sm:$0xff]
      %v4043 = vld [vmem:[%s315 + $0x1a] sm:$0xff]
      %v4044 = vld [vmem:[%s315 + $0x22] sm:$0xff]
      %v4045 = vld [vmem:[%s315 + $0x32] sm:$0xff]
      %v4046 = vld [vmem:[%s315 + $0x3a] sm:$0xff]
      %v4047 = vld [vmem:[%s315 + $0x4a] sm:$0xff]
      %v4048 = vld [vmem:[%s315 + $0x52] sm:$0xff]
      %v4049 = vld [vmem:[%s315 + $0x62] sm:$0xff]
      %v4050 = vld [vmem:[%s315 + $0x6a] sm:$0xff]
      %v4051 = vld [vmem:[%s315 + $0x7a] sm:$0xff]
      %v4052 = vld [vmem:[%s315 + $0x82] sm:$0xff]
      %v4053 = vld [vmem:[%s315 + $0x92] sm:$0xff]
      %v4054 = vld [vmem:[%s315 + $0x9a] sm:$0xff]
      %v4055 = vld [vmem:[%s315 + $0xaa] sm:$0xff]
      %v4056 = vld [vmem:[%s315 + $0xb2] sm:$0xff]
      %v4057 = vld [vmem:[%s315 + $0xc2] sm:$0xff]
      %v4058 = vld [vmem:[%s315 + $0xca] sm:$0xff]
      %v4059 = vld [vmem:[%s315 + $0xda] sm:$0xff]
      %v4060 = vld [vmem:[%s315 + $0xe2] sm:$0xff]
      %v4061 = vld [vmem:[%s315 + $0xf2] sm:$0xff]
      %v4062 = vld [vmem:[%s315 + $0xfa] sm:$0xff]
      %v4063 = vld [vmem:[%s315 + $0x10a] sm:$0xff]
      %v4064 = vld [vmem:[%s315 + $0x112] sm:$0xff]
      %v4065 = vld [vmem:[%s315 + $0x122] sm:$0xff]
      %v4066 = vld [vmem:[%s315 + $0x12a] sm:$0xff]
      %v4067 = vld [vmem:[%s315 + $0x13a] sm:$0xff]
      %v4068 = vld [vmem:[%s315 + $0x142] sm:$0xff]
      %v4069 = vld [vmem:[%s315 + $0x152] sm:$0xff]
      %v4070 = vld [vmem:[%s315 + $0x15a] sm:$0xff]
      %v4071 = vld [vmem:[%s315 + $0x16a] sm:$0xff]
      %v4072 = vld [vmem:[%s315 + $0x172] sm:$0xff]
      %4105 = vrot.lane.b32.xlu0 %v4041, 64
      %v4106 = vpop.permute.xlu0 %4105
      %4107 = vrot.lane.b32.xlu0 %v4042, 64
      %v4108 = vpop.permute.xlu0 %4107
      %4109 = vrot.lane.b32.xlu0 %v4043, 64
      %v4110 = vpop.permute.xlu0 %4109
      %4111 = vrot.lane.b32.xlu0 %v4044, 64
      %v4112 = vpop.permute.xlu0 %4111
      %4113 = vrot.lane.b32.xlu0 %v4045, 64
      %v4114 = vpop.permute.xlu0 %4113
      %4115 = vrot.lane.b32.xlu0 %v4046, 64
      %v4116 = vpop.permute.xlu0 %4115
      %4117 = vrot.lane.b32.xlu0 %v4047, 64
      %v4118 = vpop.permute.xlu0 %4117
      %4119 = vrot.lane.b32.xlu0 %v4048, 64
      %v4120 = vpop.permute.xlu0 %4119
      %4121 = vrot.lane.b32.xlu0 %v4049, 64
      %v4122 = vpop.permute.xlu0 %4121
      %4123 = vrot.lane.b32.xlu0 %v4050, 64
      %v4124 = vpop.permute.xlu0 %4123
      %4125 = vrot.lane.b32.xlu0 %v4051, 64
      %v4126 = vpop.permute.xlu0 %4125
      %4127 = vrot.lane.b32.xlu0 %v4052, 64
      %v4128 = vpop.permute.xlu0 %4127
      %4129 = vrot.lane.b32.xlu0 %v4053, 64
      %v4130 = vpop.permute.xlu0 %4129
      %4131 = vrot.lane.b32.xlu0 %v4054, 64
      %v4132 = vpop.permute.xlu0 %4131
      %4133 = vrot.lane.b32.xlu0 %v4055, 64
      %v4134 = vpop.permute.xlu0 %4133
      %4135 = vrot.lane.b32.xlu0 %v4056, 64
      %v4136 = vpop.permute.xlu0 %4135
      %4137 = vrot.lane.b32.xlu0 %v4057, 64
      %v4138 = vpop.permute.xlu0 %4137
      %4139 = vrot.lane.b32.xlu0 %v4058, 64
      %v4140 = vpop.permute.xlu0 %4139
      %4141 = vrot.lane.b32.xlu0 %v4059, 64
      %v4142 = vpop.permute.xlu0 %4141
      %4143 = vrot.lane.b32.xlu0 %v4060, 64
      %v4144 = vpop.permute.xlu0 %4143
      %4145 = vrot.lane.b32.xlu0 %v4061, 64
      %v4146 = vpop.permute.xlu0 %4145
      %4147 = vrot.lane.b32.xlu0 %v4062, 64
      %v4148 = vpop.permute.xlu0 %4147
      %4149 = vrot.lane.b32.xlu0 %v4063, 64
      %v4150 = vpop.permute.xlu0 %4149
      %4151 = vrot.lane.b32.xlu0 %v4064, 64
      %v4152 = vpop.permute.xlu0 %4151
      %4153 = vrot.lane.b32.xlu0 %v4065, 64
      %v4154 = vpop.permute.xlu0 %4153
      %4155 = vrot.lane.b32.xlu0 %v4066, 64
      %v4156 = vpop.permute.xlu0 %4155
      %4157 = vrot.lane.b32.xlu0 %v4067, 64
      %v4158 = vpop.permute.xlu0 %4157
      %4159 = vrot.lane.b32.xlu0 %v4068, 64
      %v4160 = vpop.permute.xlu0 %4159
      %4161 = vrot.lane.b32.xlu0 %v4069, 64
      %v4162 = vpop.permute.xlu0 %4161
      %4163 = vrot.lane.b32.xlu0 %v4070, 64
      %v4164 = vpop.permute.xlu0 %4163
      %4165 = vrot.lane.b32.xlu0 %v4071, 64
      %v4166 = vpop.permute.xlu0 %4165
      %4167 = vrot.lane.b32.xlu0 %v4072, 64
      %v4168 = vpop.permute.xlu0 %4167
      %v4201 = vsel %vm306, %v4009, %v4106
      %v4202 = vsel %vm306, %v4010, %v4108
      %v4203 = vsel %vm306, %v4011, %v4110
      %v4204 = vsel %vm306, %v4012, %v4112
      %v4205 = vsel %vm306, %v4013, %v4114
      %v4206 = vsel %vm306, %v4014, %v4116
      %v4207 = vsel %vm306, %v4015, %v4118
      %v4208 = vsel %vm306, %v4016, %v4120
      %v4209 = vsel %vm306, %v4017, %v4122
      %v4210 = vsel %vm306, %v4018, %v4124
      %v4211 = vsel %vm306, %v4019, %v4126
      %v4212 = vsel %vm306, %v4020, %v4128
      %v4213 = vsel %vm306, %v4021, %v4130
      %v4214 = vsel %vm306, %v4022, %v4132
      %v4215 = vsel %vm306, %v4023, %v4134
      %v4216 = vsel %vm306, %v4024, %v4136
      %v4217 = vsel %vm306, %v4025, %v4138
      %v4218 = vsel %vm306, %v4026, %v4140
      %v4219 = vsel %vm306, %v4027, %v4142
      %v4220 = vsel %vm306, %v4028, %v4144
      %v4221 = vsel %vm306, %v4029, %v4146
      %v4222 = vsel %vm306, %v4030, %v4148
      %v4223 = vsel %vm306, %v4031, %v4150
      %v4224 = vsel %vm306, %v4032, %v4152
      %v4225 = vsel %vm306, %v4033, %v4154
      %v4226 = vsel %vm306, %v4034, %v4156
      %v4227 = vsel %vm306, %v4035, %v4158
      %v4228 = vsel %vm306, %v4036, %v4160
      %v4229 = vsel %vm306, %v4037, %v4162
      %v4230 = vsel %vm306, %v4038, %v4164
      %v4231 = vsel %vm306, %v4039, %v4166
      %v4232 = vsel %vm306, %v4040, %v4168
      %4233 = vst [vmem:[#allocation3 + $0x10] sm:$0xff] %v4201
      %4234 = vst [vmem:[#allocation3 + $0x38] sm:$0xff] %v4202
      %4235 = vst [vmem:[#allocation3 + $0x60] sm:$0xff] %v4203
      %4236 = vst [vmem:[#allocation3 + $0x88] sm:$0xff] %v4204
      %4237 = vst [vmem:[#allocation3 + $0xb0] sm:$0xff] %v4205
      %4238 = vst [vmem:[#allocation3 + $0xd8] sm:$0xff] %v4206
      %4239 = vst [vmem:[#allocation3 + $0x100] sm:$0xff] %v4207
      %4240 = vst [vmem:[#allocation3 + $0x128] sm:$0xff] %v4208
      %4241 = vst [vmem:[#allocation3 + $0x150] sm:$0xff] %v4209
      %4242 = vst [vmem:[#allocation3 + $0x178] sm:$0xff] %v4210
      %4243 = vst [vmem:[#allocation3 + $0x1a0] sm:$0xff] %v4211
      %4244 = vst [vmem:[#allocation3 + $0x1c8] sm:$0xff] %v4212
      %4245 = vst [vmem:[#allocation3 + $0x1f0] sm:$0xff] %v4213
      %4246 = vst [vmem:[#allocation3 + $0x218] sm:$0xff] %v4214
      %4247 = vst [vmem:[#allocation3 + $0x240] sm:$0xff] %v4215
      %4248 = vst [vmem:[#allocation3 + $0x268] sm:$0xff] %v4216
      %4249 = vst [vmem:[#allocation3 + $0x290] sm:$0xff] %v4217
      %4250 = vst [vmem:[#allocation3 + $0x2b8] sm:$0xff] %v4218
      %4251 = vst [vmem:[#allocation3 + $0x2e0] sm:$0xff] %v4219
      %4252 = vst [vmem:[#allocation3 + $0x308] sm:$0xff] %v4220
      %4253 = vst [vmem:[#allocation3 + $0x330] sm:$0xff] %v4221
      %4254 = vst [vmem:[#allocation3 + $0x358] sm:$0xff] %v4222
      %4255 = vst [vmem:[#allocation3 + $0x380] sm:$0xff] %v4223
      %4256 = vst [vmem:[#allocation3 + $0x3a8] sm:$0xff] %v4224
      %4257 = vst [vmem:[#allocation3 + $0x3d0] sm:$0xff] %v4225
      %4258 = vst [vmem:[#allocation3 + $0x3f8] sm:$0xff] %v4226
      %4259 = vst [vmem:[#allocation3 + $0x420] sm:$0xff] %v4227
      %4260 = vst [vmem:[#allocation3 + $0x448] sm:$0xff] %v4228
      %4261 = vst [vmem:[#allocation3 + $0x470] sm:$0xff] %v4229
      %4262 = vst [vmem:[#allocation3 + $0x498] sm:$0xff] %v4230
      %4263 = vst [vmem:[#allocation3 + $0x4c0] sm:$0xff] %v4231
      %4264 = vst [vmem:[#allocation3 + $0x4e8] sm:$0xff] %v4232
      %v4265 = vld [vmem:[%s1844] sm:$0xff]
      %v4266 = vld [vmem:[%s1844 + $0x8] sm:$0xff]
      %v4267 = vld [vmem:[%s1844 + $0x18] sm:$0xff]
      %v4268 = vld [vmem:[%s1844 + $0x20] sm:$0xff]
      %v4269 = vld [vmem:[%s1844 + $0x30] sm:$0xff]
      %v4270 = vld [vmem:[%s1844 + $0x38] sm:$0xff]
      %v4271 = vld [vmem:[%s1844 + $0x48] sm:$0xff]
      %v4272 = vld [vmem:[%s1844 + $0x50] sm:$0xff]
      %v4273 = vld [vmem:[%s1844 + $0x60] sm:$0xff]
      %v4274 = vld [vmem:[%s1844 + $0x68] sm:$0xff]
      %v4275 = vld [vmem:[%s1844 + $0x78] sm:$0xff]
      %v4276 = vld [vmem:[%s1844 + $0x80] sm:$0xff]
      %v4277 = vld [vmem:[%s1844 + $0x90] sm:$0xff]
      %v4278 = vld [vmem:[%s1844 + $0x98] sm:$0xff]
      %v4279 = vld [vmem:[%s1844 + $0xa8] sm:$0xff]
      %v4280 = vld [vmem:[%s1844 + $0xb0] sm:$0xff]
      %v4281 = vld [vmem:[%s1844 + $0xc0] sm:$0xff]
      %v4282 = vld [vmem:[%s1844 + $0xc8] sm:$0xff]
      %v4283 = vld [vmem:[%s1844 + $0xd8] sm:$0xff]
      %v4284 = vld [vmem:[%s1844 + $0xe0] sm:$0xff]
      %v4285 = vld [vmem:[%s1844 + $0xf0] sm:$0xff]
      %v4286 = vld [vmem:[%s1844 + $0xf8] sm:$0xff]
      %v4287 = vld [vmem:[%s1844 + $0x108] sm:$0xff]
      %v4288 = vld [vmem:[%s1844 + $0x110] sm:$0xff]
      %v4289 = vld [vmem:[%s1844 + $0x120] sm:$0xff]
      %v4290 = vld [vmem:[%s1844 + $0x128] sm:$0xff]
      %v4291 = vld [vmem:[%s1844 + $0x138] sm:$0xff]
      %v4292 = vld [vmem:[%s1844 + $0x140] sm:$0xff]
      %v4293 = vld [vmem:[%s1844 + $0x150] sm:$0xff]
      %v4294 = vld [vmem:[%s1844 + $0x158] sm:$0xff]
      %v4295 = vld [vmem:[%s1844 + $0x168] sm:$0xff]
      %v4296 = vld [vmem:[%s1844 + $0x170] sm:$0xff]
      %v4297 = vld [vmem:[%s1844 + $0x1] sm:$0xff]
      %v4298 = vld [vmem:[%s1844 + $0x9] sm:$0xff]
      %v4299 = vld [vmem:[%s1844 + $0x19] sm:$0xff]
      %v4300 = vld [vmem:[%s1844 + $0x21] sm:$0xff]
      %v4301 = vld [vmem:[%s1844 + $0x31] sm:$0xff]
      %v4302 = vld [vmem:[%s1844 + $0x39] sm:$0xff]
      %v4303 = vld [vmem:[%s1844 + $0x49] sm:$0xff]
      %v4304 = vld [vmem:[%s1844 + $0x51] sm:$0xff]
      %v4305 = vld [vmem:[%s1844 + $0x61] sm:$0xff]
      %v4306 = vld [vmem:[%s1844 + $0x69] sm:$0xff]
      %v4307 = vld [vmem:[%s1844 + $0x79] sm:$0xff]
      %v4308 = vld [vmem:[%s1844 + $0x81] sm:$0xff]
      %v4309 = vld [vmem:[%s1844 + $0x91] sm:$0xff]
      %v4310 = vld [vmem:[%s1844 + $0x99] sm:$0xff]
      %v4311 = vld [vmem:[%s1844 + $0xa9] sm:$0xff]
      %v4312 = vld [vmem:[%s1844 + $0xb1] sm:$0xff]
      %v4313 = vld [vmem:[%s1844 + $0xc1] sm:$0xff]
      %v4314 = vld [vmem:[%s1844 + $0xc9] sm:$0xff]
      %v4315 = vld [vmem:[%s1844 + $0xd9] sm:$0xff]
      %v4316 = vld [vmem:[%s1844 + $0xe1] sm:$0xff]
      %v4317 = vld [vmem:[%s1844 + $0xf1] sm:$0xff]
      %v4318 = vld [vmem:[%s1844 + $0xf9] sm:$0xff]
      %v4319 = vld [vmem:[%s1844 + $0x109] sm:$0xff]
      %v4320 = vld [vmem:[%s1844 + $0x111] sm:$0xff]
      %v4321 = vld [vmem:[%s1844 + $0x121] sm:$0xff]
      %v4322 = vld [vmem:[%s1844 + $0x129] sm:$0xff]
      %v4323 = vld [vmem:[%s1844 + $0x139] sm:$0xff]
      %v4324 = vld [vmem:[%s1844 + $0x141] sm:$0xff]
      %v4325 = vld [vmem:[%s1844 + $0x151] sm:$0xff]
      %v4326 = vld [vmem:[%s1844 + $0x159] sm:$0xff]
      %v4327 = vld [vmem:[%s1844 + $0x169] sm:$0xff]
      %v4328 = vld [vmem:[%s1844 + $0x171] sm:$0xff]
      %4361 = vrot.lane.b32.xlu0 %v4297, 64
      %v4362 = vpop.permute.xlu0 %4361
      %4363 = vrot.lane.b32.xlu0 %v4298, 64
      %v4364 = vpop.permute.xlu0 %4363
      %4365 = vrot.lane.b32.xlu0 %v4299, 64
      %v4366 = vpop.permute.xlu0 %4365
      %4367 = vrot.lane.b32.xlu0 %v4300, 64
      %v4368 = vpop.permute.xlu0 %4367
      %4369 = vrot.lane.b32.xlu0 %v4301, 64
      %v4370 = vpop.permute.xlu0 %4369
      %4371 = vrot.lane.b32.xlu0 %v4302, 64
      %v4372 = vpop.permute.xlu0 %4371
      %4373 = vrot.lane.b32.xlu0 %v4303, 64
      %v4374 = vpop.permute.xlu0 %4373
      %4375 = vrot.lane.b32.xlu0 %v4304, 64
      %v4376 = vpop.permute.xlu0 %4375
      %4377 = vrot.lane.b32.xlu0 %v4305, 64
      %v4378 = vpop.permute.xlu0 %4377
      %4379 = vrot.lane.b32.xlu0 %v4306, 64
      %v4380 = vpop.permute.xlu0 %4379
      %4381 = vrot.lane.b32.xlu0 %v4307, 64
      %v4382 = vpop.permute.xlu0 %4381
      %4383 = vrot.lane.b32.xlu0 %v4308, 64
      %v4384 = vpop.permute.xlu0 %4383
      %4385 = vrot.lane.b32.xlu0 %v4309, 64
      %v4386 = vpop.permute.xlu0 %4385
      %4387 = vrot.lane.b32.xlu0 %v4310, 64
      %v4388 = vpop.permute.xlu0 %4387
      %4389 = vrot.lane.b32.xlu0 %v4311, 64
      %v4390 = vpop.permute.xlu0 %4389
      %4391 = vrot.lane.b32.xlu0 %v4312, 64
      %v4392 = vpop.permute.xlu0 %4391
      %4393 = vrot.lane.b32.xlu0 %v4313, 64
      %v4394 = vpop.permute.xlu0 %4393
      %4395 = vrot.lane.b32.xlu0 %v4314, 64
      %v4396 = vpop.permute.xlu0 %4395
      %4397 = vrot.lane.b32.xlu0 %v4315, 64
      %v4398 = vpop.permute.xlu0 %4397
      %4399 = vrot.lane.b32.xlu0 %v4316, 64
      %v4400 = vpop.permute.xlu0 %4399
      %4401 = vrot.lane.b32.xlu0 %v4317, 64
      %v4402 = vpop.permute.xlu0 %4401
      %4403 = vrot.lane.b32.xlu0 %v4318, 64
      %v4404 = vpop.permute.xlu0 %4403
      %4405 = vrot.lane.b32.xlu0 %v4319, 64
      %v4406 = vpop.permute.xlu0 %4405
      %4407 = vrot.lane.b32.xlu0 %v4320, 64
      %v4408 = vpop.permute.xlu0 %4407
      %4409 = vrot.lane.b32.xlu0 %v4321, 64
      %v4410 = vpop.permute.xlu0 %4409
      %4411 = vrot.lane.b32.xlu0 %v4322, 64
      %v4412 = vpop.permute.xlu0 %4411
      %4413 = vrot.lane.b32.xlu0 %v4323, 64
      %v4414 = vpop.permute.xlu0 %4413
      %4415 = vrot.lane.b32.xlu0 %v4324, 64
      %v4416 = vpop.permute.xlu0 %4415
      %4417 = vrot.lane.b32.xlu0 %v4325, 64
      %v4418 = vpop.permute.xlu0 %4417
      %4419 = vrot.lane.b32.xlu0 %v4326, 64
      %v4420 = vpop.permute.xlu0 %4419
      %4421 = vrot.lane.b32.xlu0 %v4327, 64
      %v4422 = vpop.permute.xlu0 %4421
      %4423 = vrot.lane.b32.xlu0 %v4328, 64
      %v4424 = vpop.permute.xlu0 %4423
      %v4457 = vsel %vm306, %v4265, %v4362
      %v4458 = vsel %vm306, %v4266, %v4364
      %v4459 = vsel %vm306, %v4267, %v4366
      %v4460 = vsel %vm306, %v4268, %v4368
      %v4461 = vsel %vm306, %v4269, %v4370
      %v4462 = vsel %vm306, %v4270, %v4372
      %v4463 = vsel %vm306, %v4271, %v4374
      %v4464 = vsel %vm306, %v4272, %v4376
      %v4465 = vsel %vm306, %v4273, %v4378
      %v4466 = vsel %vm306, %v4274, %v4380
      %v4467 = vsel %vm306, %v4275, %v4382
      %v4468 = vsel %vm306, %v4276, %v4384
      %v4469 = vsel %vm306, %v4277, %v4386
      %v4470 = vsel %vm306, %v4278, %v4388
      %v4471 = vsel %vm306, %v4279, %v4390
      %v4472 = vsel %vm306, %v4280, %v4392
      %v4473 = vsel %vm306, %v4281, %v4394
      %v4474 = vsel %vm306, %v4282, %v4396
      %v4475 = vsel %vm306, %v4283, %v4398
      %v4476 = vsel %vm306, %v4284, %v4400
      %v4477 = vsel %vm306, %v4285, %v4402
      %v4478 = vsel %vm306, %v4286, %v4404
      %v4479 = vsel %vm306, %v4287, %v4406
      %v4480 = vsel %vm306, %v4288, %v4408
      %v4481 = vsel %vm306, %v4289, %v4410
      %v4482 = vsel %vm306, %v4290, %v4412
      %v4483 = vsel %vm306, %v4291, %v4414
      %v4484 = vsel %vm306, %v4292, %v4416
      %v4485 = vsel %vm306, %v4293, %v4418
      %v4486 = vsel %vm306, %v4294, %v4420
      %v4487 = vsel %vm306, %v4295, %v4422
      %v4488 = vsel %vm306, %v4296, %v4424
      %4489 = vst [vmem:[#allocation3 + $0x18] sm:$0xff] %v4457
      %4490 = vst [vmem:[#allocation3 + $0x40] sm:$0xff] %v4458
      %4491 = vst [vmem:[#allocation3 + $0x68] sm:$0xff] %v4459
      %4492 = vst [vmem:[#allocation3 + $0x90] sm:$0xff] %v4460
      %4493 = vst [vmem:[#allocation3 + $0xb8] sm:$0xff] %v4461
      %4494 = vst [vmem:[#allocation3 + $0xe0] sm:$0xff] %v4462
      %4495 = vst [vmem:[#allocation3 + $0x108] sm:$0xff] %v4463
      %4496 = vst [vmem:[#allocation3 + $0x130] sm:$0xff] %v4464
      %4497 = vst [vmem:[#allocation3 + $0x158] sm:$0xff] %v4465
      %4498 = vst [vmem:[#allocation3 + $0x180] sm:$0xff] %v4466
      %4499 = vst [vmem:[#allocation3 + $0x1a8] sm:$0xff] %v4467
      %4500 = vst [vmem:[#allocation3 + $0x1d0] sm:$0xff] %v4468
      %4501 = vst [vmem:[#allocation3 + $0x1f8] sm:$0xff] %v4469
      %4502 = vst [vmem:[#allocation3 + $0x220] sm:$0xff] %v4470
      %4503 = vst [vmem:[#allocation3 + $0x248] sm:$0xff] %v4471
      %4504 = vst [vmem:[#allocation3 + $0x270] sm:$0xff] %v4472
      %4505 = vst [vmem:[#allocation3 + $0x298] sm:$0xff] %v4473
      %4506 = vst [vmem:[#allocation3 + $0x2c0] sm:$0xff] %v4474
      %4507 = vst [vmem:[#allocation3 + $0x2e8] sm:$0xff] %v4475
      %4508 = vst [vmem:[#allocation3 + $0x310] sm:$0xff] %v4476
      %4509 = vst [vmem:[#allocation3 + $0x338] sm:$0xff] %v4477
      %4510 = vst [vmem:[#allocation3 + $0x360] sm:$0xff] %v4478
      %4511 = vst [vmem:[#allocation3 + $0x388] sm:$0xff] %v4479
      %4512 = vst [vmem:[#allocation3 + $0x3b0] sm:$0xff] %v4480
      %4513 = vst [vmem:[#allocation3 + $0x3d8] sm:$0xff] %v4481
      %4514 = vst [vmem:[#allocation3 + $0x400] sm:$0xff] %v4482
      %4515 = vst [vmem:[#allocation3 + $0x428] sm:$0xff] %v4483
      %4516 = vst [vmem:[#allocation3 + $0x450] sm:$0xff] %v4484
      %4517 = vst [vmem:[#allocation3 + $0x478] sm:$0xff] %v4485
      %4518 = vst [vmem:[#allocation3 + $0x4a0] sm:$0xff] %v4486
      %4519 = vst [vmem:[#allocation3 + $0x4c8] sm:$0xff] %v4487
      %4520 = vst [vmem:[#allocation3 + $0x4f0] sm:$0xff] %v4488
      %v4521 = vld [vmem:[%s1844 + $0x2] sm:$0xff]
      %v4522 = vld [vmem:[%s1844 + $0xa] sm:$0xff]
      %v4523 = vld [vmem:[%s1844 + $0x1a] sm:$0xff]
      %v4524 = vld [vmem:[%s1844 + $0x22] sm:$0xff]
      %v4525 = vld [vmem:[%s1844 + $0x32] sm:$0xff]
      %v4526 = vld [vmem:[%s1844 + $0x3a] sm:$0xff]
      %v4527 = vld [vmem:[%s1844 + $0x4a] sm:$0xff]
      %v4528 = vld [vmem:[%s1844 + $0x52] sm:$0xff]
      %v4529 = vld [vmem:[%s1844 + $0x62] sm:$0xff]
      %v4530 = vld [vmem:[%s1844 + $0x6a] sm:$0xff]
      %v4531 = vld [vmem:[%s1844 + $0x7a] sm:$0xff]
      %v4532 = vld [vmem:[%s1844 + $0x82] sm:$0xff]
      %v4533 = vld [vmem:[%s1844 + $0x92] sm:$0xff]
      %v4534 = vld [vmem:[%s1844 + $0x9a] sm:$0xff]
      %v4535 = vld [vmem:[%s1844 + $0xaa] sm:$0xff]
      %v4536 = vld [vmem:[%s1844 + $0xb2] sm:$0xff]
      %v4537 = vld [vmem:[%s1844 + $0xc2] sm:$0xff]
      %v4538 = vld [vmem:[%s1844 + $0xca] sm:$0xff]
      %v4539 = vld [vmem:[%s1844 + $0xda] sm:$0xff]
      %v4540 = vld [vmem:[%s1844 + $0xe2] sm:$0xff]
      %v4541 = vld [vmem:[%s1844 + $0xf2] sm:$0xff]
      %v4542 = vld [vmem:[%s1844 + $0xfa] sm:$0xff]
      %v4543 = vld [vmem:[%s1844 + $0x10a] sm:$0xff]
      %v4544 = vld [vmem:[%s1844 + $0x112] sm:$0xff]
      %v4545 = vld [vmem:[%s1844 + $0x122] sm:$0xff]
      %v4546 = vld [vmem:[%s1844 + $0x12a] sm:$0xff]
      %v4547 = vld [vmem:[%s1844 + $0x13a] sm:$0xff]
      %v4548 = vld [vmem:[%s1844 + $0x142] sm:$0xff]
      %v4549 = vld [vmem:[%s1844 + $0x152] sm:$0xff]
      %v4550 = vld [vmem:[%s1844 + $0x15a] sm:$0xff]
      %v4551 = vld [vmem:[%s1844 + $0x16a] sm:$0xff]
      %v4552 = vld [vmem:[%s1844 + $0x172] sm:$0xff]
      %4553 = vst.msk [vmem:[#allocation3 + $0x20] sm:$0xff] %vm306, %v4521
      %4554 = vst.msk [vmem:[#allocation3 + $0x48] sm:$0xff] %vm306, %v4522
      %4555 = vst.msk [vmem:[#allocation3 + $0x70] sm:$0xff] %vm306, %v4523
      %4556 = vst.msk [vmem:[#allocation3 + $0x98] sm:$0xff] %vm306, %v4524
      %4557 = vst.msk [vmem:[#allocation3 + $0xc0] sm:$0xff] %vm306, %v4525
      %4558 = vst.msk [vmem:[#allocation3 + $0xe8] sm:$0xff] %vm306, %v4526
      %4559 = vst.msk [vmem:[#allocation3 + $0x110] sm:$0xff] %vm306, %v4527
      %4560 = vst.msk [vmem:[#allocation3 + $0x138] sm:$0xff] %vm306, %v4528
      %4561 = vst.msk [vmem:[#allocation3 + $0x160] sm:$0xff] %vm306, %v4529
      %4562 = vst.msk [vmem:[#allocation3 + $0x188] sm:$0xff] %vm306, %v4530
      %4563 = vst.msk [vmem:[#allocation3 + $0x1b0] sm:$0xff] %vm306, %v4531
      %4564 = vst.msk [vmem:[#allocation3 + $0x1d8] sm:$0xff] %vm306, %v4532
      %4565 = vst.msk [vmem:[#allocation3 + $0x200] sm:$0xff] %vm306, %v4533
      %4566 = vst.msk [vmem:[#allocation3 + $0x228] sm:$0xff] %vm306, %v4534
      %4567 = vst.msk [vmem:[#allocation3 + $0x250] sm:$0xff] %vm306, %v4535
      %4568 = vst.msk [vmem:[#allocation3 + $0x278] sm:$0xff] %vm306, %v4536
      %4569 = vst.msk [vmem:[#allocation3 + $0x2a0] sm:$0xff] %vm306, %v4537
      %4570 = vst.msk [vmem:[#allocation3 + $0x2c8] sm:$0xff] %vm306, %v4538
      %4571 = vst.msk [vmem:[#allocation3 + $0x2f0] sm:$0xff] %vm306, %v4539
      %4572 = vst.msk [vmem:[#allocation3 + $0x318] sm:$0xff] %vm306, %v4540
      %4573 = vst.msk [vmem:[#allocation3 + $0x340] sm:$0xff] %vm306, %v4541
      %4574 = vst.msk [vmem:[#allocation3 + $0x368] sm:$0xff] %vm306, %v4542
      %4575 = vst.msk [vmem:[#allocation3 + $0x390] sm:$0xff] %vm306, %v4543
      %4576 = vst.msk [vmem:[#allocation3 + $0x3b8] sm:$0xff] %vm306, %v4544
      %4577 = vst.msk [vmem:[#allocation3 + $0x3e0] sm:$0xff] %vm306, %v4545
      %4578 = vst.msk [vmem:[#allocation3 + $0x408] sm:$0xff] %vm306, %v4546
      %4579 = vst.msk [vmem:[#allocation3 + $0x430] sm:$0xff] %vm306, %v4547
      %4580 = vst.msk [vmem:[#allocation3 + $0x458] sm:$0xff] %vm306, %v4548
      %4581 = vst.msk [vmem:[#allocation3 + $0x480] sm:$0xff] %vm306, %v4549
      %4582 = vst.msk [vmem:[#allocation3 + $0x4a8] sm:$0xff] %vm306, %v4550
      %4583 = vst.msk [vmem:[#allocation3 + $0x4d0] sm:$0xff] %vm306, %v4551
      %4584 = vst.msk [vmem:[#allocation3 + $0x4f8] sm:$0xff] %vm306, %v4552
      %v4585 = vld [vmem:[#allocation3] sm:$0xff]
      %v4586 = vld [vmem:[#allocation3 + $0x8] sm:$0xff]
      %v4587 = vld [vmem:[#allocation3 + $0x10] sm:$0xff]
      %v4588 = vld [vmem:[#allocation3 + $0x18] sm:$0xff]
      %v4589 = vld [vmem:[#allocation3 + $0x20] sm:$0xff]
      %v4590 = vld [vmem:[#allocation3 + $0x28] sm:$0xff]
      %v4591 = vld [vmem:[#allocation3 + $0x30] sm:$0xff]
      %v4592 = vld [vmem:[#allocation3 + $0x38] sm:$0xff]
      %v4593 = vld [vmem:[#allocation3 + $0x40] sm:$0xff]
      %v4594 = vld [vmem:[#allocation3 + $0x48] sm:$0xff]
      %v4595 = vld [vmem:[#allocation3 + $0x50] sm:$0xff]
      %v4596 = vld [vmem:[#allocation3 + $0x58] sm:$0xff]
      %v4597 = vld [vmem:[#allocation3 + $0x60] sm:$0xff]
      %v4598 = vld [vmem:[#allocation3 + $0x68] sm:$0xff]
      %v4599 = vld [vmem:[#allocation3 + $0x70] sm:$0xff]
      %v4600 = vld [vmem:[#allocation3 + $0x78] sm:$0xff]
      %v4601 = vld [vmem:[#allocation3 + $0x80] sm:$0xff]
      %v4602 = vld [vmem:[#allocation3 + $0x88] sm:$0xff]
      %v4603 = vld [vmem:[#allocation3 + $0x90] sm:$0xff]
      %v4604 = vld [vmem:[#allocation3 + $0x98] sm:$0xff]
      %v4605 = vld [vmem:[#allocation3 + $0xa0] sm:$0xff]
      %v4606 = vld [vmem:[#allocation3 + $0xa8] sm:$0xff]
      %v4607 = vld [vmem:[#allocation3 + $0xb0] sm:$0xff]
      %v4608 = vld [vmem:[#allocation3 + $0xb8] sm:$0xff]
      %v4609 = vld [vmem:[#allocation3 + $0xc0] sm:$0xff]
      %v4610 = vld [vmem:[#allocation3 + $0xc8] sm:$0xff]
      %v4611 = vld [vmem:[#allocation3 + $0xd0] sm:$0xff]
      %v4612 = vld [vmem:[#allocation3 + $0xd8] sm:$0xff]
      %v4613 = vld [vmem:[#allocation3 + $0xe0] sm:$0xff]
      %v4614 = vld [vmem:[#allocation3 + $0xe8] sm:$0xff]
      %v4615 = vld [vmem:[#allocation3 + $0xf0] sm:$0xff]
      %v4616 = vld [vmem:[#allocation3 + $0xf8] sm:$0xff]
      %v4617 = vld [vmem:[#allocation3 + $0x100] sm:$0xff]
      %v4618 = vld [vmem:[#allocation3 + $0x108] sm:$0xff]
      %v4619 = vld [vmem:[#allocation3 + $0x110] sm:$0xff]
      %v4620 = vld [vmem:[#allocation3 + $0x118] sm:$0xff]
      %v4621 = vld [vmem:[#allocation3 + $0x120] sm:$0xff]
      %v4622 = vld [vmem:[#allocation3 + $0x128] sm:$0xff]
      %v4623 = vld [vmem:[#allocation3 + $0x130] sm:$0xff]
      %v4624 = vld [vmem:[#allocation3 + $0x138] sm:$0xff]
      %v4625 = vld [vmem:[#allocation3 + $0x140] sm:$0xff]
      %v4626 = vld [vmem:[#allocation3 + $0x148] sm:$0xff]
      %v4627 = vld [vmem:[#allocation3 + $0x150] sm:$0xff]
      %v4628 = vld [vmem:[#allocation3 + $0x158] sm:$0xff]
      %v4629 = vld [vmem:[#allocation3 + $0x160] sm:$0xff]
      %v4630 = vld [vmem:[#allocation3 + $0x168] sm:$0xff]
      %v4631 = vld [vmem:[#allocation3 + $0x170] sm:$0xff]
      %v4632 = vld [vmem:[#allocation3 + $0x178] sm:$0xff]
      %v4633 = vld [vmem:[#allocation3 + $0x180] sm:$0xff]
      %v4634 = vld [vmem:[#allocation3 + $0x188] sm:$0xff]
      %v4635 = vld [vmem:[#allocation3 + $0x190] sm:$0xff]
      %v4636 = vld [vmem:[#allocation3 + $0x198] sm:$0xff]
      %v4637 = vld [vmem:[#allocation3 + $0x1a0] sm:$0xff]
      %v4638 = vld [vmem:[#allocation3 + $0x1a8] sm:$0xff]
      %v4639 = vld [vmem:[#allocation3 + $0x1b0] sm:$0xff]
      %v4640 = vld [vmem:[#allocation3 + $0x1b8] sm:$0xff]
      %v4641 = vld [vmem:[#allocation3 + $0x1c0] sm:$0xff]
      %v4642 = vld [vmem:[#allocation3 + $0x1c8] sm:$0xff]
      %v4643 = vld [vmem:[#allocation3 + $0x1d0] sm:$0xff]
      %v4644 = vld [vmem:[#allocation3 + $0x1d8] sm:$0xff]
      %v4645 = vld [vmem:[#allocation3 + $0x1e0] sm:$0xff]
      %v4646 = vld [vmem:[#allocation3 + $0x1e8] sm:$0xff]
      %v4647 = vld [vmem:[#allocation3 + $0x1f0] sm:$0xff]
      %v4648 = vld [vmem:[#allocation3 + $0x1f8] sm:$0xff]
      %v4649 = vld [vmem:[#allocation3 + $0x200] sm:$0xff]
      %v4650 = vld [vmem:[#allocation3 + $0x208] sm:$0xff]
      %v4651 = vld [vmem:[#allocation3 + $0x210] sm:$0xff]
      %v4652 = vld [vmem:[#allocation3 + $0x218] sm:$0xff]
      %v4653 = vld [vmem:[#allocation3 + $0x220] sm:$0xff]
      %v4654 = vld [vmem:[#allocation3 + $0x228] sm:$0xff]
      %v4655 = vld [vmem:[#allocation3 + $0x230] sm:$0xff]
      %v4656 = vld [vmem:[#allocation3 + $0x238] sm:$0xff]
      %v4657 = vld [vmem:[#allocation3 + $0x240] sm:$0xff]
      %v4658 = vld [vmem:[#allocation3 + $0x248] sm:$0xff]
      %v4659 = vld [vmem:[#allocation3 + $0x250] sm:$0xff]
      %v4660 = vld [vmem:[#allocation3 + $0x258] sm:$0xff]
      %v4661 = vld [vmem:[#allocation3 + $0x260] sm:$0xff]
      %v4662 = vld [vmem:[#allocation3 + $0x268] sm:$0xff]
      %v4663 = vld [vmem:[#allocation3 + $0x270] sm:$0xff]
      %v4664 = vld [vmem:[#allocation3 + $0x278] sm:$0xff]
      %v4665 = vld [vmem:[#allocation3 + $0x280] sm:$0xff]
      %v4666 = vld [vmem:[#allocation3 + $0x288] sm:$0xff]
      %v4667 = vld [vmem:[#allocation3 + $0x290] sm:$0xff]
      %v4668 = vld [vmem:[#allocation3 + $0x298] sm:$0xff]
      %v4669 = vld [vmem:[#allocation3 + $0x2a0] sm:$0xff]
      %v4670 = vld [vmem:[#allocation3 + $0x2a8] sm:$0xff]
      %v4671 = vld [vmem:[#allocation3 + $0x2b0] sm:$0xff]
      %v4672 = vld [vmem:[#allocation3 + $0x2b8] sm:$0xff]
      %v4673 = vld [vmem:[#allocation3 + $0x2c0] sm:$0xff]
      %v4674 = vld [vmem:[#allocation3 + $0x2c8] sm:$0xff]
      %v4675 = vld [vmem:[#allocation3 + $0x2d0] sm:$0xff]
      %v4676 = vld [vmem:[#allocation3 + $0x2d8] sm:$0xff]
      %v4677 = vld [vmem:[#allocation3 + $0x2e0] sm:$0xff]
      %v4678 = vld [vmem:[#allocation3 + $0x2e8] sm:$0xff]
      %v4679 = vld [vmem:[#allocation3 + $0x2f0] sm:$0xff]
      %v4680 = vld [vmem:[#allocation3 + $0x2f8] sm:$0xff]
      %v4681 = vld [vmem:[#allocation3 + $0x300] sm:$0xff]
      %v4682 = vld [vmem:[#allocation3 + $0x308] sm:$0xff]
      %v4683 = vld [vmem:[#allocation3 + $0x310] sm:$0xff]
      %v4684 = vld [vmem:[#allocation3 + $0x318] sm:$0xff]
      %v4685 = vld [vmem:[#allocation3 + $0x320] sm:$0xff]
      %v4686 = vld [vmem:[#allocation3 + $0x328] sm:$0xff]
      %v4687 = vld [vmem:[#allocation3 + $0x330] sm:$0xff]
      %v4688 = vld [vmem:[#allocation3 + $0x338] sm:$0xff]
      %v4689 = vld [vmem:[#allocation3 + $0x340] sm:$0xff]
      %v4690 = vld [vmem:[#allocation3 + $0x348] sm:$0xff]
      %v4691 = vld [vmem:[#allocation3 + $0x350] sm:$0xff]
      %v4692 = vld [vmem:[#allocation3 + $0x358] sm:$0xff]
      %v4693 = vld [vmem:[#allocation3 + $0x360] sm:$0xff]
      %v4694 = vld [vmem:[#allocation3 + $0x368] sm:$0xff]
      %v4695 = vld [vmem:[#allocation3 + $0x370] sm:$0xff]
      %v4696 = vld [vmem:[#allocation3 + $0x378] sm:$0xff]
      %v4697 = vld [vmem:[#allocation3 + $0x380] sm:$0xff]
      %v4698 = vld [vmem:[#allocation3 + $0x388] sm:$0xff]
      %v4699 = vld [vmem:[#allocation3 + $0x390] sm:$0xff]
      %v4700 = vld [vmem:[#allocation3 + $0x398] sm:$0xff]
      %v4701 = vld [vmem:[#allocation3 + $0x3a0] sm:$0xff]
      %v4702 = vld [vmem:[#allocation3 + $0x3a8] sm:$0xff]
      %v4703 = vld [vmem:[#allocation3 + $0x3b0] sm:$0xff]
      %v4704 = vld [vmem:[#allocation3 + $0x3b8] sm:$0xff]
      %v4705 = vld [vmem:[#allocation3 + $0x3c0] sm:$0xff]
      %v4706 = vld [vmem:[#allocation3 + $0x3c8] sm:$0xff]
      %v4707 = vld [vmem:[#allocation3 + $0x3d0] sm:$0xff]
      %v4708 = vld [vmem:[#allocation3 + $0x3d8] sm:$0xff]
      %v4709 = vld [vmem:[#allocation3 + $0x3e0] sm:$0xff]
      %v4710 = vld [vmem:[#allocation3 + $0x3e8] sm:$0xff]
      %v4711 = vld [vmem:[#allocation3 + $0x3f0] sm:$0xff]
      %v4712 = vld [vmem:[#allocation3 + $0x3f8] sm:$0xff]
      %v4713 = vld [vmem:[#allocation3 + $0x400] sm:$0xff]
      %v4714 = vld [vmem:[#allocation3 + $0x408] sm:$0xff]
      %v4715 = vld [vmem:[#allocation3 + $0x410] sm:$0xff]
      %v4716 = vld [vmem:[#allocation3 + $0x418] sm:$0xff]
      %v4717 = vld [vmem:[#allocation3 + $0x420] sm:$0xff]
      %v4718 = vld [vmem:[#allocation3 + $0x428] sm:$0xff]
      %v4719 = vld [vmem:[#allocation3 + $0x430] sm:$0xff]
      %v4720 = vld [vmem:[#allocation3 + $0x438] sm:$0xff]
      %v4721 = vld [vmem:[#allocation3 + $0x440] sm:$0xff]
      %v4722 = vld [vmem:[#allocation3 + $0x448] sm:$0xff]
      %v4723 = vld [vmem:[#allocation3 + $0x450] sm:$0xff]
      %v4724 = vld [vmem:[#allocation3 + $0x458] sm:$0xff]
      %v4725 = vld [vmem:[#allocation3 + $0x460] sm:$0xff]
      %v4726 = vld [vmem:[#allocation3 + $0x468] sm:$0xff]
      %v4727 = vld [vmem:[#allocation3 + $0x470] sm:$0xff]
      %v4728 = vld [vmem:[#allocation3 + $0x478] sm:$0xff]
      %v4729 = vld [vmem:[#allocation3 + $0x480] sm:$0xff]
      %v4730 = vld [vmem:[#allocation3 + $0x488] sm:$0xff]
      %v4731 = vld [vmem:[#allocation3 + $0x490] sm:$0xff]
      %v4732 = vld [vmem:[#allocation3 + $0x498] sm:$0xff]
      %v4733 = vld [vmem:[#allocation3 + $0x4a0] sm:$0xff]
      %v4734 = vld [vmem:[#allocation3 + $0x4a8] sm:$0xff]
      %v4735 = vld [vmem:[#allocation3 + $0x4b0] sm:$0xff]
      %v4736 = vld [vmem:[#allocation3 + $0x4b8] sm:$0xff]
      %v4737 = vld [vmem:[#allocation3 + $0x4c0] sm:$0xff]
      %v4738 = vld [vmem:[#allocation3 + $0x4c8] sm:$0xff]
      %v4739 = vld [vmem:[#allocation3 + $0x4d0] sm:$0xff]
      %v4740 = vld [vmem:[#allocation3 + $0x4d8] sm:$0xff]
      %v4741 = vld [vmem:[#allocation3 + $0x4e0] sm:$0xff]
      %v4742 = vld [vmem:[#allocation3 + $0x4e8] sm:$0xff]
      %v4743 = vld [vmem:[#allocation3 + $0x4f0] sm:$0xff]
      %v4744 = vld [vmem:[#allocation3 + $0x4f8] sm:$0xff]
      %v4745 = vld [vmem:[%s5] sm:$0xff]
      %v4746 = vld [vmem:[%s5 + $0x8] sm:$0xff]
      %v4747 = vld [vmem:[%s5 + $0x10] sm:$0xff]
      %v4748 = vld [vmem:[%s5 + $0x18] sm:$0xff]
      %v4749 = vld [vmem:[%s5 + $0x20] sm:$0xff]
      %v4750 = vld [vmem:[%s5 + $0x28] sm:$0xff]
      %v4751 = vld [vmem:[%s5 + $0x30] sm:$0xff]
      %v4752 = vld [vmem:[%s5 + $0x38] sm:$0xff]
      %v4753 = vld [vmem:[%s5 + $0x40] sm:$0xff]
      %v4754 = vld [vmem:[%s5 + $0x48] sm:$0xff]
      %v4755 = vld [vmem:[%s5 + $0x50] sm:$0xff]
      %v4756 = vld [vmem:[%s5 + $0x58] sm:$0xff]
      %v4757 = vld [vmem:[%s5 + $0x60] sm:$0xff]
      %v4758 = vld [vmem:[%s5 + $0x68] sm:$0xff]
      %v4759 = vld [vmem:[%s5 + $0x70] sm:$0xff]
      %v4760 = vld [vmem:[%s5 + $0x78] sm:$0xff]
      %v4761 = vld [vmem:[%s5 + $0x80] sm:$0xff]
      %v4762 = vld [vmem:[%s5 + $0x88] sm:$0xff]
      %v4763 = vld [vmem:[%s5 + $0x90] sm:$0xff]
      %v4764 = vld [vmem:[%s5 + $0x98] sm:$0xff]
      %v4765 = vld [vmem:[%s5 + $0xa0] sm:$0xff]
      %v4766 = vld [vmem:[%s5 + $0xa8] sm:$0xff]
      %v4767 = vld [vmem:[%s5 + $0xb0] sm:$0xff]
      %v4768 = vld [vmem:[%s5 + $0xb8] sm:$0xff]
      %v4769 = vld [vmem:[%s5 + $0xc0] sm:$0xff]
      %v4770 = vld [vmem:[%s5 + $0xc8] sm:$0xff]
      %v4771 = vld [vmem:[%s5 + $0xd0] sm:$0xff]
      %v4772 = vld [vmem:[%s5 + $0xd8] sm:$0xff]
      %v4773 = vld [vmem:[%s5 + $0xe0] sm:$0xff]
      %v4774 = vld [vmem:[%s5 + $0xe8] sm:$0xff]
      %v4775 = vld [vmem:[%s5 + $0xf0] sm:$0xff]
      %v4776 = vld [vmem:[%s5 + $0xf8] sm:$0xff]
      %v4777 = vld [vmem:[%s5 + $0x100] sm:$0xff]
      %v4778 = vld [vmem:[%s5 + $0x108] sm:$0xff]
      %v4779 = vld [vmem:[%s5 + $0x110] sm:$0xff]
      %v4780 = vld [vmem:[%s5 + $0x118] sm:$0xff]
      %v4781 = vld [vmem:[%s5 + $0x120] sm:$0xff]
      %v4782 = vld [vmem:[%s5 + $0x128] sm:$0xff]
      %v4783 = vld [vmem:[%s5 + $0x130] sm:$0xff]
      %v4784 = vld [vmem:[%s5 + $0x138] sm:$0xff]
      %v4785 = vld [vmem:[%s5 + $0x140] sm:$0xff]
      %v4786 = vld [vmem:[%s5 + $0x148] sm:$0xff]
      %v4787 = vld [vmem:[%s5 + $0x150] sm:$0xff]
      %v4788 = vld [vmem:[%s5 + $0x158] sm:$0xff]
      %v4789 = vld [vmem:[%s5 + $0x160] sm:$0xff]
      %v4790 = vld [vmem:[%s5 + $0x168] sm:$0xff]
      %v4791 = vld [vmem:[%s5 + $0x170] sm:$0xff]
      %v4792 = vld [vmem:[%s5 + $0x178] sm:$0xff]
      %v4793 = vld [vmem:[%s5 + $0x180] sm:$0xff]
      %v4794 = vld [vmem:[%s5 + $0x188] sm:$0xff]
      %v4795 = vld [vmem:[%s5 + $0x190] sm:$0xff]
      %v4796 = vld [vmem:[%s5 + $0x198] sm:$0xff]
      %v4797 = vld [vmem:[%s5 + $0x1a0] sm:$0xff]
      %v4798 = vld [vmem:[%s5 + $0x1a8] sm:$0xff]
      %v4799 = vld [vmem:[%s5 + $0x1b0] sm:$0xff]
      %v4800 = vld [vmem:[%s5 + $0x1b8] sm:$0xff]
      %v4801 = vld [vmem:[%s5 + $0x1c0] sm:$0xff]
      %v4802 = vld [vmem:[%s5 + $0x1c8] sm:$0xff]
      %v4803 = vld [vmem:[%s5 + $0x1d0] sm:$0xff]
      %v4804 = vld [vmem:[%s5 + $0x1d8] sm:$0xff]
      %v4805 = vld [vmem:[%s5 + $0x1e0] sm:$0xff]
      %v4806 = vld [vmem:[%s5 + $0x1e8] sm:$0xff]
      %v4807 = vld [vmem:[%s5 + $0x1f0] sm:$0xff]
      %v4808 = vld [vmem:[%s5 + $0x1f8] sm:$0xff]
      %v4809 = vld [vmem:[%s5 + $0x200] sm:$0xff]
      %v4810 = vld [vmem:[%s5 + $0x208] sm:$0xff]
      %v4811 = vld [vmem:[%s5 + $0x210] sm:$0xff]
      %v4812 = vld [vmem:[%s5 + $0x218] sm:$0xff]
      %v4813 = vld [vmem:[%s5 + $0x220] sm:$0xff]
      %v4814 = vld [vmem:[%s5 + $0x228] sm:$0xff]
      %v4815 = vld [vmem:[%s5 + $0x230] sm:$0xff]
      %v4816 = vld [vmem:[%s5 + $0x238] sm:$0xff]
      %v4817 = vld [vmem:[%s6] sm:$0x1]
      %v4819 = vlaneseq
      %v4820 = vshrl.u32 %v4819, 7
      %v4821 = vsub.s32 0, %v4820
      %v4822 = vrot.slane %v4817, %v4821
      %v4825 = vsel %vm306, %v4589, 0
      %v4828 = vsel %vm306, %v4594, 0
      %v4831 = vsel %vm306, %v4599, 0
      %v4834 = vsel %vm306, %v4604, 0
      %v4837 = vsel %vm306, %v4609, 0
      %v4840 = vsel %vm306, %v4614, 0
      %v4843 = vsel %vm306, %v4619, 0
      %v4846 = vsel %vm306, %v4624, 0
      %v4849 = vsel %vm306, %v4629, 0
      %v4852 = vsel %vm306, %v4634, 0
      %v4855 = vsel %vm306, %v4639, 0
      %v4858 = vsel %vm306, %v4644, 0
      %v4861 = vsel %vm306, %v4649, 0
      %v4864 = vsel %vm306, %v4654, 0
      %v4867 = vsel %vm306, %v4659, 0
      %v4870 = vsel %vm306, %v4664, 0
      %v4873 = vsel %vm306, %v4669, 0
      %v4876 = vsel %vm306, %v4674, 0
      %v4879 = vsel %vm306, %v4679, 0
      %v4882 = vsel %vm306, %v4684, 0
      %v4885 = vsel %vm306, %v4689, 0
      %v4888 = vsel %vm306, %v4694, 0
      %v4891 = vsel %vm306, %v4699, 0
      %v4894 = vsel %vm306, %v4704, 0
      %v4897 = vsel %vm306, %v4709, 0
      %v4900 = vsel %vm306, %v4714, 0
      %v4903 = vsel %vm306, %v4719, 0
      %v4906 = vsel %vm306, %v4724, 0
      %v4909 = vsel %vm306, %v4729, 0
      %v4912 = vsel %vm306, %v4734, 0
      %v4915 = vsel %vm306, %v4739, 0
      %v4918 = vsel %vm306, %v4744, 0
      %4920 = vmatprep.subr.mxu0 0.0
      %4921 = vmatpush1.msra.mxu0 %v4745
      %4922 = vmatprep.subr.mxu0 0.0
      %4923 = vmatpush1.msra.mxu0 %v4746
      %4924 = vmatprep.subr.mxu0 0.0
      %4925 = vmatpush1.msra.mxu0 %v4747
      %4926 = vmatprep.subr.mxu0 0.0
      %4927 = vmatpush1.msra.mxu0 %v4748
      %4928 = vmatprep.subr.mxu0 0.0
      %4929 = vmatpush1.msra.mxu0 %v4749
      %4930 = vmatprep.subr.mxu0 0.0
      %4931 = vmatpush1.msra.mxu0 %v4750
      %4932 = vmatprep.subr.mxu0 0.0
      %4933 = vmatpush1.msra.mxu0 %v4751
      %4934 = vmatprep.subr.mxu0 0.0
      %4935 = vmatpush1.msra.mxu0 %v4752
      %4936 = vmatprep.subr.mxu0 0.0
      %4937 = vmatpush1.msra.mxu0 %v4753
      %4938 = vmatprep.subr.mxu0 0.0
      %4939 = vmatpush1.msra.mxu0 %v4754
      %4940 = vmatprep.subr.mxu0 0.0
      %4941 = vmatpush1.msra.mxu0 %v4755
      %4942 = vmatprep.subr.mxu0 0.0
      %4943 = vmatpush1.msra.mxu0 %v4756
      %4944 = vmatprep.subr.mxu0 0.0
      %4945 = vmatpush1.msra.mxu0 %v4757
      %4946 = vmatprep.subr.mxu0 0.0
      %4947 = vmatpush1.msra.mxu0 %v4758
      %4948 = vmatprep.subr.mxu0 0.0
      %4949 = vmatpush1.msra.mxu0 %v4759
      %4950 = vmatprep.subr.mxu0 0.0
      %4951 = vmatpush1.msra.mxu0 %v4760
      %4952 = vmatprep.subr.mxu0 0.0
      %4953 = vmatpush1.msra.mxu0 %v4761
      %4954 = vmatprep.subr.mxu0 0.0
      %4955 = vmatpush1.msra.mxu0 %v4762
      %4956 = vmatprep.subr.mxu0 0.0
      %4957 = vmatpush1.msra.mxu0 %v4763
      %4958 = vmatprep.subr.mxu0 0.0
      %4959 = vmatpush1.msra.mxu0 %v4764
      %4960 = vmatprep.subr.mxu0 0.0
      %4961 = vmatpush1.msra.mxu0 %v4765
      %4962 = vmatprep.subr.mxu0 0.0
      %4963 = vmatpush1.msra.mxu0 %v4766
      %4964 = vmatprep.subr.mxu0 0.0
      %4965 = vmatpush1.msra.mxu0 %v4767
      %4966 = vmatprep.subr.mxu0 0.0
      %4967 = vmatpush1.msra.mxu0 %v4768
      %4968 = vmatprep.subr.mxu0 0.0
      %4969 = vmatpush1.msra.mxu0 %v4769
      %4970 = vmatprep.subr.mxu0 0.0
      %4971 = vmatpush1.msra.mxu0 %v4770
      %4972 = vmatprep.subr.mxu0 0.0
      %4973 = vmatpush1.msra.mxu0 %v4771
      %4974 = vmatprep.subr.mxu0 0.0
      %4975 = vmatpush1.msra.mxu0 %v4772
      %4976 = vmatprep.subr.mxu0 0.0
      %4977 = vmatpush1.msra.mxu0 %v4773
      %4978 = vmatprep.subr.mxu0 0.0
      %4979 = vmatpush1.msra.mxu0 %v4774
      %4980 = vmatprep.subr.mxu0 0.0
      %4981 = vmatpush1.msra.mxu0 %v4775
      %4982 = vmatprep.subr.mxu0 0.0
      %4983 = vmatpush1.msra.mxu0 %v4776
      %4984 = vmatprep.mubr.f32.mxu0 %v4586
      %4985 = vmatmul.mubr.f32.gmra.mrb[0].mxu0 %v4585
      %v4986 = vpop.f32.mrb[0].mxu0
      %v4987 = vadd.f32 %v4822, %v4986
      %v4988 = vpop.f32.mrb[0].mxu0
      %4989 = vmatprep.mubr.f32.mxu0 %v4591
      %4990 = vmatmul.mubr.f32.gmra.mrb[0].mxu0 %v4590
      %v4991 = vpop.f32.mrb[0].mxu0
      %v4992 = vadd.f32 %v4822, %v4991
      %v4993 = vpop.f32.mrb[0].mxu0
      %4994 = vmatprep.mubr.f32.mxu0 %v4596
      %4995 = vmatmul.mubr.f32.gmra.mrb[0].mxu0 %v4595
      %v4996 = vpop.f32.mrb[0].mxu0
      %v4997 = vadd.f32 %v4822, %v4996
      %v4998 = vpop.f32.mrb[0].mxu0
      %4999 = vmatprep.mubr.f32.mxu0 %v4601
      %5000 = vmatmul.mubr.f32.gmra.mrb[0].mxu0 %v4600
      %v5001 = vpop.f32.mrb[0].mxu0
      %v5002 = vadd.f32 %v4822, %v5001
      %v5003 = vpop.f32.mrb[0].mxu0
      %5004 = vmatprep.mubr.f32.mxu0 %v4606
      %5005 = vmatmul.mubr.f32.gmra.mrb[0].mxu0 %v4605
      %v5006 = vpop.f32.mrb[0].mxu0
      %v5007 = vadd.f32 %v4822, %v5006
      %v5008 = vpop.f32.mrb[0].mxu0
      %5009 = vmatprep.mubr.f32.mxu0 %v4611
      %5010 = vmatmul.mubr.f32.gmra.mrb[0].mxu0 %v4610
      %v5011 = vpop.f32.mrb[0].mxu0
      %v5012 = vadd.f32 %v4822, %v5011
      %v5013 = vpop.f32.mrb[0].mxu0
      %5014 = vmatprep.mubr.f32.mxu0 %v4616
      %5015 = vmatmul.mubr.f32.gmra.mrb[0].mxu0 %v4615
      %v5016 = vpop.f32.mrb[0].mxu0
      %v5017 = vadd.f32 %v4822, %v5016
      %v5018 = vpop.f32.mrb[0].mxu0
      %5019 = vmatprep.mubr.f32.mxu0 %v4621
      %5020 = vmatmul.mubr.f32.gmra.mrb[0].mxu0 %v4620
      %v5021 = vpop.f32.mrb[0].mxu0
      %v5022 = vadd.f32 %v4822, %v5021
      %v5023 = vpop.f32.mrb[0].mxu0
      %5024 = vmatprep.mubr.f32.mxu0 %v4626
      %5025 = vmatmul.mubr.f32.gmra.mrb[0].mxu0 %v4625
      %v5026 = vpop.f32.mrb[0].mxu0
      %v5027 = vadd.f32 %v4822, %v5026
      %v5028 = vpop.f32.mrb[0].mxu0
      %5029 = vmatprep.mubr.f32.mxu0 %v4631
      %5030 = vmatmul.mubr.f32.gmra.mrb[0].mxu0 %v4630
      %v5031 = vpop.f32.mrb[0].mxu0
      %v5032 = vadd.f32 %v4822, %v5031
      %v5033 = vpop.f32.mrb[0].mxu0
      %5034 = vmatprep.mubr.f32.mxu0 %v4636
      %5035 = vmatmul.mubr.f32.gmra.mrb[0].mxu0 %v4635
      %v5036 = vpop.f32.mrb[0].mxu0
      %v5037 = vadd.f32 %v4822, %v5036
      %v5038 = vpop.f32.mrb[0].mxu0
      %5039 = vmatprep.mubr.f32.mxu0 %v4641
      %5040 = vmatmul.mubr.f32.gmra.mrb[0].mxu0 %v4640
      %v5041 = vpop.f32.mrb[0].mxu0
      %v5042 = vadd.f32 %v4822, %v5041
      %v5043 = vpop.f32.mrb[0].mxu0
      %5044 = vmatprep.mubr.f32.mxu0 %v4646
      %5045 = vmatmul.mubr.f32.gmra.mrb[0].mxu0 %v4645
      %v5046 = vpop.f32.mrb[0].mxu0
      %v5047 = vadd.f32 %v4822, %v5046
      %v5048 = vpop.f32.mrb[0].mxu0
      %5049 = vmatprep.mubr.f32.mxu0 %v4651
      %5050 = vmatmul.mubr.f32.gmra.mrb[0].mxu0 %v4650
      %v5051 = vpop.f32.mrb[0].mxu0
      %v5052 = vadd.f32 %v4822, %v5051
      %v5053 = vpop.f32.mrb[0].mxu0
      %5054 = vmatprep.mubr.f32.mxu0 %v4656
      %5055 = vmatmul.mubr.f32.gmra.mrb[0].mxu0 %v4655
      %v5056 = vpop.f32.mrb[0].mxu0
      %v5057 = vadd.f32 %v4822, %v5056
      %v5058 = vpop.f32.mrb[0].mxu0
      %5059 = vmatprep.mubr.f32.mxu0 %v4661
      %5060 = vmatmul.mubr.f32.gmra.mrb[0].mxu0 %v4660
      %v5061 = vpop.f32.mrb[0].mxu0
      %v5062 = vadd.f32 %v4822, %v5061
      %v5063 = vpop.f32.mrb[0].mxu0
      %5064 = vmatprep.mubr.f32.mxu0 %v4666
      %5065 = vmatmul.mubr.f32.gmra.mrb[0].mxu0 %v4665
      %v5066 = vpop.f32.mrb[0].mxu0
      %v5067 = vadd.f32 %v4822, %v5066
      %v5068 = vpop.f32.mrb[0].mxu0
      %5069 = vmatprep.mubr.f32.mxu0 %v4671
      %5070 = vmatmul.mubr.f32.gmra.mrb[0].mxu0 %v4670
      %v5071 = vpop.f32.mrb[0].mxu0
      %v5072 = vadd.f32 %v4822, %v5071
      %v5073 = vpop.f32.mrb[0].mxu0
      %5074 = vmatprep.mubr.f32.mxu0 %v4676
      %5075 = vmatmul.mubr.f32.gmra.mrb[0].mxu0 %v4675
      %v5076 = vpop.f32.mrb[0].mxu0
      %v5077 = vadd.f32 %v4822, %v5076
      %v5078 = vpop.f32.mrb[0].mxu0
      %5079 = vmatprep.mubr.f32.mxu0 %v4681
      %5080 = vmatmul.mubr.f32.gmra.mrb[0].mxu0 %v4680
      %v5081 = vpop.f32.mrb[0].mxu0
      %v5082 = vadd.f32 %v4822, %v5081
      %v5083 = vpop.f32.mrb[0].mxu0
      %5084 = vmatprep.mubr.f32.mxu0 %v4686
      %5085 = vmatmul.mubr.f32.gmra.mrb[0].mxu0 %v4685
      %v5086 = vpop.f32.mrb[0].mxu0
      %v5087 = vadd.f32 %v4822, %v5086
      %v5088 = vpop.f32.mrb[0].mxu0
      %5089 = vmatprep.mubr.f32.mxu0 %v4691
      %5090 = vmatmul.mubr.f32.gmra.mrb[0].mxu0 %v4690
      %v5091 = vpop.f32.mrb[0].mxu0
      %v5092 = vadd.f32 %v4822, %v5091
      %v5093 = vpop.f32.mrb[0].mxu0
      %5094 = vmatprep.mubr.f32.mxu0 %v4696
      %5095 = vmatmul.mubr.f32.gmra.mrb[0].mxu0 %v4695
      %v5096 = vpop.f32.mrb[0].mxu0
      %v5097 = vadd.f32 %v4822, %v5096
      %v5098 = vpop.f32.mrb[0].mxu0
      %5099 = vmatprep.mubr.f32.mxu0 %v4701
      %5100 = vmatmul.mubr.f32.gmra.mrb[0].mxu0 %v4700
      %v5101 = vpop.f32.mrb[0].mxu0
      %v5102 = vadd.f32 %v4822, %v5101
      %v5103 = vpop.f32.mrb[0].mxu0
      %5104 = vmatprep.mubr.f32.mxu0 %v4706
      %5105 = vmatmul.mubr.f32.gmra.mrb[0].mxu0 %v4705
      %v5106 = vpop.f32.mrb[0].mxu0
      %v5107 = vadd.f32 %v4822, %v5106
      %v5108 = vpop.f32.mrb[0].mxu0
      %5109 = vmatprep.mubr.f32.mxu0 %v4711
      %5110 = vmatmul.mubr.f32.gmra.mrb[0].mxu0 %v4710
      %v5111 = vpop.f32.mrb[0].mxu0
      %v5112 = vadd.f32 %v4822, %v5111
      %v5113 = vpop.f32.mrb[0].mxu0
      %5114 = vmatprep.mubr.f32.mxu0 %v4716
      %5115 = vmatmul.mubr.f32.gmra.mrb[0].mxu0 %v4715
      %v5116 = vpop.f32.mrb[0].mxu0
      %v5117 = vadd.f32 %v4822, %v5116
      %v5118 = vpop.f32.mrb[0].mxu0
      %5119 = vmatprep.mubr.f32.mxu0 %v4721
      %5120 = vmatmul.mubr.f32.gmra.mrb[0].mxu0 %v4720
      %v5121 = vpop.f32.mrb[0].mxu0
      %v5122 = vadd.f32 %v4822, %v5121
      %v5123 = vpop.f32.mrb[0].mxu0
      %5124 = vmatprep.mubr.f32.mxu0 %v4726
      %5125 = vmatmul.mubr.f32.gmra.mrb[0].mxu0 %v4725
      %v5126 = vpop.f32.mrb[0].mxu0
      %v5127 = vadd.f32 %v4822, %v5126
      %v5128 = vpop.f32.mrb[0].mxu0
      %5129 = vmatprep.mubr.f32.mxu0 %v4731
      %5130 = vmatmul.mubr.f32.gmra.mrb[0].mxu0 %v4730
      %v5131 = vpop.f32.mrb[0].mxu0
      %v5132 = vadd.f32 %v4822, %v5131
      %v5133 = vpop.f32.mrb[0].mxu0
      %5134 = vmatprep.mubr.f32.mxu0 %v4736
      %5135 = vmatmul.mubr.f32.gmra.mrb[0].mxu0 %v4735
      %v5136 = vpop.f32.mrb[0].mxu0
      %v5137 = vadd.f32 %v4822, %v5136
      %v5138 = vpop.f32.mrb[0].mxu0
      %5139 = vmatprep.mubr.f32.mxu0 %v4741
      %5140 = vmatmul.mubr.f32.gmra.mrb[0].mxu0 %v4740
      %v5141 = vpop.f32.mrb[0].mxu0
      %v5142 = vadd.f32 %v4822, %v5141
      %v5143 = vpop.f32.mrb[0].mxu0
      %5144 = vdwg.mxu0
      %5145 = vmatprep.subr.mxu0 0.0
      %5146 = vmatpush1.msra.mxu0 %v4777
      %5147 = vmatprep.subr.mxu0 0.0
      %5148 = vmatpush1.msra.mxu0 %v4778
      %5149 = vmatprep.subr.mxu0 0.0
      %5150 = vmatpush1.msra.mxu0 %v4779
      %5151 = vmatprep.subr.mxu0 0.0
      %5152 = vmatpush1.msra.mxu0 %v4780
      %5153 = vmatprep.subr.mxu0 0.0
      %5154 = vmatpush1.msra.mxu0 %v4781
      %5155 = vmatprep.subr.mxu0 0.0
      %5156 = vmatpush1.msra.mxu0 %v4782
      %5157 = vmatprep.subr.mxu0 0.0
      %5158 = vmatpush1.msra.mxu0 %v4783
      %5159 = vmatprep.subr.mxu0 0.0
      %5160 = vmatpush1.msra.mxu0 %v4784
      %5161 = vmatprep.subr.mxu0 0.0
      %5162 = vmatpush1.msra.mxu0 %v4785
      %5163 = vmatprep.subr.mxu0 0.0
      %5164 = vmatpush1.msra.mxu0 %v4786
      %5165 = vmatprep.subr.mxu0 0.0
      %5166 = vmatpush1.msra.mxu0 %v4787
      %5167 = vmatprep.subr.mxu0 0.0
      %5168 = vmatpush1.msra.mxu0 %v4788
      %5169 = vmatprep.subr.mxu0 0.0
      %5170 = vmatpush1.msra.mxu0 %v4789
      %5171 = vmatprep.subr.mxu0 0.0
      %5172 = vmatpush1.msra.mxu0 %v4790
      %5173 = vmatprep.subr.mxu0 0.0
      %5174 = vmatpush1.msra.mxu0 %v4791
      %5175 = vmatprep.subr.mxu0 0.0
      %5176 = vmatpush1.msra.mxu0 %v4792
      %5177 = vmatprep.subr.mxu0 0.0
      %5178 = vmatpush1.msra.mxu0 %v4793
      %5179 = vmatprep.subr.mxu0 0.0
      %5180 = vmatpush1.msra.mxu0 %v4794
      %5181 = vmatprep.subr.mxu0 0.0
      %5182 = vmatpush1.msra.mxu0 %v4795
      %5183 = vmatprep.subr.mxu0 0.0
      %5184 = vmatpush1.msra.mxu0 %v4796
      %5185 = vmatprep.subr.mxu0 0.0
      %5186 = vmatpush1.msra.mxu0 %v4797
      %5187 = vmatprep.subr.mxu0 0.0
      %5188 = vmatpush1.msra.mxu0 %v4798
      %5189 = vmatprep.subr.mxu0 0.0
      %5190 = vmatpush1.msra.mxu0 %v4799
      %5191 = vmatprep.subr.mxu0 0.0
      %5192 = vmatpush1.msra.mxu0 %v4800
      %5193 = vmatprep.subr.mxu0 0.0
      %5194 = vmatpush1.msra.mxu0 %v4801
      %5195 = vmatprep.subr.mxu0 0.0
      %5196 = vmatpush1.msra.mxu0 %v4802
      %5197 = vmatprep.subr.mxu0 0.0
      %5198 = vmatpush1.msra.mxu0 %v4803
      %5199 = vmatprep.subr.mxu0 0.0
      %5200 = vmatpush1.msra.mxu0 %v4804
      %5201 = vmatprep.subr.mxu0 0.0
      %5202 = vmatpush1.msra.mxu0 %v4805
      %5203 = vmatprep.subr.mxu0 0.0
      %5204 = vmatpush1.msra.mxu0 %v4806
      %5205 = vmatprep.subr.mxu0 0.0
      %5206 = vmatpush1.msra.mxu0 %v4807
      %5207 = vmatprep.subr.mxu0 0.0
      %5208 = vmatpush1.msra.mxu0 %v4808
      %5209 = vmatprep.mubr.f32.mxu0 %v4588
      %5210 = vmatmul.mubr.f32.gmra.mrb[0].mxu0 %v4587
      %v5211 = vpop.f32.mrb[0].mxu0
      %v5212 = vadd.f32 %v4987, %v5211
      %v5213 = vpop.f32.mrb[0].mxu0
      %5214 = vmatprep.mubr.f32.mxu0 %v4593
      %5215 = vmatmul.mubr.f32.gmra.mrb[0].mxu0 %v4592
      %v5216 = vpop.f32.mrb[0].mxu0
      %v5217 = vadd.f32 %v4992, %v5216
      %v5218 = vpop.f32.mrb[0].mxu0
      %5219 = vmatprep.mubr.f32.mxu0 %v4598
      %5220 = vmatmul.mubr.f32.gmra.mrb[0].mxu0 %v4597
      %v5221 = vpop.f32.mrb[0].mxu0
      %v5222 = vadd.f32 %v4997, %v5221
      %v5223 = vpop.f32.mrb[0].mxu0
      %5224 = vmatprep.mubr.f32.mxu0 %v4603
      %5225 = vmatmul.mubr.f32.gmra.mrb[0].mxu0 %v4602
      %v5226 = vpop.f32.mrb[0].mxu0
      %v5227 = vadd.f32 %v5002, %v5226
      %v5228 = vpop.f32.mrb[0].mxu0
      %5229 = vmatprep.mubr.f32.mxu0 %v4608
      %5230 = vmatmul.mubr.f32.gmra.mrb[0].mxu0 %v4607
      %v5231 = vpop.f32.mrb[0].mxu0
      %v5232 = vadd.f32 %v5007, %v5231
      %v5233 = vpop.f32.mrb[0].mxu0
      %5234 = vmatprep.mubr.f32.mxu0 %v4613
      %5235 = vmatmul.mubr.f32.gmra.mrb[0].mxu0 %v4612
      %v5236 = vpop.f32.mrb[0].mxu0
      %v5237 = vadd.f32 %v5012, %v5236
      %v5238 = vpop.f32.mrb[0].mxu0
      %5239 = vmatprep.mubr.f32.mxu0 %v4618
      %5240 = vmatmul.mubr.f32.gmra.mrb[0].mxu0 %v4617
      %v5241 = vpop.f32.mrb[0].mxu0
      %v5242 = vadd.f32 %v5017, %v5241
      %v5243 = vpop.f32.mrb[0].mxu0
      %5244 = vmatprep.mubr.f32.mxu0 %v4623
      %5245 = vmatmul.mubr.f32.gmra.mrb[0].mxu0 %v4622
      %v5246 = vpop.f32.mrb[0].mxu0
      %v5247 = vadd.f32 %v5022, %v5246
      %v5248 = vpop.f32.mrb[0].mxu0
      %5249 = vmatprep.mubr.f32.mxu0 %v4628
      %5250 = vmatmul.mubr.f32.gmra.mrb[0].mxu0 %v4627
      %v5251 = vpop.f32.mrb[0].mxu0
      %v5252 = vadd.f32 %v5027, %v5251
      %v5253 = vpop.f32.mrb[0].mxu0
      %5254 = vmatprep.mubr.f32.mxu0 %v4633
      %5255 = vmatmul.mubr.f32.gmra.mrb[0].mxu0 %v4632
      %v5256 = vpop.f32.mrb[0].mxu0
      %v5257 = vadd.f32 %v5032, %v5256
      %v5258 = vpop.f32.mrb[0].mxu0
      %5259 = vmatprep.mubr.f32.mxu0 %v4638
      %5260 = vmatmul.mubr.f32.gmra.mrb[0].mxu0 %v4637
      %v5261 = vpop.f32.mrb[0].mxu0
      %v5262 = vadd.f32 %v5037, %v5261
      %v5263 = vpop.f32.mrb[0].mxu0
      %5264 = vmatprep.mubr.f32.mxu0 %v4643
      %5265 = vmatmul.mubr.f32.gmra.mrb[0].mxu0 %v4642
      %v5266 = vpop.f32.mrb[0].mxu0
      %v5267 = vadd.f32 %v5042, %v5266
      %v5268 = vpop.f32.mrb[0].mxu0
      %5269 = vmatprep.mubr.f32.mxu0 %v4648
      %5270 = vmatmul.mubr.f32.gmra.mrb[0].mxu0 %v4647
      %v5271 = vpop.f32.mrb[0].mxu0
      %v5272 = vadd.f32 %v5047, %v5271
      %v5273 = vpop.f32.mrb[0].mxu0
      %5274 = vmatprep.mubr.f32.mxu0 %v4653
      %5275 = vmatmul.mubr.f32.gmra.mrb[0].mxu0 %v4652
      %v5276 = vpop.f32.mrb[0].mxu0
      %v5277 = vadd.f32 %v5052, %v5276
      %v5278 = vpop.f32.mrb[0].mxu0
      %5279 = vmatprep.mubr.f32.mxu0 %v4658
      %5280 = vmatmul.mubr.f32.gmra.mrb[0].mxu0 %v4657
      %v5281 = vpop.f32.mrb[0].mxu0
      %v5282 = vadd.f32 %v5057, %v5281
      %v5283 = vpop.f32.mrb[0].mxu0
      %5284 = vmatprep.mubr.f32.mxu0 %v4663
      %5285 = vmatmul.mubr.f32.gmra.mrb[0].mxu0 %v4662
      %v5286 = vpop.f32.mrb[0].mxu0
      %v5287 = vadd.f32 %v5062, %v5286
      %v5288 = vpop.f32.mrb[0].mxu0
      %5289 = vmatprep.mubr.f32.mxu0 %v4668
      %5290 = vmatmul.mubr.f32.gmra.mrb[0].mxu0 %v4667
      %v5291 = vpop.f32.mrb[0].mxu0
      %v5292 = vadd.f32 %v5067, %v5291
      %v5293 = vpop.f32.mrb[0].mxu0
      %5294 = vmatprep.mubr.f32.mxu0 %v4673
      %5295 = vmatmul.mubr.f32.gmra.mrb[0].mxu0 %v4672
      %v5296 = vpop.f32.mrb[0].mxu0
      %v5297 = vadd.f32 %v5072, %v5296
      %v5298 = vpop.f32.mrb[0].mxu0
      %5299 = vmatprep.mubr.f32.mxu0 %v4678
      %5300 = vmatmul.mubr.f32.gmra.mrb[0].mxu0 %v4677
      %v5301 = vpop.f32.mrb[0].mxu0
      %v5302 = vadd.f32 %v5077, %v5301
      %v5303 = vpop.f32.mrb[0].mxu0
      %5304 = vmatprep.mubr.f32.mxu0 %v4683
      %5305 = vmatmul.mubr.f32.gmra.mrb[0].mxu0 %v4682
      %v5306 = vpop.f32.mrb[0].mxu0
      %v5307 = vadd.f32 %v5082, %v5306
      %v5308 = vpop.f32.mrb[0].mxu0
      %5309 = vmatprep.mubr.f32.mxu0 %v4688
      %5310 = vmatmul.mubr.f32.gmra.mrb[0].mxu0 %v4687
      %v5311 = vpop.f32.mrb[0].mxu0
      %v5312 = vadd.f32 %v5087, %v5311
      %v5313 = vpop.f32.mrb[0].mxu0
      %5314 = vmatprep.mubr.f32.mxu0 %v4693
      %5315 = vmatmul.mubr.f32.gmra.mrb[0].mxu0 %v4692
      %v5316 = vpop.f32.mrb[0].mxu0
      %v5317 = vadd.f32 %v5092, %v5316
      %v5318 = vpop.f32.mrb[0].mxu0
      %5319 = vmatprep.mubr.f32.mxu0 %v4698
      %5320 = vmatmul.mubr.f32.gmra.mrb[0].mxu0 %v4697
      %v5321 = vpop.f32.mrb[0].mxu0
      %v5322 = vadd.f32 %v5097, %v5321
      %v5323 = vpop.f32.mrb[0].mxu0
      %5324 = vmatprep.mubr.f32.mxu0 %v4703
      %5325 = vmatmul.mubr.f32.gmra.mrb[0].mxu0 %v4702
      %v5326 = vpop.f32.mrb[0].mxu0
      %v5327 = vadd.f32 %v5102, %v5326
      %v5328 = vpop.f32.mrb[0].mxu0
      %5329 = vmatprep.mubr.f32.mxu0 %v4708
      %5330 = vmatmul.mubr.f32.gmra.mrb[0].mxu0 %v4707
      %v5331 = vpop.f32.mrb[0].mxu0
      %v5332 = vadd.f32 %v5107, %v5331
      %v5333 = vpop.f32.mrb[0].mxu0
      %5334 = vmatprep.mubr.f32.mxu0 %v4713
      %5335 = vmatmul.mubr.f32.gmra.mrb[0].mxu0 %v4712
      %v5336 = vpop.f32.mrb[0].mxu0
      %v5337 = vadd.f32 %v5112, %v5336
      %v5338 = vpop.f32.mrb[0].mxu0
      %5339 = vmatprep.mubr.f32.mxu0 %v4718
      %5340 = vmatmul.mubr.f32.gmra.mrb[0].mxu0 %v4717
      %v5341 = vpop.f32.mrb[0].mxu0
      %v5342 = vadd.f32 %v5117, %v5341
      %v5343 = vpop.f32.mrb[0].mxu0
      %5344 = vmatprep.mubr.f32.mxu0 %v4723
      %5345 = vmatmul.mubr.f32.gmra.mrb[0].mxu0 %v4722
      %v5346 = vpop.f32.mrb[0].mxu0
      %v5347 = vadd.f32 %v5122, %v5346
      %v5348 = vpop.f32.mrb[0].mxu0
      %5349 = vmatprep.mubr.f32.mxu0 %v4728
      %5350 = vmatmul.mubr.f32.gmra.mrb[0].mxu0 %v4727
      %v5351 = vpop.f32.mrb[0].mxu0
      %v5352 = vadd.f32 %v5127, %v5351
      %v5353 = vpop.f32.mrb[0].mxu0
      %5354 = vmatprep.mubr.f32.mxu0 %v4733
      %5355 = vmatmul.mubr.f32.gmra.mrb[0].mxu0 %v4732
      %v5356 = vpop.f32.mrb[0].mxu0
      %v5357 = vadd.f32 %v5132, %v5356
      %v5358 = vpop.f32.mrb[0].mxu0
      %5359 = vmatprep.mubr.f32.mxu0 %v4738
      %5360 = vmatmul.mubr.f32.gmra.mrb[0].mxu0 %v4737
      %v5361 = vpop.f32.mrb[0].mxu0
      %v5362 = vadd.f32 %v5137, %v5361
      %v5363 = vpop.f32.mrb[0].mxu0
      %5364 = vmatprep.mubr.f32.mxu0 %v4743
      %5365 = vmatmul.mubr.f32.gmra.mrb[0].mxu0 %v4742
      %v5366 = vpop.f32.mrb[0].mxu0
      %v5367 = vadd.f32 %v5142, %v5366
      %v5368 = vpop.f32.mrb[0].mxu0
      %5369 = vdwg.mxu0
      %5370 = vmatprep.subr.mxu0 0.0
      %5371 = vmatpush1.msra.mxu0 %v4809
      %5372 = vmatprep.subr.mxu0 0.0
      %5373 = vmatpush1.msra.mxu0 %v4810
      %5374 = vmatprep.subr.mxu0 0.0
      %5375 = vmatpush1.msra.mxu0 %v4811
      %5376 = vmatprep.subr.mxu0 0.0
      %5377 = vmatpush1.msra.mxu0 %v4812
      %5378 = vmatprep.subr.mxu0 0.0
      %5379 = vmatpush1.msra.mxu0 %v4813
      %5380 = vmatprep.subr.mxu0 0.0
      %5381 = vmatpush1.msra.mxu0 %v4814
      %5382 = vmatprep.subr.mxu0 0.0
      %5383 = vmatpush1.msra.mxu0 %v4815
      %5384 = vmatprep.subr.mxu0 0.0
      %5385 = vmatpush1.msra.mxu0 %v4816
      %5386 = vmatprep.subr.mxu0 0.0
      %5387 = vmatpush1.msra.mxu0 0.0
      %5388 = vmatprep.subr.mxu0 0.0
      %5389 = vmatpush1.msra.mxu0 0.0
      %5390 = vmatprep.subr.mxu0 0.0
      %5391 = vmatpush1.msra.mxu0 0.0
      %5392 = vmatprep.subr.mxu0 0.0
      %5393 = vmatpush1.msra.mxu0 0.0
      %5394 = vmatprep.subr.mxu0 0.0
      %5395 = vmatpush1.msra.mxu0 0.0
      %5396 = vmatprep.subr.mxu0 0.0
      %5397 = vmatpush1.msra.mxu0 0.0
      %5398 = vmatprep.subr.mxu0 0.0
      %5399 = vmatpush1.msra.mxu0 0.0
      %5400 = vmatprep.subr.mxu0 0.0
      %5401 = vmatpush1.msra.mxu0 0.0
      %5402 = vmatprep.subr.mxu0 0.0
      %5403 = vmatpush1.msra.mxu0 0.0
      %5404 = vmatprep.subr.mxu0 0.0
      %5405 = vmatpush1.msra.mxu0 0.0
      %5406 = vmatprep.subr.mxu0 0.0
      %5407 = vmatpush1.msra.mxu0 0.0
      %5408 = vmatprep.subr.mxu0 0.0
      %5409 = vmatpush1.msra.mxu0 0.0
      %5410 = vmatprep.subr.mxu0 0.0
      %5411 = vmatpush1.msra.mxu0 0.0
      %5412 = vmatprep.subr.mxu0 0.0
      %5413 = vmatpush1.msra.mxu0 0.0
      %5414 = vmatprep.subr.mxu0 0.0
      %5415 = vmatpush1.msra.mxu0 0.0
      %5416 = vmatprep.subr.mxu0 0.0
      %5417 = vmatpush1.msra.mxu0 0.0
      %5418 = vmatprep.subr.mxu0 0.0
      %5419 = vmatpush1.msra.mxu0 0.0
      %5420 = vmatprep.subr.mxu0 0.0
      %5421 = vmatpush1.msra.mxu0 0.0
      %5422 = vmatprep.subr.mxu0 0.0
      %5423 = vmatpush1.msra.mxu0 0.0
      %5424 = vmatprep.subr.mxu0 0.0
      %5425 = vmatpush1.msra.mxu0 0.0
      %5426 = vmatprep.subr.mxu0 0.0
      %5427 = vmatpush1.msra.mxu0 0.0
      %5428 = vmatprep.subr.mxu0 0.0
      %5429 = vmatpush1.msra.mxu0 0.0
      %5430 = vmatprep.subr.mxu0 0.0
      %5431 = vmatpush1.msra.mxu0 0.0
      %5432 = vmatprep.subr.mxu0 0.0
      %5433 = vmatpush1.msra.mxu0 0.0
      %5434 = vmatprep.mubr.f32.mxu0 0.0
      %5435 = vmatmul.mubr.f32.gmra.mrb[0].mxu0 %v4825
      %v5436 = vpop.f32.mrb[0].mxu0
      %v5437 = vadd.f32 %v5212, %v5436
      %v5438 = vpop.f32.mrb[0].mxu0
      %5439 = vmatprep.mubr.f32.mxu0 0.0
      %5440 = vmatmul.mubr.f32.gmra.mrb[0].mxu0 %v4828
      %v5441 = vpop.f32.mrb[0].mxu0
      %v5442 = vadd.f32 %v5217, %v5441
      %v5443 = vpop.f32.mrb[0].mxu0
      %5444 = vmatprep.mubr.f32.mxu0 0.0
      %5445 = vmatmul.mubr.f32.gmra.mrb[0].mxu0 %v4831
      %v5446 = vpop.f32.mrb[0].mxu0
      %v5447 = vadd.f32 %v5222, %v5446
      %v5448 = vpop.f32.mrb[0].mxu0
      %5449 = vmatprep.mubr.f32.mxu0 0.0
      %5450 = vmatmul.mubr.f32.gmra.mrb[0].mxu0 %v4834
      %v5451 = vpop.f32.mrb[0].mxu0
      %v5452 = vadd.f32 %v5227, %v5451
      %v5453 = vpop.f32.mrb[0].mxu0
      %5454 = vmatprep.mubr.f32.mxu0 0.0
      %5455 = vmatmul.mubr.f32.gmra.mrb[0].mxu0 %v4837
      %v5456 = vpop.f32.mrb[0].mxu0
      %v5457 = vadd.f32 %v5232, %v5456
      %v5458 = vpop.f32.mrb[0].mxu0
      %5459 = vmatprep.mubr.f32.mxu0 0.0
      %5460 = vmatmul.mubr.f32.gmra.mrb[0].mxu0 %v4840
      %v5461 = vpop.f32.mrb[0].mxu0
      %v5462 = vadd.f32 %v5237, %v5461
      %v5463 = vpop.f32.mrb[0].mxu0
      %5464 = vmatprep.mubr.f32.mxu0 0.0
      %5465 = vmatmul.mubr.f32.gmra.mrb[0].mxu0 %v4843
      %v5466 = vpop.f32.mrb[0].mxu0
      %v5467 = vadd.f32 %v5242, %v5466
      %v5468 = vpop.f32.mrb[0].mxu0
      %5469 = vmatprep.mubr.f32.mxu0 0.0
      %5470 = vmatmul.mubr.f32.gmra.mrb[0].mxu0 %v4846
      %v5471 = vpop.f32.mrb[0].mxu0
      %v5472 = vadd.f32 %v5247, %v5471
      %v5473 = vpop.f32.mrb[0].mxu0
      %5474 = vmatprep.mubr.f32.mxu0 0.0
      %5475 = vmatmul.mubr.f32.gmra.mrb[0].mxu0 %v4849
      %v5476 = vpop.f32.mrb[0].mxu0
      %v5477 = vadd.f32 %v5252, %v5476
      %v5478 = vpop.f32.mrb[0].mxu0
      %5479 = vmatprep.mubr.f32.mxu0 0.0
      %5480 = vmatmul.mubr.f32.gmra.mrb[0].mxu0 %v4852
      %v5481 = vpop.f32.mrb[0].mxu0
      %v5482 = vadd.f32 %v5257, %v5481
      %v5483 = vpop.f32.mrb[0].mxu0
      %5484 = vmatprep.mubr.f32.mxu0 0.0
      %5485 = vmatmul.mubr.f32.gmra.mrb[0].mxu0 %v4855
      %v5486 = vpop.f32.mrb[0].mxu0
      %v5487 = vadd.f32 %v5262, %v5486
      %v5488 = vpop.f32.mrb[0].mxu0
      %5489 = vmatprep.mubr.f32.mxu0 0.0
      %5490 = vmatmul.mubr.f32.gmra.mrb[0].mxu0 %v4858
      %v5491 = vpop.f32.mrb[0].mxu0
      %v5492 = vadd.f32 %v5267, %v5491
      %v5493 = vpop.f32.mrb[0].mxu0
      %5494 = vmatprep.mubr.f32.mxu0 0.0
      %5495 = vmatmul.mubr.f32.gmra.mrb[0].mxu0 %v4861
      %v5496 = vpop.f32.mrb[0].mxu0
      %v5497 = vadd.f32 %v5272, %v5496
      %v5498 = vpop.f32.mrb[0].mxu0
      %5499 = vmatprep.mubr.f32.mxu0 0.0
      %5500 = vmatmul.mubr.f32.gmra.mrb[0].mxu0 %v4864
      %v5501 = vpop.f32.mrb[0].mxu0
      %v5502 = vadd.f32 %v5277, %v5501
      %v5503 = vpop.f32.mrb[0].mxu0
      %5504 = vmatprep.mubr.f32.mxu0 0.0
      %5505 = vmatmul.mubr.f32.gmra.mrb[0].mxu0 %v4867
      %v5506 = vpop.f32.mrb[0].mxu0
      %v5507 = vadd.f32 %v5282, %v5506
      %v5508 = vpop.f32.mrb[0].mxu0
      %5509 = vmatprep.mubr.f32.mxu0 0.0
      %5510 = vmatmul.mubr.f32.gmra.mrb[0].mxu0 %v4870
      %v5511 = vpop.f32.mrb[0].mxu0
      %v5512 = vadd.f32 %v5287, %v5511
      %v5513 = vpop.f32.mrb[0].mxu0
      %5514 = vmatprep.mubr.f32.mxu0 0.0
      %5515 = vmatmul.mubr.f32.gmra.mrb[0].mxu0 %v4873
      %v5516 = vpop.f32.mrb[0].mxu0
      %v5517 = vadd.f32 %v5292, %v5516
      %v5518 = vpop.f32.mrb[0].mxu0
      %5519 = vmatprep.mubr.f32.mxu0 0.0
      %5520 = vmatmul.mubr.f32.gmra.mrb[0].mxu0 %v4876
      %v5521 = vpop.f32.mrb[0].mxu0
      %v5522 = vadd.f32 %v5297, %v5521
      %v5523 = vpop.f32.mrb[0].mxu0
      %5524 = vmatprep.mubr.f32.mxu0 0.0
      %5525 = vmatmul.mubr.f32.gmra.mrb[0].mxu0 %v4879
      %v5526 = vpop.f32.mrb[0].mxu0
      %v5527 = vadd.f32 %v5302, %v5526
      %v5528 = vpop.f32.mrb[0].mxu0
      %5529 = vmatprep.mubr.f32.mxu0 0.0
      %5530 = vmatmul.mubr.f32.gmra.mrb[0].mxu0 %v4882
      %v5531 = vpop.f32.mrb[0].mxu0
      %v5532 = vadd.f32 %v5307, %v5531
      %v5533 = vpop.f32.mrb[0].mxu0
      %5534 = vmatprep.mubr.f32.mxu0 0.0
      %5535 = vmatmul.mubr.f32.gmra.mrb[0].mxu0 %v4885
      %v5536 = vpop.f32.mrb[0].mxu0
      %v5537 = vadd.f32 %v5312, %v5536
      %v5538 = vpop.f32.mrb[0].mxu0
      %5539 = vmatprep.mubr.f32.mxu0 0.0
      %5540 = vmatmul.mubr.f32.gmra.mrb[0].mxu0 %v4888
      %v5541 = vpop.f32.mrb[0].mxu0
      %v5542 = vadd.f32 %v5317, %v5541
      %v5543 = vpop.f32.mrb[0].mxu0
      %5544 = vmatprep.mubr.f32.mxu0 0.0
      %5545 = vmatmul.mubr.f32.gmra.mrb[0].mxu0 %v4891
      %v5546 = vpop.f32.mrb[0].mxu0
      %v5547 = vadd.f32 %v5322, %v5546
      %v5548 = vpop.f32.mrb[0].mxu0
      %5549 = vmatprep.mubr.f32.mxu0 0.0
      %5550 = vmatmul.mubr.f32.gmra.mrb[0].mxu0 %v4894
      %v5551 = vpop.f32.mrb[0].mxu0
      %v5552 = vadd.f32 %v5327, %v5551
      %v5553 = vpop.f32.mrb[0].mxu0
      %5554 = vmatprep.mubr.f32.mxu0 0.0
      %5555 = vmatmul.mubr.f32.gmra.mrb[0].mxu0 %v4897
      %v5556 = vpop.f32.mrb[0].mxu0
      %v5557 = vadd.f32 %v5332, %v5556
      %v5558 = vpop.f32.mrb[0].mxu0
      %5559 = vmatprep.mubr.f32.mxu0 0.0
      %5560 = vmatmul.mubr.f32.gmra.mrb[0].mxu0 %v4900
      %v5561 = vpop.f32.mrb[0].mxu0
      %v5562 = vadd.f32 %v5337, %v5561
      %v5563 = vpop.f32.mrb[0].mxu0
      %5564 = vmatprep.mubr.f32.mxu0 0.0
      %5565 = vmatmul.mubr.f32.gmra.mrb[0].mxu0 %v4903
      %v5566 = vpop.f32.mrb[0].mxu0
      %v5567 = vadd.f32 %v5342, %v5566
      %v5568 = vpop.f32.mrb[0].mxu0
      %5569 = vmatprep.mubr.f32.mxu0 0.0
      %5570 = vmatmul.mubr.f32.gmra.mrb[0].mxu0 %v4906
      %v5571 = vpop.f32.mrb[0].mxu0
      %v5572 = vadd.f32 %v5347, %v5571
      %v5573 = vpop.f32.mrb[0].mxu0
      %5574 = vmatprep.mubr.f32.mxu0 0.0
      %5575 = vmatmul.mubr.f32.gmra.mrb[0].mxu0 %v4909
      %v5576 = vpop.f32.mrb[0].mxu0
      %v5577 = vadd.f32 %v5352, %v5576
      %v5578 = vpop.f32.mrb[0].mxu0
      %5579 = vmatprep.mubr.f32.mxu0 0.0
      %5580 = vmatmul.mubr.f32.gmra.mrb[0].mxu0 %v4912
      %v5581 = vpop.f32.mrb[0].mxu0
      %v5582 = vadd.f32 %v5357, %v5581
      %v5583 = vpop.f32.mrb[0].mxu0
      %5584 = vmatprep.mubr.f32.mxu0 0.0
      %5585 = vmatmul.mubr.f32.gmra.mrb[0].mxu0 %v4915
      %v5586 = vpop.f32.mrb[0].mxu0
      %v5587 = vadd.f32 %v5362, %v5586
      %v5588 = vpop.f32.mrb[0].mxu0
      %5589 = vmatprep.mubr.f32.mxu0 0.0
      %5590 = vmatmul.mubr.f32.gmra.mrb[0].mxu0 %v4918
      %v5591 = vpop.f32.mrb[0].mxu0
      %v5592 = vadd.f32 %v5367, %v5591
      %v5593 = vpop.f32.mrb[0].mxu0
      %5594 = vdwg.mxu0
      %v5595 = vld [vmem:[%s305] sm:$0xff]
      %5596 = vxpose.xlu0.b32.start [1/16] %v5437, 128
      %5597 = vxpose.xlu0.b32.cont [2/16] %v5442, 128
      %5598 = vxpose.xlu0.b32.cont [3/16] %v5447, 128
      %5599 = vxpose.xlu0.b32.cont [4/16] %v5452, 128
      %5600 = vxpose.xlu0.b32.cont [5/16] %v5457, 128
      %5601 = vxpose.xlu0.b32.cont [6/16] %v5462, 128
      %5602 = vxpose.xlu0.b32.cont [7/16] %v5467, 128
      %5603 = vxpose.xlu0.b32.cont [8/16] %v5472, 128
      %5604 = vxpose.xlu0.b32.cont [9/16] %v5477, 128
      %5605 = vxpose.xlu0.b32.cont [10/16] %v5482, 128
      %5606 = vxpose.xlu0.b32.cont [11/16] %v5487, 128
      %5607 = vxpose.xlu0.b32.cont [12/16] %v5492, 128
      %5608 = vxpose.xlu0.b32.cont [13/16] %v5497, 128
      %5609 = vxpose.xlu0.b32.cont [14/16] %v5502, 128
      %5610 = vxpose.xlu0.b32.cont [15/16] %v5507, 128
      %5611 = vxpose.xlu0.b32.end [16/16] %v5512, 128
      %v5612 = vpop.trf.xlu0
      %v5613 = vpop.trf.xlu0
      %v5614 = vpop.trf.xlu0
      %v5615 = vpop.trf.xlu0
      %v5616 = vpop.trf.xlu0
      %v5617 = vpop.trf.xlu0
      %v5618 = vpop.trf.xlu0
      %v5619 = vpop.trf.xlu0
      %v5620 = vpop.trf.xlu0
      %v5621 = vpop.trf.xlu0
      %v5622 = vpop.trf.xlu0
      %v5623 = vpop.trf.xlu0
      %v5624 = vpop.trf.xlu0
      %v5625 = vpop.trf.xlu0
      %v5626 = vpop.trf.xlu0
      %v5627 = vpop.trf.xlu0
      %5628 = vxpose.xlu0.b32.start [1/16] %v5517, 128
      %5629 = vxpose.xlu0.b32.cont [2/16] %v5522, 128
      %5630 = vxpose.xlu0.b32.cont [3/16] %v5527, 128
      %5631 = vxpose.xlu0.b32.cont [4/16] %v5532, 128
      %5632 = vxpose.xlu0.b32.cont [5/16] %v5537, 128
      %5633 = vxpose.xlu0.b32.cont [6/16] %v5542, 128
      %5634 = vxpose.xlu0.b32.cont [7/16] %v5547, 128
      %5635 = vxpose.xlu0.b32.cont [8/16] %v5552, 128
      %5636 = vxpose.xlu0.b32.cont [9/16] %v5557, 128
      %5637 = vxpose.xlu0.b32.cont [10/16] %v5562, 128
      %5638 = vxpose.xlu0.b32.cont [11/16] %v5567, 128
      %5639 = vxpose.xlu0.b32.cont [12/16] %v5572, 128
      %5640 = vxpose.xlu0.b32.cont [13/16] %v5577, 128
      %5641 = vxpose.xlu0.b32.cont [14/16] %v5582, 128
      %5642 = vxpose.xlu0.b32.cont [15/16] %v5587, 128
      %5643 = vxpose.xlu0.b32.end [16/16] %v5592, 128
      %v5644 = vpop.trf.xlu0
      %v5645 = vpop.trf.xlu0
      %v5646 = vpop.trf.xlu0
      %v5647 = vpop.trf.xlu0
      %v5648 = vpop.trf.xlu0
      %v5649 = vpop.trf.xlu0
      %v5650 = vpop.trf.xlu0
      %v5651 = vpop.trf.xlu0
      %v5652 = vpop.trf.xlu0
      %v5653 = vpop.trf.xlu0
      %v5654 = vpop.trf.xlu0
      %v5655 = vpop.trf.xlu0
      %v5656 = vpop.trf.xlu0
      %v5657 = vpop.trf.xlu0
      %v5658 = vpop.trf.xlu0
      %v5659 = vpop.trf.xlu0
      %v5662 = vcombine.low %v5612, %v5644
      %v5664 = vadd.f32 %v5595, %v5662
      %5665 = vst [vmem:[%s305] sm:$0xff] %v5664
      %p5666 = scmp.lt.s32.totalorder %s19, 1
      %s5667 = scalar_select %p5666, %s19, 1
      %s5668 = smul.addr %s5667, 2
      %s5669 = smul.addr %s5668, 4
      %s5670 = scalar_lea.vmem %s8, %s5669
      // Predicated region
      $region53: #{resblock_forward.1} parent=51 // pred_check
        %p5671 = pneg %p210
      $region54: #{resblock_forward.1} parent=51 // pred_check_branch
        %5673 = sbr.rel (%p5671) target = $region56
      $region55: #{resblock_forward.1} parent=51 // pred_region
        _
      $region56: #{resblock_forward.1} parent=51 // pred_fallthru
        _
    $region52: #{resblock_forward.1} parent=5 // pred_fallthru
      _
    %p5674 = scmp.le.s32.totalorder 2, %s14
    // Predicated region
    $region57: #{resblock_forward.1} parent=5 // pred_check
      %p5675 = pneg %p5674
    $region58: #{resblock_forward.1} parent=5 // pred_check_branch
      %5677 = sbr.rel (%p5675) target = $region60
    $region59: #{resblock_forward.1} parent=5 // pred_region
      %s5678 = ssub.s32 %s14, 2
      // Predicated region
      $region61: #{resblock_forward.1} parent=59 // pred_check
        %p5679 = pneg %p216
      $region62: #{resblock_forward.1} parent=59 // pred_check_branch
        %5681 = sbr.rel (%p5679) target = $region64
      $region63: #{resblock_forward.1} parent=59 // pred_region
        %p5682 = scmp.lt.s32.totalorder %s20, 1
        %s5683 = scalar_select %p5682, %s20, 1
        %s5684 = smul.addr %s5683, 2
        %s5685 = smul.addr %s5684, 4
        %s5686 = scalar_lea.vmem %s8, %s5685
      $region64: #{resblock_forward.1} parent=59 // pred_fallthru
        _
    $region60: #{resblock_forward.1} parent=5 // pred_fallthru
      _
  $region6: #{resblock_forward.1} parent=0 // loop_footer
    %s18 = sadd.s32 1, %s14
  $region7: #{resblock_forward.1} parent=0 // loop_footer_branch
    %13 = sbr.rel target = $region3
  $region8: #{resblock_forward.1} parent=0 // loop_exit
    _

</llo_original>
